<compile_context>
chip_gen: v7x
topology: tpu7x:2x2x1
jax: 0.10.0
libtpu: 0.0.40
codegen_flags: <defaults>
</compile_context>

<pallas_src>
import functools

import jax
import jax.numpy as jnp
from jax.experimental import pallas as pl
from jax.experimental.pallas import tpu as pltpu


def _round_up(x, m):
    return ((x + m - 1) // m) * m


# ----------------------------- wrapper-side weight packing -----------------------------

def _split_gates(w, H):
    # PyTorch LSTM gate order along the 4H axis: (i, f, g, o)
    return w[..., 0:H], w[..., H:2 * H], w[..., 2 * H:3 * H], w[..., 3 * H:4 * H]


def _widen_dir(w, H, direction):
    """(Din, 4H) PyTorch-order (i,f,g,o) -> (Din, 8H) packed gate-major layout.

    Packed columns: [i_f, i_b, f_f, f_b, o_f, o_b, g_f, g_b].  The other direction's
    columns are zero, so fwd_wide + bwd_wide gives the full packed pre-activation.
    """
    i, f, g, o = _split_gates(w, H)
    z = jnp.zeros(w.shape[:-1] + (H,), w.dtype)
    if direction == 0:   # forward
        blocks = [i, z, f, z, o, z, g, z]
    else:                # backward
        blocks = [z, i, z, f, z, o, z, g]
    return jnp.concatenate(blocks, axis=-1)


# ----------------------------- fused Pallas kernel -----------------------------

def make_fused_kernel(T, Bp, H, Vp, C, num_layer):
    """Fully-fused forward kernel.

    Inputs (refs, all VMEM):
      ids     : (T*Bp, 1) int32   time-major, batch-padded token ids
      folded0 : (Vp, 16H)         embedding folded with layer-0 widened W_ih + biases
                                  (cols [0:8H] fwd contribution, [8H:16H] bwd contribution)
      wrest   : ((L-1)*(2H+1), 16H)  per layer>=1: widened W_ih (2H rows) + bias row
      whh     : (L*2H, 8H)        per layer: block-diagonal recurrent weights
      lin     : (2H+1, C)         linear weight rows + bias row
    Output:
      probs   : (Bp, C)
    Scratch:
      gates (T*Bp, 16H), act_a / act_b (T*Bp, 2H)
    """
    TB = T * Bp
    H2, H6, H8, H16 = 2 * H, 6 * H, 8 * H, 16 * H

    def kernel(ids_ref, folded0_ref, wrest_ref, whh_ref, lin_ref, out_ref,
               gates_scr, act_a, act_b):
        # ---- layer 0: embedding gather + input projection + bias as ONE one-hot matmul ----
        ids = ids_ref[...]                                               # (TB, 1) int32
        vocab_iota = jax.lax.broadcasted_iota(jnp.int32, (TB, Vp), 1)
        onehot = (ids == vocab_iota).astype(jnp.float32)                 # (TB, Vp)
        gates_scr[...] = jnp.dot(onehot, folded0_ref[...],
                                 preferred_element_type=jnp.float32)     # (TB, 16H)

        acts = (act_a, act_b)
        h_f_last = None
        h_b_last = None

        for layer in range(num_layer):
            last_layer = (layer == num_layer - 1)

            if layer > 0:
                # Hoisted input projection for this layer (one MXU op, off the serial path).
                x_ref = acts[(layer - 1) % 2]
                base = (layer - 1) * (H2 + 1)
                w_both = wrest_ref[base:base + H2, :]                    # (2H, 16H)
                b_both = wrest_ref[base + H2:base + H2 + 1, :]           # (1, 16H)
                gates_scr[...] = (jnp.dot(x_ref[...], w_both,
                                          preferred_element_type=jnp.float32)
                                  + b_both)
                # TODO(synk): inter-layer dropout(p=0.2) is training-only in PyTorch; eval omits it.

            out_act = acts[layer % 2]
            whh_bd = whh_ref[layer * H2:(layer + 1) * H2, :]             # (2H, 8H) block-diag

            # Packed fwd+bwd recurrence: fully unrolled, state carried as values.
            h = jnp.zeros((Bp, H2), jnp.float32)                         # [h_fwd | h_bwd]
            c = jnp.zeros((Bp, H2), jnp.float32)
            for s in range(T):
                rf0, rf1 = s * Bp, (s + 1) * Bp                          # fwd input time = s
                rb0, rb1 = (T - 1 - s) * Bp, (T - s) * Bp                # bwd input time = T-1-s
                g = (gates_scr[rf0:rf1, 0:H8]
                     + gates_scr[rb0:rb1, H8:H16]
                     + jnp.dot(h, whh_bd, preferred_element_type=jnp.float32))
                sg = jax.nn.sigmoid(g[:, 0:H6])      # i | f | o, both directions
                gg = jnp.tanh(g[:, H6:H8])           # g gate, both directions
                i_g = sg[:, 0:H2]
                f_g = sg[:, H2:2 * H2]
                o_g = sg[:, 2 * H2:3 * H2]
                c = f_g * c + i_g * gg
                h = o_g * jnp.tanh(c)

                if last_layer:
                    # Only time T-1 is needed downstream; keep it as live values.
                    if s == 0:
                        h_b_last = h[:, H:H2]        # bwd output at time T-1
                    if s == T - 1:
                        h_f_last = h[:, 0:H]         # fwd output at time T-1
                else:
                    # Time-aligned (PyTorch concat order) layer-output slab.
                    out_act[rf0:rf1, 0:H] = h[:, 0:H]
                    out_act[rb0:rb1, H:H2] = h[:, H:H2]

        # ---- last timestep -> linear -> softmax, fused ----
        logits = (jnp.dot(h_f_last, lin_ref[0:H, :],
                          preferred_element_type=jnp.float32)
                  + jnp.dot(h_b_last, lin_ref[H:H2, :],
                            preferred_element_type=jnp.float32)
                  + lin_ref[H2:H2 + 1, :])
        m = jnp.max(logits, axis=-1, keepdims=True)
        e = jnp.exp(logits - m)
        out_ref[...] = e / jnp.sum(e, axis=-1, keepdims=True)

    return kernel


# ----------------------------- wrapper -----------------------------

_VMEM = pl.BlockSpec(memory_space=pltpu.MemorySpace.VMEM)


@functools.partial(jax.jit, static_argnums=(2,))
def forward(sentence, params, num_layer):
    """sentence: (B, T) int32 token ids -> (B, C) softmax probabilities."""
    B, T = sentence.shape
    Bp = _round_up(max(B, 8), 8)                  # pad batch to full sublanes
    V, E = params["embedding"].shape
    Vp = _round_up(max(V, 128), 128)              # lane-dense one-hot / contraction dim
    H = params["lstm"][0]["fwd"][1].shape[0]
    C = params["linear_w"].shape[1]
    TB = T * Bp
    H2 = 2 * H

    # time-major, batch-padded, flattened token ids: row t*Bp + b
    ids_tm = jnp.transpose(sentence, (1, 0)).astype(jnp.int32)          # (T, B)
    ids_tm = jnp.pad(ids_tm, ((0, 0), (0, Bp - B)))                     # (T, Bp), pad ids = 0
    ids_flat = ids_tm.reshape(TB, 1)

    emb_p = jnp.pad(params["embedding"].astype(jnp.float32),
                    ((0, Vp - V), (0, 0)))                              # (Vp, E)

    # ---- layer 0: fold embedding + widened input projection + bias into one table ----
    wih0_f, _, b0_f = params["lstm"][0]["fwd"]
    wih0_b, _, b0_b = params["lstm"][0]["bwd"]
    folded_f = emb_p @ _widen_dir(wih0_f, H, 0) + _widen_dir(b0_f, H, 0)   # (Vp, 8H)
    folded_b = emb_p @ _widen_dir(wih0_b, H, 1) + _widen_dir(b0_b, H, 1)   # (Vp, 8H)
    folded0 = jnp.concatenate([folded_f, folded_b], axis=1)                # (Vp, 16H)

    # ---- layers >= 1: widened input projections + bias rows, stacked into one slab ----
    rest_rows = []
    for layer in range(1, num_layer):
        wih_f, _, b_f = params["lstm"][layer]["fwd"]
        wih_b, _, b_b = params["lstm"][layer]["bwd"]
        w_both = jnp.concatenate([_widen_dir(wih_f, H, 0),
                                  _widen_dir(wih_b, H, 1)], axis=1)        # (2H, 16H)
        b_both = jnp.concatenate([_widen_dir(b_f, H, 0),
                                  _widen_dir(b_b, H, 1)], axis=1)          # (1, 16H)
        rest_rows.append(jnp.concatenate([w_both, b_both], axis=0))
    wih_rest = (jnp.concatenate(rest_rows, axis=0) if rest_rows
                else jnp.zeros((1, 16 * H), jnp.float32))

    # ---- block-diagonal recurrent weights for all layers: (L*2H, 8H) ----
    whh_all = jnp.concatenate(
        [jnp.concatenate([_widen_dir(params["lstm"][l]["fwd"][1], H, 0),
                          _widen_dir(params["lstm"][l]["bwd"][1], H, 1)], axis=0)
         for l in range(num_layer)], axis=0)

    lin = jnp.concatenate([params["linear_w"], params["linear_b"]], axis=0)  # (2H+1, C)

    kernel = make_fused_kernel(T, Bp, H, Vp, C, num_layer)
    probs_p = pl.pallas_call(
        kernel,
        out_shape=jax.ShapeDtypeStruct((Bp, C), jnp.float32),
        in_specs=[_VMEM] * 5,
        out_specs=_VMEM,
        scratch_shapes=[
            pltpu.VMEM((TB, 16 * H), jnp.float32),   # hoisted gate pre-activations (per layer)
            pltpu.VMEM((TB, H2), jnp.float32),       # layer activations (ping)
            pltpu.VMEM((TB, H2), jnp.float32),       # layer activations (pong)
        ],
    )(ids_flat, folded0, wih_rest, whh_all, lin)
    return probs_p[:B]


# ----------------------------- pure-JAX reference -----------------------------

def forward_ref(sentence, params, num_layer):
    emb = jnp.take(params["embedding"], sentence, axis=0)               # (B, T, E)
    x = jnp.transpose(emb, (1, 0, 2)).astype(jnp.float32)               # (T, B, E)
    B = sentence.shape[0]
    H = params["lstm"][0]["fwd"][1].shape[0]

    def run_dir(x_tm, w_ih, w_hh, b):
        def step(carry, x_t):
            h, c = carry
            g = x_t @ w_ih + h @ w_hh + b
            i = jax.nn.sigmoid(g[:, 0 * H:1 * H])
            f = jax.nn.sigmoid(g[:, 1 * H:2 * H])
            gg = jnp.tanh(g[:, 2 * H:3 * H])
            o = jax.nn.sigmoid(g[:, 3 * H:4 * H])
            c = f * c + i * gg
            h = o * jnp.tanh(c)
            return (h, c), h
        init = (jnp.zeros((B, H), jnp.float32), jnp.zeros((B, H), jnp.float32))
        _, hs = jax.lax.scan(step, init, x_tm)
        return hs

    for layer in range(num_layer):
        wf, hf, bf = params["lstm"][layer]["fwd"]
        wb, hb, bb = params["lstm"][layer]["bwd"]
        of = run_dir(x, wf, hf, bf)
        ob = jnp.flip(run_dir(jnp.flip(x, 0), wb, hb, bb), 0)
        x = jnp.concatenate([of, ob], axis=-1)
    last = x[-1]
    logits = last @ params["linear_w"] + params["linear_b"]
    return jax.nn.softmax(logits, axis=-1)


# ----------------------------- model config / params -----------------------------

class Config:
    num_embeddings = 50
    embedding_dim = 16
    hidden_size = 32
    num_layer = 2
    out_features = 4


def init_params(key, cfg):
    """Deterministic synthetic parameters matching nn.Embedding / nn.LSTM / nn.Linear shapes."""
    H = cfg.hidden_size
    k_lstm = 1.0 / jnp.sqrt(jnp.float32(H))
    params = {}
    key, k_emb = jax.random.split(key)
    params["embedding"] = jax.random.normal(
        k_emb, (cfg.num_embeddings, cfg.embedding_dim), jnp.float32)

    lstm_layers = []
    for layer in range(cfg.num_layer):
        in_dim = cfg.embedding_dim if layer == 0 else 2 * H
        dirs = {}
        for dname in ("fwd", "bwd"):
            key, k1, k2, k3, k4 = jax.random.split(key, 5)
            # PyTorch stores (4H, in) / (4H, H); we keep transposed for x @ W (gate order i,f,g,o).
            w_ih = jax.random.uniform(k1, (in_dim, 4 * H), jnp.float32, -k_lstm, k_lstm)
            w_hh = jax.random.uniform(k2, (H, 4 * H), jnp.float32, -k_lstm, k_lstm)
            b_ih = jax.random.uniform(k3, (1, 4 * H), jnp.float32, -k_lstm, k_lstm)
            b_hh = jax.random.uniform(k4, (1, 4 * H), jnp.float32, -k_lstm, k_lstm)
            dirs[dname] = (w_ih, w_hh, b_ih + b_hh)
        lstm_layers.append(dirs)
    params["lstm"] = lstm_layers

    k_lin = 1.0 / jnp.sqrt(jnp.float32(2 * H))
    key, k5, k6 = jax.random.split(key, 3)
    params["linear_w"] = jax.random.uniform(
        k5, (2 * H, cfg.out_features), jnp.float32, -k_lin, k_lin)
    params["linear_b"] = jax.random.uniform(
        k6, (1, cfg.out_features), jnp.float32, -k_lin, k_lin)
    return params


if __name__ == "__main__":
    cfg = Config()
    key = jax.random.PRNGKey(0)
    key, k_tok = jax.random.split(key)

    B, T = 2, 8
    sentence = jax.random.randint(k_tok, (B, T), 0, cfg.num_embeddings, dtype=jnp.int32)
    params = init_params(key, cfg)

    probs = forward(sentence, params, cfg.num_layer)
    probs = jax.block_until_ready(probs)

    ref = jax.block_until_ready(forward_ref(sentence, params, cfg.num_layer))

    assert probs.shape == (B, cfg.out_features)
    assert bool(jnp.all(jnp.isfinite(probs)))
    assert bool(jnp.allclose(jnp.sum(probs, axis=-1), 1.0, atol=1e-5))
    assert bool(jnp.allclose(probs, ref, atol=1e-4, rtol=1e-4))
    print("KERNEL_OK")
</pallas_src>

<mosaic_0001>
module attributes {stable_mosaic.version = 11 : i64} {
  func.func @kernel(%arg0: memref<64x1xi32, #tpu.memory_space<vmem>>, %arg1: memref<128x512xf32, #tpu.memory_space<vmem>>, %arg2: memref<65x512xf32, #tpu.memory_space<vmem>>, %arg3: memref<128x256xf32, #tpu.memory_space<vmem>>, %arg4: memref<65x4xf32, #tpu.memory_space<vmem>>, %arg5: memref<8x4xf32, #tpu.memory_space<vmem>>, %arg6: memref<64x512xf32, #tpu.memory_space<vmem>>, %arg7: memref<64x64xf32, #tpu.memory_space<vmem>>, %arg8: memref<64x64xf32, #tpu.memory_space<vmem>>) attributes {dimension_semantics = [], scalar_prefetch = 0 : i64, scratch_operands = 3 : i64, tpu.core_type = #tpu.core_type<tc>} {
    %c0 = arith.constant 0 : index
    %c0_0 = arith.constant 0 : index
    %0 = vector.load %arg0[%c0, %c0_0] : memref<64x1xi32, #tpu.memory_space<vmem>>, vector<64x1xi32>
    %1 = tpu.iota {dimensions = array<i32: 1>} : vector<64x128xi32>
    %2 = vector.broadcast %0 : vector<64x1xi32> to vector<64x128xi32>
    %3 = arith.cmpi eq, %2, %1 : vector<64x128xi32>
    %4 = arith.extui %3 : vector<64x128xi1> to vector<64x128xi32>
    %5 = arith.sitofp %4 : vector<64x128xi32> to vector<64x128xf32>
    %c0_1 = arith.constant 0 : index
    %c0_2 = arith.constant 0 : index
    %6 = vector.load %arg1[%c0_1, %c0_2] : memref<128x512xf32, #tpu.memory_space<vmem>>, vector<128x512xf32>
    %cst = arith.constant dense<0.000000e+00> : vector<64x512xf32>
    %7 = tpu.matmul %5, %6, %cst {dimension_numbers = #tpu.dot_dimension_numbers<[1], [0], [0], [1], [0, 0, 1, 1], [], []>} : vector<64x128xf32>, vector<128x512xf32>, vector<64x512xf32> -> vector<64x512xf32>
    %c0_3 = arith.constant 0 : index
    %c0_4 = arith.constant 0 : index
    %8 = vector.load %arg6[%c0_3, %c0_4] : memref<64x512xf32, #tpu.memory_space<vmem>>, vector<64x512xf32>
    tpu.vector_store %arg6[%c0_3, %c0_4], %7 {strides = array<i32>} : memref<64x512xf32, #tpu.memory_space<vmem>>, vector<64x512xf32>,
    %c0_5 = arith.constant 0 : index
    %c0_6 = arith.constant 0 : index
    %9 = vector.load %arg3[%c0_5, %c0_6] : memref<128x256xf32, #tpu.memory_space<vmem>>, vector<64x256xf32>
    %cst_7 = arith.constant 0.000000e+00 : f32
    %10 = vector.broadcast %cst_7 : f32 to vector<8x64xf32>
    %cst_8 = arith.constant 0.000000e+00 : f32
    %11 = vector.broadcast %cst_8 : f32 to vector<8x64xf32>
    %c0_9 = arith.constant 0 : index
    %c0_10 = arith.constant 0 : index
    %12 = vector.load %arg6[%c0_9, %c0_10] : memref<64x512xf32, #tpu.memory_space<vmem>>, vector<8x256xf32>
    %c56 = arith.constant 56 : index
    %c256 = arith.constant 256 : index
    %13 = vector.load %arg6[%c56, %c256] : memref<64x512xf32, #tpu.memory_space<vmem>>, vector<8x256xf32>
    %14 = arith.addf %12, %13 : vector<8x256xf32>
    %cst_11 = arith.constant dense<0.000000e+00> : vector<8x256xf32>
    %15 = tpu.matmul %10, %9, %cst_11 {dimension_numbers = #tpu.dot_dimension_numbers<[1], [0], [0], [1], [0, 0, 1, 1], [], []>} : vector<8x64xf32>, vector<64x256xf32>, vector<8x256xf32> -> vector<8x256xf32>
    %16 = arith.addf %14, %15 : vector<8x256xf32>
    %17 = vector.extract_strided_slice %16 {offsets = [0, 0], sizes = [8, 192], strides = [1, 1]} : vector<8x256xf32> to vector<8x192xf32>
    %18 = arith.negf %17 : vector<8x192xf32>
    %19 = math.exp %18 : vector<8x192xf32>
    %cst_12 = arith.constant 1.000000e+00 : f32
    %20 = vector.broadcast %cst_12 : f32 to vector<8x192xf32>
    %21 = arith.addf %20, %19 : vector<8x192xf32>
    %22 = arith.divf %20, %21 : vector<8x192xf32>
    %23 = vector.extract_strided_slice %16 {offsets = [0, 192], sizes = [8, 64], strides = [1, 1]} : vector<8x256xf32> to vector<8x64xf32>
    %24 = math.tanh %23 : vector<8x64xf32>
    %25 = vector.extract_strided_slice %22 {offsets = [0, 0], sizes = [8, 64], strides = [1, 1]} : vector<8x192xf32> to vector<8x64xf32>
    %26 = vector.extract_strided_slice %22 {offsets = [0, 64], sizes = [8, 64], strides = [1, 1]} : vector<8x192xf32> to vector<8x64xf32>
    %27 = vector.extract_strided_slice %22 {offsets = [0, 128], sizes = [8, 64], strides = [1, 1]} : vector<8x192xf32> to vector<8x64xf32>
    %28 = arith.mulf %26, %11 : vector<8x64xf32>
    %29 = arith.mulf %25, %24 : vector<8x64xf32>
    %30 = arith.addf %28, %29 : vector<8x64xf32>
    %31 = math.tanh %30 : vector<8x64xf32>
    %32 = arith.mulf %27, %31 : vector<8x64xf32>
    %33 = vector.extract_strided_slice %32 {offsets = [0, 0], sizes = [8, 32], strides = [1, 1]} : vector<8x64xf32> to vector<8x32xf32>
    %c0_13 = arith.constant 0 : index
    %c0_14 = arith.constant 0 : index
    %34 = vector.load %arg7[%c0_13, %c0_14] : memref<64x64xf32, #tpu.memory_space<vmem>>, vector<8x32xf32>
    tpu.vector_store %arg7[%c0_13, %c0_14], %33 {strides = array<i32>} : memref<64x64xf32, #tpu.memory_space<vmem>>, vector<8x32xf32>,
    %35 = vector.extract_strided_slice %32 {offsets = [0, 32], sizes = [8, 32], strides = [1, 1]} : vector<8x64xf32> to vector<8x32xf32>
    %c56_15 = arith.constant 56 : index
    %c32 = arith.constant 32 : index
    %36 = vector.load %arg7[%c56_15, %c32] : memref<64x64xf32, #tpu.memory_space<vmem>>, vector<8x32xf32>
    tpu.vector_store %arg7[%c56_15, %c32], %35 {strides = array<i32>} : memref<64x64xf32, #tpu.memory_space<vmem>>, vector<8x32xf32>,
    %c8 = arith.constant 8 : index
    %c0_16 = arith.constant 0 : index
    %37 = vector.load %arg6[%c8, %c0_16] : memref<64x512xf32, #tpu.memory_space<vmem>>, vector<8x256xf32>
    %c48 = arith.constant 48 : index
    %c256_17 = arith.constant 256 : index
    %38 = vector.load %arg6[%c48, %c256_17] : memref<64x512xf32, #tpu.memory_space<vmem>>, vector<8x256xf32>
    %39 = arith.addf %37, %38 : vector<8x256xf32>
    %cst_18 = arith.constant dense<0.000000e+00> : vector<8x256xf32>
    %40 = tpu.matmul %32, %9, %cst_18 {dimension_numbers = #tpu.dot_dimension_numbers<[1], [0], [0], [1], [0, 0, 1, 1], [], []>} : vector<8x64xf32>, vector<64x256xf32>, vector<8x256xf32> -> vector<8x256xf32>
    %41 = arith.addf %39, %40 : vector<8x256xf32>
    %42 = vector.extract_strided_slice %41 {offsets = [0, 0], sizes = [8, 192], strides = [1, 1]} : vector<8x256xf32> to vector<8x192xf32>
    %43 = arith.negf %42 : vector<8x192xf32>
    %44 = math.exp %43 : vector<8x192xf32>
    %cst_19 = arith.constant 1.000000e+00 : f32
    %45 = vector.broadcast %cst_19 : f32 to vector<8x192xf32>
    %46 = arith.addf %45, %44 : vector<8x192xf32>
    %47 = arith.divf %45, %46 : vector<8x192xf32>
    %48 = vector.extract_strided_slice %41 {offsets = [0, 192], sizes = [8, 64], strides = [1, 1]} : vector<8x256xf32> to vector<8x64xf32>
    %49 = math.tanh %48 : vector<8x64xf32>
    %50 = vector.extract_strided_slice %47 {offsets = [0, 0], sizes = [8, 64], strides = [1, 1]} : vector<8x192xf32> to vector<8x64xf32>
    %51 = vector.extract_strided_slice %47 {offsets = [0, 64], sizes = [8, 64], strides = [1, 1]} : vector<8x192xf32> to vector<8x64xf32>
    %52 = vector.extract_strided_slice %47 {offsets = [0, 128], sizes = [8, 64], strides = [1, 1]} : vector<8x192xf32> to vector<8x64xf32>
    %53 = arith.mulf %51, %30 : vector<8x64xf32>
    %54 = arith.mulf %50, %49 : vector<8x64xf32>
    %55 = arith.addf %53, %54 : vector<8x64xf32>
    %56 = math.tanh %55 : vector<8x64xf32>
    %57 = arith.mulf %52, %56 : vector<8x64xf32>
    %58 = vector.extract_strided_slice %57 {offsets = [0, 0], sizes = [8, 32], strides = [1, 1]} : vector<8x64xf32> to vector<8x32xf32>
    %c8_20 = arith.constant 8 : index
    %c0_21 = arith.constant 0 : index
    %59 = vector.load %arg7[%c8_20, %c0_21] : memref<64x64xf32, #tpu.memory_space<vmem>>, vector<8x32xf32>
    tpu.vector_store %arg7[%c8_20, %c0_21], %58 {strides = array<i32>} : memref<64x64xf32, #tpu.memory_space<vmem>>, vector<8x32xf32>,
    %60 = vector.extract_strided_slice %57 {offsets = [0, 32], sizes = [8, 32], strides = [1, 1]} : vector<8x64xf32> to vector<8x32xf32>
    %c48_22 = arith.constant 48 : index
    %c32_23 = arith.constant 32 : index
    %61 = vector.load %arg7[%c48_22, %c32_23] : memref<64x64xf32, #tpu.memory_space<vmem>>, vector<8x32xf32>
    tpu.vector_store %arg7[%c48_22, %c32_23], %60 {strides = array<i32>} : memref<64x64xf32, #tpu.memory_space<vmem>>, vector<8x32xf32>,
    %c16 = arith.constant 16 : index
    %c0_24 = arith.constant 0 : index
    %62 = vector.load %arg6[%c16, %c0_24] : memref<64x512xf32, #tpu.memory_space<vmem>>, vector<8x256xf32>
    %c40 = arith.constant 40 : index
    %c256_25 = arith.constant 256 : index
    %63 = vector.load %arg6[%c40, %c256_25] : memref<64x512xf32, #tpu.memory_space<vmem>>, vector<8x256xf32>
    %64 = arith.addf %62, %63 : vector<8x256xf32>
    %cst_26 = arith.constant dense<0.000000e+00> : vector<8x256xf32>
    %65 = tpu.matmul %57, %9, %cst_26 {dimension_numbers = #tpu.dot_dimension_numbers<[1], [0], [0], [1], [0, 0, 1, 1], [], []>} : vector<8x64xf32>, vector<64x256xf32>, vector<8x256xf32> -> vector<8x256xf32>
    %66 = arith.addf %64, %65 : vector<8x256xf32>
    %67 = vector.extract_strided_slice %66 {offsets = [0, 0], sizes = [8, 192], strides = [1, 1]} : vector<8x256xf32> to vector<8x192xf32>
    %68 = arith.negf %67 : vector<8x192xf32>
    %69 = math.exp %68 : vector<8x192xf32>
    %cst_27 = arith.constant 1.000000e+00 : f32
    %70 = vector.broadcast %cst_27 : f32 to vector<8x192xf32>
    %71 = arith.addf %70, %69 : vector<8x192xf32>
    %72 = arith.divf %70, %71 : vector<8x192xf32>
    %73 = vector.extract_strided_slice %66 {offsets = [0, 192], sizes = [8, 64], strides = [1, 1]} : vector<8x256xf32> to vector<8x64xf32>
    %74 = math.tanh %73 : vector<8x64xf32>
    %75 = vector.extract_strided_slice %72 {offsets = [0, 0], sizes = [8, 64], strides = [1, 1]} : vector<8x192xf32> to vector<8x64xf32>
    %76 = vector.extract_strided_slice %72 {offsets = [0, 64], sizes = [8, 64], strides = [1, 1]} : vector<8x192xf32> to vector<8x64xf32>
    %77 = vector.extract_strided_slice %72 {offsets = [0, 128], sizes = [8, 64], strides = [1, 1]} : vector<8x192xf32> to vector<8x64xf32>
    %78 = arith.mulf %76, %55 : vector<8x64xf32>
    %79 = arith.mulf %75, %74 : vector<8x64xf32>
    %80 = arith.addf %78, %79 : vector<8x64xf32>
    %81 = math.tanh %80 : vector<8x64xf32>
    %82 = arith.mulf %77, %81 : vector<8x64xf32>
    %83 = vector.extract_strided_slice %82 {offsets = [0, 0], sizes = [8, 32], strides = [1, 1]} : vector<8x64xf32> to vector<8x32xf32>
    %c16_28 = arith.constant 16 : index
    %c0_29 = arith.constant 0 : index
    %84 = vector.load %arg7[%c16_28, %c0_29] : memref<64x64xf32, #tpu.memory_space<vmem>>, vector<8x32xf32>
    tpu.vector_store %arg7[%c16_28, %c0_29], %83 {strides = array<i32>} : memref<64x64xf32, #tpu.memory_space<vmem>>, vector<8x32xf32>,
    %85 = vector.extract_strided_slice %82 {offsets = [0, 32], sizes = [8, 32], strides = [1, 1]} : vector<8x64xf32> to vector<8x32xf32>
    %c40_30 = arith.constant 40 : index
    %c32_31 = arith.constant 32 : index
    %86 = vector.load %arg7[%c40_30, %c32_31] : memref<64x64xf32, #tpu.memory_space<vmem>>, vector<8x32xf32>
    tpu.vector_store %arg7[%c40_30, %c32_31], %85 {strides = array<i32>} : memref<64x64xf32, #tpu.memory_space<vmem>>, vector<8x32xf32>,
    %c24 = arith.constant 24 : index
    %c0_32 = arith.constant 0 : index
    %87 = vector.load %arg6[%c24, %c0_32] : memref<64x512xf32, #tpu.memory_space<vmem>>, vector<8x256xf32>
    %c32_33 = arith.constant 32 : index
    %c256_34 = arith.constant 256 : index
    %88 = vector.load %arg6[%c32_33, %c256_34] : memref<64x512xf32, #tpu.memory_space<vmem>>, vector<8x256xf32>
    %89 = arith.addf %87, %88 : vector<8x256xf32>
    %cst_35 = arith.constant dense<0.000000e+00> : vector<8x256xf32>
    %90 = tpu.matmul %82, %9, %cst_35 {dimension_numbers = #tpu.dot_dimension_numbers<[1], [0], [0], [1], [0, 0, 1, 1], [], []>} : vector<8x64xf32>, vector<64x256xf32>, vector<8x256xf32> -> vector<8x256xf32>
    %91 = arith.addf %89, %90 : vector<8x256xf32>
    %92 = vector.extract_strided_slice %91 {offsets = [0, 0], sizes = [8, 192], strides = [1, 1]} : vector<8x256xf32> to vector<8x192xf32>
    %93 = arith.negf %92 : vector<8x192xf32>
    %94 = math.exp %93 : vector<8x192xf32>
    %cst_36 = arith.constant 1.000000e+00 : f32
    %95 = vector.broadcast %cst_36 : f32 to vector<8x192xf32>
    %96 = arith.addf %95, %94 : vector<8x192xf32>
    %97 = arith.divf %95, %96 : vector<8x192xf32>
    %98 = vector.extract_strided_slice %91 {offsets = [0, 192], sizes = [8, 64], strides = [1, 1]} : vector<8x256xf32> to vector<8x64xf32>
    %99 = math.tanh %98 : vector<8x64xf32>
    %100 = vector.extract_strided_slice %97 {offsets = [0, 0], sizes = [8, 64], strides = [1, 1]} : vector<8x192xf32> to vector<8x64xf32>
    %101 = vector.extract_strided_slice %97 {offsets = [0, 64], sizes = [8, 64], strides = [1, 1]} : vector<8x192xf32> to vector<8x64xf32>
    %102 = vector.extract_strided_slice %97 {offsets = [0, 128], sizes = [8, 64], strides = [1, 1]} : vector<8x192xf32> to vector<8x64xf32>
    %103 = arith.mulf %101, %80 : vector<8x64xf32>
    %104 = arith.mulf %100, %99 : vector<8x64xf32>
    %105 = arith.addf %103, %104 : vector<8x64xf32>
    %106 = math.tanh %105 : vector<8x64xf32>
    %107 = arith.mulf %102, %106 : vector<8x64xf32>
    %108 = vector.extract_strided_slice %107 {offsets = [0, 0], sizes = [8, 32], strides = [1, 1]} : vector<8x64xf32> to vector<8x32xf32>
    %c24_37 = arith.constant 24 : index
    %c0_38 = arith.constant 0 : index
    %109 = vector.load %arg7[%c24_37, %c0_38] : memref<64x64xf32, #tpu.memory_space<vmem>>, vector<8x32xf32>
    tpu.vector_store %arg7[%c24_37, %c0_38], %108 {strides = array<i32>} : memref<64x64xf32, #tpu.memory_space<vmem>>, vector<8x32xf32>,
    %110 = vector.extract_strided_slice %107 {offsets = [0, 32], sizes = [8, 32], strides = [1, 1]} : vector<8x64xf32> to vector<8x32xf32>
    %c32_39 = arith.constant 32 : index
    %c32_40 = arith.constant 32 : index
    %111 = vector.load %arg7[%c32_39, %c32_40] : memref<64x64xf32, #tpu.memory_space<vmem>>, vector<8x32xf32>
    tpu.vector_store %arg7[%c32_39, %c32_40], %110 {strides = array<i32>} : memref<64x64xf32, #tpu.memory_space<vmem>>, vector<8x32xf32>,
    %c32_41 = arith.constant 32 : index
    %c0_42 = arith.constant 0 : index
    %112 = vector.load %arg6[%c32_41, %c0_42] : memref<64x512xf32, #tpu.memory_space<vmem>>, vector<8x256xf32>
    %c24_43 = arith.constant 24 : index
    %c256_44 = arith.constant 256 : index
    %113 = vector.load %arg6[%c24_43, %c256_44] : memref<64x512xf32, #tpu.memory_space<vmem>>, vector<8x256xf32>
    %114 = arith.addf %112, %113 : vector<8x256xf32>
    %cst_45 = arith.constant dense<0.000000e+00> : vector<8x256xf32>
    %115 = tpu.matmul %107, %9, %cst_45 {dimension_numbers = #tpu.dot_dimension_numbers<[1], [0], [0], [1], [0, 0, 1, 1], [], []>} : vector<8x64xf32>, vector<64x256xf32>, vector<8x256xf32> -> vector<8x256xf32>
    %116 = arith.addf %114, %115 : vector<8x256xf32>
    %117 = vector.extract_strided_slice %116 {offsets = [0, 0], sizes = [8, 192], strides = [1, 1]} : vector<8x256xf32> to vector<8x192xf32>
    %118 = arith.negf %117 : vector<8x192xf32>
    %119 = math.exp %118 : vector<8x192xf32>
    %cst_46 = arith.constant 1.000000e+00 : f32
    %120 = vector.broadcast %cst_46 : f32 to vector<8x192xf32>
    %121 = arith.addf %120, %119 : vector<8x192xf32>
    %122 = arith.divf %120, %121 : vector<8x192xf32>
    %123 = vector.extract_strided_slice %116 {offsets = [0, 192], sizes = [8, 64], strides = [1, 1]} : vector<8x256xf32> to vector<8x64xf32>
    %124 = math.tanh %123 : vector<8x64xf32>
    %125 = vector.extract_strided_slice %122 {offsets = [0, 0], sizes = [8, 64], strides = [1, 1]} : vector<8x192xf32> to vector<8x64xf32>
    %126 = vector.extract_strided_slice %122 {offsets = [0, 64], sizes = [8, 64], strides = [1, 1]} : vector<8x192xf32> to vector<8x64xf32>
    %127 = vector.extract_strided_slice %122 {offsets = [0, 128], sizes = [8, 64], strides = [1, 1]} : vector<8x192xf32> to vector<8x64xf32>
    %128 = arith.mulf %126, %105 : vector<8x64xf32>
    %129 = arith.mulf %125, %124 : vector<8x64xf32>
    %130 = arith.addf %128, %129 : vector<8x64xf32>
    %131 = math.tanh %130 : vector<8x64xf32>
    %132 = arith.mulf %127, %131 : vector<8x64xf32>
    %133 = vector.extract_strided_slice %132 {offsets = [0, 0], sizes = [8, 32], strides = [1, 1]} : vector<8x64xf32> to vector<8x32xf32>
    %c32_47 = arith.constant 32 : index
    %c0_48 = arith.constant 0 : index
    %134 = vector.load %arg7[%c32_47, %c0_48] : memref<64x64xf32, #tpu.memory_space<vmem>>, vector<8x32xf32>
    tpu.vector_store %arg7[%c32_47, %c0_48], %133 {strides = array<i32>} : memref<64x64xf32, #tpu.memory_space<vmem>>, vector<8x32xf32>,
    %135 = vector.extract_strided_slice %132 {offsets = [0, 32], sizes = [8, 32], strides = [1, 1]} : vector<8x64xf32> to vector<8x32xf32>
    %c24_49 = arith.constant 24 : index
    %c32_50 = arith.constant 32 : index
    %136 = vector.load %arg7[%c24_49, %c32_50] : memref<64x64xf32, #tpu.memory_space<vmem>>, vector<8x32xf32>
    tpu.vector_store %arg7[%c24_49, %c32_50], %135 {strides = array<i32>} : memref<64x64xf32, #tpu.memory_space<vmem>>, vector<8x32xf32>,
    %c40_51 = arith.constant 40 : index
    %c0_52 = arith.constant 0 : index
    %137 = vector.load %arg6[%c40_51, %c0_52] : memref<64x512xf32, #tpu.memory_space<vmem>>, vector<8x256xf32>
    %c16_53 = arith.constant 16 : index
    %c256_54 = arith.constant 256 : index
    %138 = vector.load %arg6[%c16_53, %c256_54] : memref<64x512xf32, #tpu.memory_space<vmem>>, vector<8x256xf32>
    %139 = arith.addf %137, %138 : vector<8x256xf32>
    %cst_55 = arith.constant dense<0.000000e+00> : vector<8x256xf32>
    %140 = tpu.matmul %132, %9, %cst_55 {dimension_numbers = #tpu.dot_dimension_numbers<[1], [0], [0], [1], [0, 0, 1, 1], [], []>} : vector<8x64xf32>, vector<64x256xf32>, vector<8x256xf32> -> vector<8x256xf32>
    %141 = arith.addf %139, %140 : vector<8x256xf32>
    %142 = vector.extract_strided_slice %141 {offsets = [0, 0], sizes = [8, 192], strides = [1, 1]} : vector<8x256xf32> to vector<8x192xf32>
    %143 = arith.negf %142 : vector<8x192xf32>
    %144 = math.exp %143 : vector<8x192xf32>
    %cst_56 = arith.constant 1.000000e+00 : f32
    %145 = vector.broadcast %cst_56 : f32 to vector<8x192xf32>
    %146 = arith.addf %145, %144 : vector<8x192xf32>
    %147 = arith.divf %145, %146 : vector<8x192xf32>
    %148 = vector.extract_strided_slice %141 {offsets = [0, 192], sizes = [8, 64], strides = [1, 1]} : vector<8x256xf32> to vector<8x64xf32>
    %149 = math.tanh %148 : vector<8x64xf32>
    %150 = vector.extract_strided_slice %147 {offsets = [0, 0], sizes = [8, 64], strides = [1, 1]} : vector<8x192xf32> to vector<8x64xf32>
    %151 = vector.extract_strided_slice %147 {offsets = [0, 64], sizes = [8, 64], strides = [1, 1]} : vector<8x192xf32> to vector<8x64xf32>
    %152 = vector.extract_strided_slice %147 {offsets = [0, 128], sizes = [8, 64], strides = [1, 1]} : vector<8x192xf32> to vector<8x64xf32>
    %153 = arith.mulf %151, %130 : vector<8x64xf32>
    %154 = arith.mulf %150, %149 : vector<8x64xf32>
    %155 = arith.addf %153, %154 : vector<8x64xf32>
    %156 = math.tanh %155 : vector<8x64xf32>
    %157 = arith.mulf %152, %156 : vector<8x64xf32>
    %158 = vector.extract_strided_slice %157 {offsets = [0, 0], sizes = [8, 32], strides = [1, 1]} : vector<8x64xf32> to vector<8x32xf32>
    %c40_57 = arith.constant 40 : index
    %c0_58 = arith.constant 0 : index
    %159 = vector.load %arg7[%c40_57, %c0_58] : memref<64x64xf32, #tpu.memory_space<vmem>>, vector<8x32xf32>
    tpu.vector_store %arg7[%c40_57, %c0_58], %158 {strides = array<i32>} : memref<64x64xf32, #tpu.memory_space<vmem>>, vector<8x32xf32>,
    %160 = vector.extract_strided_slice %157 {offsets = [0, 32], sizes = [8, 32], strides = [1, 1]} : vector<8x64xf32> to vector<8x32xf32>
    %c16_59 = arith.constant 16 : index
    %c32_60 = arith.constant 32 : index
    %161 = vector.load %arg7[%c16_59, %c32_60] : memref<64x64xf32, #tpu.memory_space<vmem>>, vector<8x32xf32>
    tpu.vector_store %arg7[%c16_59, %c32_60], %160 {strides = array<i32>} : memref<64x64xf32, #tpu.memory_space<vmem>>, vector<8x32xf32>,
    %c48_61 = arith.constant 48 : index
    %c0_62 = arith.constant 0 : index
    %162 = vector.load %arg6[%c48_61, %c0_62] : memref<64x512xf32, #tpu.memory_space<vmem>>, vector<8x256xf32>
    %c8_63 = arith.constant 8 : index
    %c256_64 = arith.constant 256 : index
    %163 = vector.load %arg6[%c8_63, %c256_64] : memref<64x512xf32, #tpu.memory_space<vmem>>, vector<8x256xf32>
    %164 = arith.addf %162, %163 : vector<8x256xf32>
    %cst_65 = arith.constant dense<0.000000e+00> : vector<8x256xf32>
    %165 = tpu.matmul %157, %9, %cst_65 {dimension_numbers = #tpu.dot_dimension_numbers<[1], [0], [0], [1], [0, 0, 1, 1], [], []>} : vector<8x64xf32>, vector<64x256xf32>, vector<8x256xf32> -> vector<8x256xf32>
    %166 = arith.addf %164, %165 : vector<8x256xf32>
    %167 = vector.extract_strided_slice %166 {offsets = [0, 0], sizes = [8, 192], strides = [1, 1]} : vector<8x256xf32> to vector<8x192xf32>
    %168 = arith.negf %167 : vector<8x192xf32>
    %169 = math.exp %168 : vector<8x192xf32>
    %cst_66 = arith.constant 1.000000e+00 : f32
    %170 = vector.broadcast %cst_66 : f32 to vector<8x192xf32>
    %171 = arith.addf %170, %169 : vector<8x192xf32>
    %172 = arith.divf %170, %171 : vector<8x192xf32>
    %173 = vector.extract_strided_slice %166 {offsets = [0, 192], sizes = [8, 64], strides = [1, 1]} : vector<8x256xf32> to vector<8x64xf32>
    %174 = math.tanh %173 : vector<8x64xf32>
    %175 = vector.extract_strided_slice %172 {offsets = [0, 0], sizes = [8, 64], strides = [1, 1]} : vector<8x192xf32> to vector<8x64xf32>
    %176 = vector.extract_strided_slice %172 {offsets = [0, 64], sizes = [8, 64], strides = [1, 1]} : vector<8x192xf32> to vector<8x64xf32>
    %177 = vector.extract_strided_slice %172 {offsets = [0, 128], sizes = [8, 64], strides = [1, 1]} : vector<8x192xf32> to vector<8x64xf32>
    %178 = arith.mulf %176, %155 : vector<8x64xf32>
    %179 = arith.mulf %175, %174 : vector<8x64xf32>
    %180 = arith.addf %178, %179 : vector<8x64xf32>
    %181 = math.tanh %180 : vector<8x64xf32>
    %182 = arith.mulf %177, %181 : vector<8x64xf32>
    %183 = vector.extract_strided_slice %182 {offsets = [0, 0], sizes = [8, 32], strides = [1, 1]} : vector<8x64xf32> to vector<8x32xf32>
    %c48_67 = arith.constant 48 : index
    %c0_68 = arith.constant 0 : index
    %184 = vector.load %arg7[%c48_67, %c0_68] : memref<64x64xf32, #tpu.memory_space<vmem>>, vector<8x32xf32>
    tpu.vector_store %arg7[%c48_67, %c0_68], %183 {strides = array<i32>} : memref<64x64xf32, #tpu.memory_space<vmem>>, vector<8x32xf32>,
    %185 = vector.extract_strided_slice %182 {offsets = [0, 32], sizes = [8, 32], strides = [1, 1]} : vector<8x64xf32> to vector<8x32xf32>
    %c8_69 = arith.constant 8 : index
    %c32_70 = arith.constant 32 : index
    %186 = vector.load %arg7[%c8_69, %c32_70] : memref<64x64xf32, #tpu.memory_space<vmem>>, vector<8x32xf32>
    tpu.vector_store %arg7[%c8_69, %c32_70], %185 {strides = array<i32>} : memref<64x64xf32, #tpu.memory_space<vmem>>, vector<8x32xf32>,
    %c56_71 = arith.constant 56 : index
    %c0_72 = arith.constant 0 : index
    %187 = vector.load %arg6[%c56_71, %c0_72] : memref<64x512xf32, #tpu.memory_space<vmem>>, vector<8x256xf32>
    %c0_73 = arith.constant 0 : index
    %c256_74 = arith.constant 256 : index
    %188 = vector.load %arg6[%c0_73, %c256_74] : memref<64x512xf32, #tpu.memory_space<vmem>>, vector<8x256xf32>
    %189 = arith.addf %187, %188 : vector<8x256xf32>
    %cst_75 = arith.constant dense<0.000000e+00> : vector<8x256xf32>
    %190 = tpu.matmul %182, %9, %cst_75 {dimension_numbers = #tpu.dot_dimension_numbers<[1], [0], [0], [1], [0, 0, 1, 1], [], []>} : vector<8x64xf32>, vector<64x256xf32>, vector<8x256xf32> -> vector<8x256xf32>
    %191 = arith.addf %189, %190 : vector<8x256xf32>
    %192 = vector.extract_strided_slice %191 {offsets = [0, 0], sizes = [8, 192], strides = [1, 1]} : vector<8x256xf32> to vector<8x192xf32>
    %193 = arith.negf %192 : vector<8x192xf32>
    %194 = math.exp %193 : vector<8x192xf32>
    %cst_76 = arith.constant 1.000000e+00 : f32
    %195 = vector.broadcast %cst_76 : f32 to vector<8x192xf32>
    %196 = arith.addf %195, %194 : vector<8x192xf32>
    %197 = arith.divf %195, %196 : vector<8x192xf32>
    %198 = vector.extract_strided_slice %191 {offsets = [0, 192], sizes = [8, 64], strides = [1, 1]} : vector<8x256xf32> to vector<8x64xf32>
    %199 = math.tanh %198 : vector<8x64xf32>
    %200 = vector.extract_strided_slice %197 {offsets = [0, 0], sizes = [8, 64], strides = [1, 1]} : vector<8x192xf32> to vector<8x64xf32>
    %201 = vector.extract_strided_slice %197 {offsets = [0, 64], sizes = [8, 64], strides = [1, 1]} : vector<8x192xf32> to vector<8x64xf32>
    %202 = vector.extract_strided_slice %197 {offsets = [0, 128], sizes = [8, 64], strides = [1, 1]} : vector<8x192xf32> to vector<8x64xf32>
    %203 = arith.mulf %201, %180 : vector<8x64xf32>
    %204 = arith.mulf %200, %199 : vector<8x64xf32>
    %205 = arith.addf %203, %204 : vector<8x64xf32>
    %206 = math.tanh %205 : vector<8x64xf32>
    %207 = arith.mulf %202, %206 : vector<8x64xf32>
    %208 = vector.extract_strided_slice %207 {offsets = [0, 0], sizes = [8, 32], strides = [1, 1]} : vector<8x64xf32> to vector<8x32xf32>
    %c56_77 = arith.constant 56 : index
    %c0_78 = arith.constant 0 : index
    %209 = vector.load %arg7[%c56_77, %c0_78] : memref<64x64xf32, #tpu.memory_space<vmem>>, vector<8x32xf32>
    tpu.vector_store %arg7[%c56_77, %c0_78], %208 {strides = array<i32>} : memref<64x64xf32, #tpu.memory_space<vmem>>, vector<8x32xf32>,
    %210 = vector.extract_strided_slice %207 {offsets = [0, 32], sizes = [8, 32], strides = [1, 1]} : vector<8x64xf32> to vector<8x32xf32>
    %c0_79 = arith.constant 0 : index
    %c32_80 = arith.constant 32 : index
    %211 = vector.load %arg7[%c0_79, %c32_80] : memref<64x64xf32, #tpu.memory_space<vmem>>, vector<8x32xf32>
    tpu.vector_store %arg7[%c0_79, %c32_80], %210 {strides = array<i32>} : memref<64x64xf32, #tpu.memory_space<vmem>>, vector<8x32xf32>,
    %c0_81 = arith.constant 0 : index
    %c0_82 = arith.constant 0 : index
    %212 = vector.load %arg2[%c0_81, %c0_82] : memref<65x512xf32, #tpu.memory_space<vmem>>, vector<64x512xf32>
    %c64 = arith.constant 64 : index
    %c0_83 = arith.constant 0 : index
    %213 = vector.load %arg2[%c64, %c0_83] : memref<65x512xf32, #tpu.memory_space<vmem>>, vector<1x512xf32>
    %c0_84 = arith.constant 0 : index
    %c0_85 = arith.constant 0 : index
    %214 = vector.load %arg7[%c0_84, %c0_85] : memref<64x64xf32, #tpu.memory_space<vmem>>, vector<64x64xf32>
    %cst_86 = arith.constant dense<0.000000e+00> : vector<64x512xf32>
    %215 = tpu.matmul %214, %212, %cst_86 {dimension_numbers = #tpu.dot_dimension_numbers<[1], [0], [0], [1], [0, 0, 1, 1], [], []>} : vector<64x64xf32>, vector<64x512xf32>, vector<64x512xf32> -> vector<64x512xf32>
    %216 = vector.broadcast %213 : vector<1x512xf32> to vector<64x512xf32>
    %217 = arith.addf %215, %216 : vector<64x512xf32>
    %c0_87 = arith.constant 0 : index
    %c0_88 = arith.constant 0 : index
    %218 = vector.load %arg6[%c0_87, %c0_88] : memref<64x512xf32, #tpu.memory_space<vmem>>, vector<64x512xf32>
    tpu.vector_store %arg6[%c0_87, %c0_88], %217 {strides = array<i32>} : memref<64x512xf32, #tpu.memory_space<vmem>>, vector<64x512xf32>,
    %c64_89 = arith.constant 64 : index
    %c0_90 = arith.constant 0 : index
    %219 = vector.load %arg3[%c64_89, %c0_90] : memref<128x256xf32, #tpu.memory_space<vmem>>, vector<64x256xf32>
    %cst_91 = arith.constant 0.000000e+00 : f32
    %220 = vector.broadcast %cst_91 : f32 to vector<8x64xf32>
    %cst_92 = arith.constant 0.000000e+00 : f32
    %221 = vector.broadcast %cst_92 : f32 to vector<8x64xf32>
    %c0_93 = arith.constant 0 : index
    %c0_94 = arith.constant 0 : index
    %222 = vector.load %arg6[%c0_93, %c0_94] : memref<64x512xf32, #tpu.memory_space<vmem>>, vector<8x256xf32>
    %c56_95 = arith.constant 56 : index
    %c256_96 = arith.constant 256 : index
    %223 = vector.load %arg6[%c56_95, %c256_96] : memref<64x512xf32, #tpu.memory_space<vmem>>, vector<8x256xf32>
    %224 = arith.addf %222, %223 : vector<8x256xf32>
    %cst_97 = arith.constant dense<0.000000e+00> : vector<8x256xf32>
    %225 = tpu.matmul %220, %219, %cst_97 {dimension_numbers = #tpu.dot_dimension_numbers<[1], [0], [0], [1], [0, 0, 1, 1], [], []>} : vector<8x64xf32>, vector<64x256xf32>, vector<8x256xf32> -> vector<8x256xf32>
    %226 = arith.addf %224, %225 : vector<8x256xf32>
    %227 = vector.extract_strided_slice %226 {offsets = [0, 0], sizes = [8, 192], strides = [1, 1]} : vector<8x256xf32> to vector<8x192xf32>
    %228 = arith.negf %227 : vector<8x192xf32>
    %229 = math.exp %228 : vector<8x192xf32>
    %cst_98 = arith.constant 1.000000e+00 : f32
    %230 = vector.broadcast %cst_98 : f32 to vector<8x192xf32>
    %231 = arith.addf %230, %229 : vector<8x192xf32>
    %232 = arith.divf %230, %231 : vector<8x192xf32>
    %233 = vector.extract_strided_slice %226 {offsets = [0, 192], sizes = [8, 64], strides = [1, 1]} : vector<8x256xf32> to vector<8x64xf32>
    %234 = math.tanh %233 : vector<8x64xf32>
    %235 = vector.extract_strided_slice %232 {offsets = [0, 0], sizes = [8, 64], strides = [1, 1]} : vector<8x192xf32> to vector<8x64xf32>
    %236 = vector.extract_strided_slice %232 {offsets = [0, 64], sizes = [8, 64], strides = [1, 1]} : vector<8x192xf32> to vector<8x64xf32>
    %237 = vector.extract_strided_slice %232 {offsets = [0, 128], sizes = [8, 64], strides = [1, 1]} : vector<8x192xf32> to vector<8x64xf32>
    %238 = arith.mulf %236, %221 : vector<8x64xf32>
    %239 = arith.mulf %235, %234 : vector<8x64xf32>
    %240 = arith.addf %238, %239 : vector<8x64xf32>
    %241 = math.tanh %240 : vector<8x64xf32>
    %242 = arith.mulf %237, %241 : vector<8x64xf32>
    %243 = vector.extract_strided_slice %242 {offsets = [0, 32], sizes = [8, 32], strides = [1, 1]} : vector<8x64xf32> to vector<8x32xf32>
    %c8_99 = arith.constant 8 : index
    %c0_100 = arith.constant 0 : index
    %244 = vector.load %arg6[%c8_99, %c0_100] : memref<64x512xf32, #tpu.memory_space<vmem>>, vector<8x256xf32>
    %c48_101 = arith.constant 48 : index
    %c256_102 = arith.constant 256 : index
    %245 = vector.load %arg6[%c48_101, %c256_102] : memref<64x512xf32, #tpu.memory_space<vmem>>, vector<8x256xf32>
    %246 = arith.addf %244, %245 : vector<8x256xf32>
    %cst_103 = arith.constant dense<0.000000e+00> : vector<8x256xf32>
    %247 = tpu.matmul %242, %219, %cst_103 {dimension_numbers = #tpu.dot_dimension_numbers<[1], [0], [0], [1], [0, 0, 1, 1], [], []>} : vector<8x64xf32>, vector<64x256xf32>, vector<8x256xf32> -> vector<8x256xf32>
    %248 = arith.addf %246, %247 : vector<8x256xf32>
    %249 = vector.extract_strided_slice %248 {offsets = [0, 0], sizes = [8, 192], strides = [1, 1]} : vector<8x256xf32> to vector<8x192xf32>
    %250 = arith.negf %249 : vector<8x192xf32>
    %251 = math.exp %250 : vector<8x192xf32>
    %cst_104 = arith.constant 1.000000e+00 : f32
    %252 = vector.broadcast %cst_104 : f32 to vector<8x192xf32>
    %253 = arith.addf %252, %251 : vector<8x192xf32>
    %254 = arith.divf %252, %253 : vector<8x192xf32>
    %255 = vector.extract_strided_slice %248 {offsets = [0, 192], sizes = [8, 64], strides = [1, 1]} : vector<8x256xf32> to vector<8x64xf32>
    %256 = math.tanh %255 : vector<8x64xf32>
    %257 = vector.extract_strided_slice %254 {offsets = [0, 0], sizes = [8, 64], strides = [1, 1]} : vector<8x192xf32> to vector<8x64xf32>
    %258 = vector.extract_strided_slice %254 {offsets = [0, 64], sizes = [8, 64], strides = [1, 1]} : vector<8x192xf32> to vector<8x64xf32>
    %259 = vector.extract_strided_slice %254 {offsets = [0, 128], sizes = [8, 64], strides = [1, 1]} : vector<8x192xf32> to vector<8x64xf32>
    %260 = arith.mulf %258, %240 : vector<8x64xf32>
    %261 = arith.mulf %257, %256 : vector<8x64xf32>
    %262 = arith.addf %260, %261 : vector<8x64xf32>
    %263 = math.tanh %262 : vector<8x64xf32>
    %264 = arith.mulf %259, %263 : vector<8x64xf32>
    %c16_105 = arith.constant 16 : index
    %c0_106 = arith.constant 0 : index
    %265 = vector.load %arg6[%c16_105, %c0_106] : memref<64x512xf32, #tpu.memory_space<vmem>>, vector<8x256xf32>
    %c40_107 = arith.constant 40 : index
    %c256_108 = arith.constant 256 : index
    %266 = vector.load %arg6[%c40_107, %c256_108] : memref<64x512xf32, #tpu.memory_space<vmem>>, vector<8x256xf32>
    %267 = arith.addf %265, %266 : vector<8x256xf32>
    %cst_109 = arith.constant dense<0.000000e+00> : vector<8x256xf32>
    %268 = tpu.matmul %264, %219, %cst_109 {dimension_numbers = #tpu.dot_dimension_numbers<[1], [0], [0], [1], [0, 0, 1, 1], [], []>} : vector<8x64xf32>, vector<64x256xf32>, vector<8x256xf32> -> vector<8x256xf32>
    %269 = arith.addf %267, %268 : vector<8x256xf32>
    %270 = vector.extract_strided_slice %269 {offsets = [0, 0], sizes = [8, 192], strides = [1, 1]} : vector<8x256xf32> to vector<8x192xf32>
    %271 = arith.negf %270 : vector<8x192xf32>
    %272 = math.exp %271 : vector<8x192xf32>
    %cst_110 = arith.constant 1.000000e+00 : f32
    %273 = vector.broadcast %cst_110 : f32 to vector<8x192xf32>
    %274 = arith.addf %273, %272 : vector<8x192xf32>
    %275 = arith.divf %273, %274 : vector<8x192xf32>
    %276 = vector.extract_strided_slice %269 {offsets = [0, 192], sizes = [8, 64], strides = [1, 1]} : vector<8x256xf32> to vector<8x64xf32>
    %277 = math.tanh %276 : vector<8x64xf32>
    %278 = vector.extract_strided_slice %275 {offsets = [0, 0], sizes = [8, 64], strides = [1, 1]} : vector<8x192xf32> to vector<8x64xf32>
    %279 = vector.extract_strided_slice %275 {offsets = [0, 64], sizes = [8, 64], strides = [1, 1]} : vector<8x192xf32> to vector<8x64xf32>
    %280 = vector.extract_strided_slice %275 {offsets = [0, 128], sizes = [8, 64], strides = [1, 1]} : vector<8x192xf32> to vector<8x64xf32>
    %281 = arith.mulf %279, %262 : vector<8x64xf32>
    %282 = arith.mulf %278, %277 : vector<8x64xf32>
    %283 = arith.addf %281, %282 : vector<8x64xf32>
    %284 = math.tanh %283 : vector<8x64xf32>
    %285 = arith.mulf %280, %284 : vector<8x64xf32>
    %c24_111 = arith.constant 24 : index
    %c0_112 = arith.constant 0 : index
    %286 = vector.load %arg6[%c24_111, %c0_112] : memref<64x512xf32, #tpu.memory_space<vmem>>, vector<8x256xf32>
    %c32_113 = arith.constant 32 : index
    %c256_114 = arith.constant 256 : index
    %287 = vector.load %arg6[%c32_113, %c256_114] : memref<64x512xf32, #tpu.memory_space<vmem>>, vector<8x256xf32>
    %288 = arith.addf %286, %287 : vector<8x256xf32>
    %cst_115 = arith.constant dense<0.000000e+00> : vector<8x256xf32>
    %289 = tpu.matmul %285, %219, %cst_115 {dimension_numbers = #tpu.dot_dimension_numbers<[1], [0], [0], [1], [0, 0, 1, 1], [], []>} : vector<8x64xf32>, vector<64x256xf32>, vector<8x256xf32> -> vector<8x256xf32>
    %290 = arith.addf %288, %289 : vector<8x256xf32>
    %291 = vector.extract_strided_slice %290 {offsets = [0, 0], sizes = [8, 192], strides = [1, 1]} : vector<8x256xf32> to vector<8x192xf32>
    %292 = arith.negf %291 : vector<8x192xf32>
    %293 = math.exp %292 : vector<8x192xf32>
    %cst_116 = arith.constant 1.000000e+00 : f32
    %294 = vector.broadcast %cst_116 : f32 to vector<8x192xf32>
    %295 = arith.addf %294, %293 : vector<8x192xf32>
    %296 = arith.divf %294, %295 : vector<8x192xf32>
    %297 = vector.extract_strided_slice %290 {offsets = [0, 192], sizes = [8, 64], strides = [1, 1]} : vector<8x256xf32> to vector<8x64xf32>
    %298 = math.tanh %297 : vector<8x64xf32>
    %299 = vector.extract_strided_slice %296 {offsets = [0, 0], sizes = [8, 64], strides = [1, 1]} : vector<8x192xf32> to vector<8x64xf32>
    %300 = vector.extract_strided_slice %296 {offsets = [0, 64], sizes = [8, 64], strides = [1, 1]} : vector<8x192xf32> to vector<8x64xf32>
    %301 = vector.extract_strided_slice %296 {offsets = [0, 128], sizes = [8, 64], strides = [1, 1]} : vector<8x192xf32> to vector<8x64xf32>
    %302 = arith.mulf %300, %283 : vector<8x64xf32>
    %303 = arith.mulf %299, %298 : vector<8x64xf32>
    %304 = arith.addf %302, %303 : vector<8x64xf32>
    %305 = math.tanh %304 : vector<8x64xf32>
    %306 = arith.mulf %301, %305 : vector<8x64xf32>
    %c32_117 = arith.constant 32 : index
    %c0_118 = arith.constant 0 : index
    %307 = vector.load %arg6[%c32_117, %c0_118] : memref<64x512xf32, #tpu.memory_space<vmem>>, vector<8x256xf32>
    %c24_119 = arith.constant 24 : index
    %c256_120 = arith.constant 256 : index
    %308 = vector.load %arg6[%c24_119, %c256_120] : memref<64x512xf32, #tpu.memory_space<vmem>>, vector<8x256xf32>
    %309 = arith.addf %307, %308 : vector<8x256xf32>
    %cst_121 = arith.constant dense<0.000000e+00> : vector<8x256xf32>
    %310 = tpu.matmul %306, %219, %cst_121 {dimension_numbers = #tpu.dot_dimension_numbers<[1], [0], [0], [1], [0, 0, 1, 1], [], []>} : vector<8x64xf32>, vector<64x256xf32>, vector<8x256xf32> -> vector<8x256xf32>
    %311 = arith.addf %309, %310 : vector<8x256xf32>
    %312 = vector.extract_strided_slice %311 {offsets = [0, 0], sizes = [8, 192], strides = [1, 1]} : vector<8x256xf32> to vector<8x192xf32>
    %313 = arith.negf %312 : vector<8x192xf32>
    %314 = math.exp %313 : vector<8x192xf32>
    %cst_122 = arith.constant 1.000000e+00 : f32
    %315 = vector.broadcast %cst_122 : f32 to vector<8x192xf32>
    %316 = arith.addf %315, %314 : vector<8x192xf32>
    %317 = arith.divf %315, %316 : vector<8x192xf32>
    %318 = vector.extract_strided_slice %311 {offsets = [0, 192], sizes = [8, 64], strides = [1, 1]} : vector<8x256xf32> to vector<8x64xf32>
    %319 = math.tanh %318 : vector<8x64xf32>
    %320 = vector.extract_strided_slice %317 {offsets = [0, 0], sizes = [8, 64], strides = [1, 1]} : vector<8x192xf32> to vector<8x64xf32>
    %321 = vector.extract_strided_slice %317 {offsets = [0, 64], sizes = [8, 64], strides = [1, 1]} : vector<8x192xf32> to vector<8x64xf32>
    %322 = vector.extract_strided_slice %317 {offsets = [0, 128], sizes = [8, 64], strides = [1, 1]} : vector<8x192xf32> to vector<8x64xf32>
    %323 = arith.mulf %321, %304 : vector<8x64xf32>
    %324 = arith.mulf %320, %319 : vector<8x64xf32>
    %325 = arith.addf %323, %324 : vector<8x64xf32>
    %326 = math.tanh %325 : vector<8x64xf32>
    %327 = arith.mulf %322, %326 : vector<8x64xf32>
    %c40_123 = arith.constant 40 : index
    %c0_124 = arith.constant 0 : index
    %328 = vector.load %arg6[%c40_123, %c0_124] : memref<64x512xf32, #tpu.memory_space<vmem>>, vector<8x256xf32>
    %c16_125 = arith.constant 16 : index
    %c256_126 = arith.constant 256 : index
    %329 = vector.load %arg6[%c16_125, %c256_126] : memref<64x512xf32, #tpu.memory_space<vmem>>, vector<8x256xf32>
    %330 = arith.addf %328, %329 : vector<8x256xf32>
    %cst_127 = arith.constant dense<0.000000e+00> : vector<8x256xf32>
    %331 = tpu.matmul %327, %219, %cst_127 {dimension_numbers = #tpu.dot_dimension_numbers<[1], [0], [0], [1], [0, 0, 1, 1], [], []>} : vector<8x64xf32>, vector<64x256xf32>, vector<8x256xf32> -> vector<8x256xf32>
    %332 = arith.addf %330, %331 : vector<8x256xf32>
    %333 = vector.extract_strided_slice %332 {offsets = [0, 0], sizes = [8, 192], strides = [1, 1]} : vector<8x256xf32> to vector<8x192xf32>
    %334 = arith.negf %333 : vector<8x192xf32>
    %335 = math.exp %334 : vector<8x192xf32>
    %cst_128 = arith.constant 1.000000e+00 : f32
    %336 = vector.broadcast %cst_128 : f32 to vector<8x192xf32>
    %337 = arith.addf %336, %335 : vector<8x192xf32>
    %338 = arith.divf %336, %337 : vector<8x192xf32>
    %339 = vector.extract_strided_slice %332 {offsets = [0, 192], sizes = [8, 64], strides = [1, 1]} : vector<8x256xf32> to vector<8x64xf32>
    %340 = math.tanh %339 : vector<8x64xf32>
    %341 = vector.extract_strided_slice %338 {offsets = [0, 0], sizes = [8, 64], strides = [1, 1]} : vector<8x192xf32> to vector<8x64xf32>
    %342 = vector.extract_strided_slice %338 {offsets = [0, 64], sizes = [8, 64], strides = [1, 1]} : vector<8x192xf32> to vector<8x64xf32>
    %343 = vector.extract_strided_slice %338 {offsets = [0, 128], sizes = [8, 64], strides = [1, 1]} : vector<8x192xf32> to vector<8x64xf32>
    %344 = arith.mulf %342, %325 : vector<8x64xf32>
    %345 = arith.mulf %341, %340 : vector<8x64xf32>
    %346 = arith.addf %344, %345 : vector<8x64xf32>
    %347 = math.tanh %346 : vector<8x64xf32>
    %348 = arith.mulf %343, %347 : vector<8x64xf32>
    %c48_129 = arith.constant 48 : index
    %c0_130 = arith.constant 0 : index
    %349 = vector.load %arg6[%c48_129, %c0_130] : memref<64x512xf32, #tpu.memory_space<vmem>>, vector<8x256xf32>
    %c8_131 = arith.constant 8 : index
    %c256_132 = arith.constant 256 : index
    %350 = vector.load %arg6[%c8_131, %c256_132] : memref<64x512xf32, #tpu.memory_space<vmem>>, vector<8x256xf32>
    %351 = arith.addf %349, %350 : vector<8x256xf32>
    %cst_133 = arith.constant dense<0.000000e+00> : vector<8x256xf32>
    %352 = tpu.matmul %348, %219, %cst_133 {dimension_numbers = #tpu.dot_dimension_numbers<[1], [0], [0], [1], [0, 0, 1, 1], [], []>} : vector<8x64xf32>, vector<64x256xf32>, vector<8x256xf32> -> vector<8x256xf32>
    %353 = arith.addf %351, %352 : vector<8x256xf32>
    %354 = vector.extract_strided_slice %353 {offsets = [0, 0], sizes = [8, 192], strides = [1, 1]} : vector<8x256xf32> to vector<8x192xf32>
    %355 = arith.negf %354 : vector<8x192xf32>
    %356 = math.exp %355 : vector<8x192xf32>
    %cst_134 = arith.constant 1.000000e+00 : f32
    %357 = vector.broadcast %cst_134 : f32 to vector<8x192xf32>
    %358 = arith.addf %357, %356 : vector<8x192xf32>
    %359 = arith.divf %357, %358 : vector<8x192xf32>
    %360 = vector.extract_strided_slice %353 {offsets = [0, 192], sizes = [8, 64], strides = [1, 1]} : vector<8x256xf32> to vector<8x64xf32>
    %361 = math.tanh %360 : vector<8x64xf32>
    %362 = vector.extract_strided_slice %359 {offsets = [0, 0], sizes = [8, 64], strides = [1, 1]} : vector<8x192xf32> to vector<8x64xf32>
    %363 = vector.extract_strided_slice %359 {offsets = [0, 64], sizes = [8, 64], strides = [1, 1]} : vector<8x192xf32> to vector<8x64xf32>
    %364 = vector.extract_strided_slice %359 {offsets = [0, 128], sizes = [8, 64], strides = [1, 1]} : vector<8x192xf32> to vector<8x64xf32>
    %365 = arith.mulf %363, %346 : vector<8x64xf32>
    %366 = arith.mulf %362, %361 : vector<8x64xf32>
    %367 = arith.addf %365, %366 : vector<8x64xf32>
    %368 = math.tanh %367 : vector<8x64xf32>
    %369 = arith.mulf %364, %368 : vector<8x64xf32>
    %c56_135 = arith.constant 56 : index
    %c0_136 = arith.constant 0 : index
    %370 = vector.load %arg6[%c56_135, %c0_136] : memref<64x512xf32, #tpu.memory_space<vmem>>, vector<8x256xf32>
    %c0_137 = arith.constant 0 : index
    %c256_138 = arith.constant 256 : index
    %371 = vector.load %arg6[%c0_137, %c256_138] : memref<64x512xf32, #tpu.memory_space<vmem>>, vector<8x256xf32>
    %372 = arith.addf %370, %371 : vector<8x256xf32>
    %cst_139 = arith.constant dense<0.000000e+00> : vector<8x256xf32>
    %373 = tpu.matmul %369, %219, %cst_139 {dimension_numbers = #tpu.dot_dimension_numbers<[1], [0], [0], [1], [0, 0, 1, 1], [], []>} : vector<8x64xf32>, vector<64x256xf32>, vector<8x256xf32> -> vector<8x256xf32>
    %374 = arith.addf %372, %373 : vector<8x256xf32>
    %375 = vector.extract_strided_slice %374 {offsets = [0, 0], sizes = [8, 192], strides = [1, 1]} : vector<8x256xf32> to vector<8x192xf32>
    %376 = arith.negf %375 : vector<8x192xf32>
    %377 = math.exp %376 : vector<8x192xf32>
    %cst_140 = arith.constant 1.000000e+00 : f32
    %378 = vector.broadcast %cst_140 : f32 to vector<8x192xf32>
    %379 = arith.addf %378, %377 : vector<8x192xf32>
    %380 = arith.divf %378, %379 : vector<8x192xf32>
    %381 = vector.extract_strided_slice %374 {offsets = [0, 192], sizes = [8, 64], strides = [1, 1]} : vector<8x256xf32> to vector<8x64xf32>
    %382 = math.tanh %381 : vector<8x64xf32>
    %383 = vector.extract_strided_slice %380 {offsets = [0, 0], sizes = [8, 64], strides = [1, 1]} : vector<8x192xf32> to vector<8x64xf32>
    %384 = vector.extract_strided_slice %380 {offsets = [0, 64], sizes = [8, 64], strides = [1, 1]} : vector<8x192xf32> to vector<8x64xf32>
    %385 = vector.extract_strided_slice %380 {offsets = [0, 128], sizes = [8, 64], strides = [1, 1]} : vector<8x192xf32> to vector<8x64xf32>
    %386 = arith.mulf %384, %367 : vector<8x64xf32>
    %387 = arith.mulf %383, %382 : vector<8x64xf32>
    %388 = arith.addf %386, %387 : vector<8x64xf32>
    %389 = math.tanh %388 : vector<8x64xf32>
    %390 = arith.mulf %385, %389 : vector<8x64xf32>
    %391 = vector.extract_strided_slice %390 {offsets = [0, 0], sizes = [8, 32], strides = [1, 1]} : vector<8x64xf32> to vector<8x32xf32>
    %c0_141 = arith.constant 0 : index
    %c0_142 = arith.constant 0 : index
    %392 = vector.load %arg4[%c0_141, %c0_142] : memref<65x4xf32, #tpu.memory_space<vmem>>, vector<32x4xf32>
    %cst_143 = arith.constant dense<0.000000e+00> : vector<8x4xf32>
    %393 = tpu.matmul %391, %392, %cst_143 {dimension_numbers = #tpu.dot_dimension_numbers<[1], [0], [0], [1], [0, 0, 1, 1], [], []>} : vector<8x32xf32>, vector<32x4xf32>, vector<8x4xf32> -> vector<8x4xf32>
    %c32_144 = arith.constant 32 : index
    %c0_145 = arith.constant 0 : index
    %394 = vector.load %arg4[%c32_144, %c0_145] : memref<65x4xf32, #tpu.memory_space<vmem>>, vector<32x4xf32>
    %cst_146 = arith.constant dense<0.000000e+00> : vector<8x4xf32>
    %395 = tpu.matmul %243, %394, %cst_146 {dimension_numbers = #tpu.dot_dimension_numbers<[1], [0], [0], [1], [0, 0, 1, 1], [], []>} : vector<8x32xf32>, vector<32x4xf32>, vector<8x4xf32> -> vector<8x4xf32>
    %396 = arith.addf %393, %395 : vector<8x4xf32>
    %c64_147 = arith.constant 64 : index
    %c0_148 = arith.constant 0 : index
    %397 = vector.load %arg4[%c64_147, %c0_148] : memref<65x4xf32, #tpu.memory_space<vmem>>, vector<1x4xf32>
    %398 = vector.broadcast %397 : vector<1x4xf32> to vector<8x4xf32>
    %399 = arith.addf %396, %398 : vector<8x4xf32>
    %cst_149 = arith.constant dense<0xFF800000> : vector<8xf32>
    %400 = vector.multi_reduction <maximumf>, %399, %cst_149 [1] : vector<8x4xf32> to vector<8xf32>
    %401 = vector.shape_cast %400 : vector<8xf32> to vector<8x1xf32>
    %402 = vector.broadcast %401 : vector<8x1xf32> to vector<8x4xf32>
    %403 = arith.subf %399, %402 : vector<8x4xf32>
    %404 = math.exp %403 : vector<8x4xf32>
    %cst_150 = arith.constant dense<0.000000e+00> : vector<8xf32>
    %405 = vector.multi_reduction <add>, %404, %cst_150 [1] : vector<8x4xf32> to vector<8xf32>
    %406 = vector.shape_cast %405 : vector<8xf32> to vector<8x1xf32>
    %407 = vector.broadcast %406 : vector<8x1xf32> to vector<8x4xf32>
    %408 = arith.divf %404, %407 : vector<8x4xf32>
    %c0_151 = arith.constant 0 : index
    %c0_152 = arith.constant 0 : index
    %409 = vector.load %arg5[%c0_151, %c0_152] : memref<8x4xf32, #tpu.memory_space<vmem>>, vector<8x4xf32>
    tpu.vector_store %arg5[%c0_151, %c0_152], %408 {strides = array<i32>} : memref<8x4xf32, #tpu.memory_space<vmem>>, vector<8x4xf32>,
    return
  }
}

</mosaic_0001>

<llo_original>
// kernel: forward.1
$region0: #{forward.1}
  #allocation0 [shape = 'u32[]', space=smem, size = 0x4, offset = 0x4, fixed_abs, tag = 'smem constant byte address 0x4 - core index']
  #allocation1 [shape = 'u32[144,128]{1,0:T(1,128)}', space=vmem, size = 0x12000, scoped, tag = 'internal scratch']
  #allocation2 [shape = 'f32[64,512]{1,0:T(8,128)}', space=vmem, size = 0x20000, scoped, tag = 'scratch operand']
  #allocation3 [shape = 'f32[64,64]{1,0:T(8,128)}', space=vmem, size = 0x8000, scoped, tag = 'scratch operand']
  #allocation4 [shape = 'f32[64,64]{1,0:T(8,128)}', space=vmem, size = 0x8000, scoped, tag = 'scratch operand']
  %s0 = inlined_call_operand.vmem [shape: s32[64,1], index: 0, kind: input, shape index: {}]
  %s1 = inlined_call_operand.vmem [shape: f32[128,512], index: 1, kind: input, shape index: {}]
  %s2 = inlined_call_operand.vmem [shape: f32[65,512], index: 2, kind: input, shape index: {}]
  %s3 = inlined_call_operand.vmem [shape: f32[128,256], index: 3, kind: input, shape index: {}]
  %s4 = inlined_call_operand.vmem [shape: f32[65,4], index: 4, kind: input, shape index: {}]
  %s5 = inlined_call_operand.vmem [shape: f32[8,4], index: 5, kind: output, shape index: {}]
  %s6 = sld [smem:[#allocation0]]
  $region30: #{forward.1} parent=0
    _
  %s8 = ssub.s32 1, %s6
  %s9 = scalar_select 0, %s8, %s6
  // Predicated region
  $region2: #{forward.1} parent=0 // pred_check
    _
  $region3: #{forward.1} parent=0 // pred_check_branch
    %11 = sbr.rel (0) target = $region5
  $region4: #{forward.1} parent=0 // pred_region
    _
  $region5: #{forward.1} parent=0 // pred_fallthru
    _
  // Predicated region
  $region6: #{forward.1} parent=0 // pred_check
    _
  $region7: #{forward.1} parent=0 // pred_check_branch
    %13 = sbr.rel (0) target = $region9
  $region8: #{forward.1} parent=0 // pred_region
    _
  $region9: #{forward.1} parent=0 // pred_fallthru
    _
  // Predicated region
  $region10: #{forward.1} parent=0 // pred_check
    _
  $region11: #{forward.1} parent=0 // pred_check_branch
    %15 = sbr.rel (0) target = $region13
  $region12: #{forward.1} parent=0 // pred_region
    _
  $region13: #{forward.1} parent=0 // pred_fallthru
    _
  // Predicated region
  $region14: #{forward.1} parent=0 // pred_check
    _
  $region15: #{forward.1} parent=0 // pred_check_branch
    %17 = sbr.rel (0) target = $region17
  $region16: #{forward.1} parent=0 // pred_region
    _
  $region17: #{forward.1} parent=0 // pred_fallthru
    _
  // Predicated region
  $region18: #{forward.1} parent=0 // pred_check
    _
  $region19: #{forward.1} parent=0 // pred_check_branch
    %19 = sbr.rel (0) target = $region21
  $region20: #{forward.1} parent=0 // pred_region
    _
  $region21: #{forward.1} parent=0 // pred_fallthru
    _
  %v20 = vld [vmem:[%s0] sm:$0xff]
  %v21 = vld [vmem:[%s0 + $0x8] sm:$0xff]
  %v22 = vld [vmem:[%s0 + $0x10] sm:$0xff]
  %v23 = vld [vmem:[%s0 + $0x18] sm:$0xff]
  %v24 = vld [vmem:[%s0 + $0x20] sm:$0xff]
  %v25 = vld [vmem:[%s0 + $0x28] sm:$0xff]
  %v26 = vld [vmem:[%s0 + $0x30] sm:$0xff]
  %v27 = vld [vmem:[%s0 + $0x38] sm:$0xff]
  %v28 = vlaneseq
  %v29 = vand.u32 %v28, 127
  %30 = vset.pattern.permute.xlu0 0
  %31 = vperm.xlu0 %30, %v20
  %v32 = vpop.permute.xlu0 %31
  %33 = vset.pattern.permute.xlu0 0
  %34 = vperm.xlu0 %33, %v21
  %v35 = vpop.permute.xlu0 %34
  %36 = vset.pattern.permute.xlu0 0
  %37 = vperm.xlu0 %36, %v22
  %v38 = vpop.permute.xlu0 %37
  %39 = vset.pattern.permute.xlu0 0
  %40 = vperm.xlu0 %39, %v23
  %v41 = vpop.permute.xlu0 %40
  %42 = vset.pattern.permute.xlu0 0
  %43 = vperm.xlu0 %42, %v24
  %v44 = vpop.permute.xlu0 %43
  %45 = vset.pattern.permute.xlu0 0
  %46 = vperm.xlu0 %45, %v25
  %v47 = vpop.permute.xlu0 %46
  %48 = vset.pattern.permute.xlu0 0
  %49 = vperm.xlu0 %48, %v26
  %v50 = vpop.permute.xlu0 %49
  %51 = vset.pattern.permute.xlu0 0
  %52 = vperm.xlu0 %51, %v27
  %v53 = vpop.permute.xlu0 %52
  %vm54 = vcmp.eq.s32.totalorder %v32, %v29
  %vm55 = vcmp.eq.s32.totalorder %v35, %v29
  %vm56 = vcmp.eq.s32.totalorder %v38, %v29
  %vm57 = vcmp.eq.s32.totalorder %v41, %v29
  %vm58 = vcmp.eq.s32.totalorder %v44, %v29
  %vm59 = vcmp.eq.s32.totalorder %v47, %v29
  %vm60 = vcmp.eq.s32.totalorder %v50, %v29
  %vm61 = vcmp.eq.s32.totalorder %v53, %v29
  %v62 = vsel %vm54, 1, 0
  %v63 = vsel %vm55, 1, 0
  %v64 = vsel %vm56, 1, 0
  %v65 = vsel %vm57, 1, 0
  %v66 = vsel %vm58, 1, 0
  %v67 = vsel %vm59, 1, 0
  %v68 = vsel %vm60, 1, 0
  %v69 = vsel %vm61, 1, 0
  %v70 = vcvt.s32.f32 %v62
  %v71 = vcvt.s32.f32 %v63
  %v72 = vcvt.s32.f32 %v64
  %v73 = vcvt.s32.f32 %v65
  %v74 = vcvt.s32.f32 %v66
  %v75 = vcvt.s32.f32 %v67
  %v76 = vcvt.s32.f32 %v68
  %v77 = vcvt.s32.f32 %v69
  %v78 = vld [vmem:[%s1] sm:$0xff]
  %v79 = vld [vmem:[%s1 + $0x8] sm:$0xff]
  %v80 = vld [vmem:[%s1 + $0x10] sm:$0xff]
  %v81 = vld [vmem:[%s1 + $0x18] sm:$0xff]
  %v82 = vld [vmem:[%s1 + $0x20] sm:$0xff]
  %v83 = vld [vmem:[%s1 + $0x28] sm:$0xff]
  %v84 = vld [vmem:[%s1 + $0x30] sm:$0xff]
  %v85 = vld [vmem:[%s1 + $0x38] sm:$0xff]
  %v86 = vld [vmem:[%s1 + $0x40] sm:$0xff]
  %v87 = vld [vmem:[%s1 + $0x48] sm:$0xff]
  %v88 = vld [vmem:[%s1 + $0x50] sm:$0xff]
  %v89 = vld [vmem:[%s1 + $0x58] sm:$0xff]
  %v90 = vld [vmem:[%s1 + $0x60] sm:$0xff]
  %v91 = vld [vmem:[%s1 + $0x68] sm:$0xff]
  %v92 = vld [vmem:[%s1 + $0x70] sm:$0xff]
  %v93 = vld [vmem:[%s1 + $0x78] sm:$0xff]
  %v94 = vld [vmem:[%s1 + $0x80] sm:$0xff]
  %v95 = vld [vmem:[%s1 + $0x88] sm:$0xff]
  %v96 = vld [vmem:[%s1 + $0x90] sm:$0xff]
  %v97 = vld [vmem:[%s1 + $0x98] sm:$0xff]
  %v98 = vld [vmem:[%s1 + $0xa0] sm:$0xff]
  %v99 = vld [vmem:[%s1 + $0xa8] sm:$0xff]
  %v100 = vld [vmem:[%s1 + $0xb0] sm:$0xff]
  %v101 = vld [vmem:[%s1 + $0xb8] sm:$0xff]
  %v102 = vld [vmem:[%s1 + $0xc0] sm:$0xff]
  %v103 = vld [vmem:[%s1 + $0xc8] sm:$0xff]
  %v104 = vld [vmem:[%s1 + $0xd0] sm:$0xff]
  %v105 = vld [vmem:[%s1 + $0xd8] sm:$0xff]
  %v106 = vld [vmem:[%s1 + $0xe0] sm:$0xff]
  %v107 = vld [vmem:[%s1 + $0xe8] sm:$0xff]
  %v108 = vld [vmem:[%s1 + $0xf0] sm:$0xff]
  %v109 = vld [vmem:[%s1 + $0xf8] sm:$0xff]
  %v110 = vld [vmem:[%s1 + $0x100] sm:$0xff]
  %v111 = vld [vmem:[%s1 + $0x108] sm:$0xff]
  %v112 = vld [vmem:[%s1 + $0x110] sm:$0xff]
  %v113 = vld [vmem:[%s1 + $0x118] sm:$0xff]
  %v114 = vld [vmem:[%s1 + $0x120] sm:$0xff]
  %v115 = vld [vmem:[%s1 + $0x128] sm:$0xff]
  %v116 = vld [vmem:[%s1 + $0x130] sm:$0xff]
  %v117 = vld [vmem:[%s1 + $0x138] sm:$0xff]
  %v118 = vld [vmem:[%s1 + $0x140] sm:$0xff]
  %v119 = vld [vmem:[%s1 + $0x148] sm:$0xff]
  %v120 = vld [vmem:[%s1 + $0x150] sm:$0xff]
  %v121 = vld [vmem:[%s1 + $0x158] sm:$0xff]
  %v122 = vld [vmem:[%s1 + $0x160] sm:$0xff]
  %v123 = vld [vmem:[%s1 + $0x168] sm:$0xff]
  %v124 = vld [vmem:[%s1 + $0x170] sm:$0xff]
  %v125 = vld [vmem:[%s1 + $0x178] sm:$0xff]
  %v126 = vld [vmem:[%s1 + $0x180] sm:$0xff]
  %v127 = vld [vmem:[%s1 + $0x188] sm:$0xff]
  %v128 = vld [vmem:[%s1 + $0x190] sm:$0xff]
  %v129 = vld [vmem:[%s1 + $0x198] sm:$0xff]
  %v130 = vld [vmem:[%s1 + $0x1a0] sm:$0xff]
  %v131 = vld [vmem:[%s1 + $0x1a8] sm:$0xff]
  %v132 = vld [vmem:[%s1 + $0x1b0] sm:$0xff]
  %v133 = vld [vmem:[%s1 + $0x1b8] sm:$0xff]
  %v134 = vld [vmem:[%s1 + $0x1c0] sm:$0xff]
  %v135 = vld [vmem:[%s1 + $0x1c8] sm:$0xff]
  %v136 = vld [vmem:[%s1 + $0x1d0] sm:$0xff]
  %v137 = vld [vmem:[%s1 + $0x1d8] sm:$0xff]
  %v138 = vld [vmem:[%s1 + $0x1e0] sm:$0xff]
  %v139 = vld [vmem:[%s1 + $0x1e8] sm:$0xff]
  %v140 = vld [vmem:[%s1 + $0x1f0] sm:$0xff]
  %v141 = vld [vmem:[%s1 + $0x1f8] sm:$0xff]
  %142 = vmatprep.subr.mxu0 %v79
  %143 = vmatpush1.msra.mxu0 %v78
  %144 = vmatprep.subr.mxu0 %v83
  %145 = vmatpush1.msra.mxu0 %v82
  %146 = vmatprep.subr.mxu0 %v87
  %147 = vmatpush1.msra.mxu0 %v86
  %148 = vmatprep.subr.mxu0 %v91
  %149 = vmatpush1.msra.mxu0 %v90
  %150 = vmatprep.subr.mxu0 %v95
  %151 = vmatpush1.msra.mxu0 %v94
  %152 = vmatprep.subr.mxu0 %v99
  %153 = vmatpush1.msra.mxu0 %v98
  %154 = vmatprep.subr.mxu0 %v103
  %155 = vmatpush1.msra.mxu0 %v102
  %156 = vmatprep.subr.mxu0 %v107
  %157 = vmatpush1.msra.mxu0 %v106
  %158 = vmatprep.subr.mxu0 %v111
  %159 = vmatpush1.msra.mxu0 %v110
  %160 = vmatprep.subr.mxu0 %v115
  %161 = vmatpush1.msra.mxu0 %v114
  %162 = vmatprep.subr.mxu0 %v119
  %163 = vmatpush1.msra.mxu0 %v118
  %164 = vmatprep.subr.mxu0 %v123
  %165 = vmatpush1.msra.mxu0 %v122
  %166 = vmatprep.subr.mxu0 %v127
  %167 = vmatpush1.msra.mxu0 %v126
  %168 = vmatprep.subr.mxu0 %v131
  %169 = vmatpush1.msra.mxu0 %v130
  %170 = vmatprep.subr.mxu0 %v135
  %171 = vmatpush1.msra.mxu0 %v134
  %172 = vmatprep.subr.mxu0 %v139
  %173 = vmatpush1.msra.mxu0 %v138
  %174 = vmatprep.subr.mxu0 0.0
  %175 = vmatpush1.msra.mxu0 0.0
  %176 = vmatprep.subr.mxu0 0.0
  %177 = vmatpush1.msra.mxu0 0.0
  %178 = vmatprep.subr.mxu0 0.0
  %179 = vmatpush1.msra.mxu0 0.0
  %180 = vmatprep.subr.mxu0 0.0
  %181 = vmatpush1.msra.mxu0 0.0
  %182 = vmatprep.subr.mxu0 0.0
  %183 = vmatpush1.msra.mxu0 0.0
  %184 = vmatprep.subr.mxu0 0.0
  %185 = vmatpush1.msra.mxu0 0.0
  %186 = vmatprep.subr.mxu0 0.0
  %187 = vmatpush1.msra.mxu0 0.0
  %188 = vmatprep.subr.mxu0 0.0
  %189 = vmatpush1.msra.mxu0 0.0
  %190 = vmatprep.subr.mxu0 0.0
  %191 = vmatpush1.msra.mxu0 0.0
  %192 = vmatprep.subr.mxu0 0.0
  %193 = vmatpush1.msra.mxu0 0.0
  %194 = vmatprep.subr.mxu0 0.0
  %195 = vmatpush1.msra.mxu0 0.0
  %196 = vmatprep.subr.mxu0 0.0
  %197 = vmatpush1.msra.mxu0 0.0
  %198 = vmatprep.subr.mxu0 0.0
  %199 = vmatpush1.msra.mxu0 0.0
  %200 = vmatprep.subr.mxu0 0.0
  %201 = vmatpush1.msra.mxu0 0.0
  %202 = vmatprep.subr.mxu0 0.0
  %203 = vmatpush1.msra.mxu0 0.0
  %204 = vmatprep.subr.mxu0 0.0
  %205 = vmatpush1.msra.mxu0 0.0
  %206 = vmatprep.mubr.f32.mxu0 0.0
  %207 = vmatmul.mubr.f32.gmra.mrb[0].mxu0 %v70
  %v208 = vpop.f32.mrb[0].mxu0
  %v209 = vadd.f32 0.0, %v208
  %v210 = vpop.f32.mrb[0].mxu0
  %v211 = vadd.f32 0.0, %v210
  %212 = vmatprep.mubr.f32.mxu0 0.0
  %213 = vmatmul.mubr.f32.gmra.mrb[0].mxu0 %v71
  %v214 = vpop.f32.mrb[0].mxu0
  %v215 = vadd.f32 0.0, %v214
  %v216 = vpop.f32.mrb[0].mxu0
  %v217 = vadd.f32 0.0, %v216
  %218 = vmatprep.mubr.f32.mxu0 0.0
  %219 = vmatmul.mubr.f32.gmra.mrb[0].mxu0 %v72
  %v220 = vpop.f32.mrb[0].mxu0
  %v221 = vadd.f32 0.0, %v220
  %v222 = vpop.f32.mrb[0].mxu0
  %v223 = vadd.f32 0.0, %v222
  %224 = vmatprep.mubr.f32.mxu0 0.0
  %225 = vmatmul.mubr.f32.gmra.mrb[0].mxu0 %v73
  %v226 = vpop.f32.mrb[0].mxu0
  %v227 = vadd.f32 0.0, %v226
  %v228 = vpop.f32.mrb[0].mxu0
  %v229 = vadd.f32 0.0, %v228
  %230 = vmatprep.mubr.f32.mxu0 0.0
  %231 = vmatmul.mubr.f32.gmra.mrb[0].mxu0 %v74
  %v232 = vpop.f32.mrb[0].mxu0
  %v233 = vadd.f32 0.0, %v232
  %v234 = vpop.f32.mrb[0].mxu0
  %v235 = vadd.f32 0.0, %v234
  %236 = vmatprep.mubr.f32.mxu0 0.0
  %237 = vmatmul.mubr.f32.gmra.mrb[0].mxu0 %v75
  %v238 = vpop.f32.mrb[0].mxu0
  %v239 = vadd.f32 0.0, %v238
  %v240 = vpop.f32.mrb[0].mxu0
  %v241 = vadd.f32 0.0, %v240
  %242 = vmatprep.mubr.f32.mxu0 0.0
  %243 = vmatmul.mubr.f32.gmra.mrb[0].mxu0 %v76
  %v244 = vpop.f32.mrb[0].mxu0
  %v245 = vadd.f32 0.0, %v244
  %v246 = vpop.f32.mrb[0].mxu0
  %v247 = vadd.f32 0.0, %v246
  %248 = vmatprep.mubr.f32.mxu0 0.0
  %249 = vmatmul.mubr.f32.gmra.mrb[0].mxu0 %v77
  %v250 = vpop.f32.mrb[0].mxu0
  %v251 = vadd.f32 0.0, %v250
  %v252 = vpop.f32.mrb[0].mxu0
  %v253 = vadd.f32 0.0, %v252
  %254 = vdwg.mxu0
  %255 = vmatprep.subr.mxu0 %v81
  %256 = vmatpush1.msra.mxu0 %v80
  %257 = vmatprep.subr.mxu0 %v85
  %258 = vmatpush1.msra.mxu0 %v84
  %259 = vmatprep.subr.mxu0 %v89
  %260 = vmatpush1.msra.mxu0 %v88
  %261 = vmatprep.subr.mxu0 %v93
  %262 = vmatpush1.msra.mxu0 %v92
  %263 = vmatprep.subr.mxu0 %v97
  %264 = vmatpush1.msra.mxu0 %v96
  %265 = vmatprep.subr.mxu0 %v101
  %266 = vmatpush1.msra.mxu0 %v100
  %267 = vmatprep.subr.mxu0 %v105
  %268 = vmatpush1.msra.mxu0 %v104
  %269 = vmatprep.subr.mxu0 %v109
  %270 = vmatpush1.msra.mxu0 %v108
  %271 = vmatprep.subr.mxu0 %v113
  %272 = vmatpush1.msra.mxu0 %v112
  %273 = vmatprep.subr.mxu0 %v117
  %274 = vmatpush1.msra.mxu0 %v116
  %275 = vmatprep.subr.mxu0 %v121
  %276 = vmatpush1.msra.mxu0 %v120
  %277 = vmatprep.subr.mxu0 %v125
  %278 = vmatpush1.msra.mxu0 %v124
  %279 = vmatprep.subr.mxu0 %v129
  %280 = vmatpush1.msra.mxu0 %v128
  %281 = vmatprep.subr.mxu0 %v133
  %282 = vmatpush1.msra.mxu0 %v132
  %283 = vmatprep.subr.mxu0 %v137
  %284 = vmatpush1.msra.mxu0 %v136
  %285 = vmatprep.subr.mxu0 %v141
  %286 = vmatpush1.msra.mxu0 %v140
  %287 = vmatprep.subr.mxu0 0.0
  %288 = vmatpush1.msra.mxu0 0.0
  %289 = vmatprep.subr.mxu0 0.0
  %290 = vmatpush1.msra.mxu0 0.0
  %291 = vmatprep.subr.mxu0 0.0
  %292 = vmatpush1.msra.mxu0 0.0
  %293 = vmatprep.subr.mxu0 0.0
  %294 = vmatpush1.msra.mxu0 0.0
  %295 = vmatprep.subr.mxu0 0.0
  %296 = vmatpush1.msra.mxu0 0.0
  %297 = vmatprep.subr.mxu0 0.0
  %298 = vmatpush1.msra.mxu0 0.0
  %299 = vmatprep.subr.mxu0 0.0
  %300 = vmatpush1.msra.mxu0 0.0
  %301 = vmatprep.subr.mxu0 0.0
  %302 = vmatpush1.msra.mxu0 0.0
  %303 = vmatprep.subr.mxu0 0.0
  %304 = vmatpush1.msra.mxu0 0.0
  %305 = vmatprep.subr.mxu0 0.0
  %306 = vmatpush1.msra.mxu0 0.0
  %307 = vmatprep.subr.mxu0 0.0
  %308 = vmatpush1.msra.mxu0 0.0
  %309 = vmatprep.subr.mxu0 0.0
  %310 = vmatpush1.msra.mxu0 0.0
  %311 = vmatprep.subr.mxu0 0.0
  %312 = vmatpush1.msra.mxu0 0.0
  %313 = vmatprep.subr.mxu0 0.0
  %314 = vmatpush1.msra.mxu0 0.0
  %315 = vmatprep.subr.mxu0 0.0
  %316 = vmatpush1.msra.mxu0 0.0
  %317 = vmatprep.subr.mxu0 0.0
  %318 = vmatpush1.msra.mxu0 0.0
  %319 = vmatprep.mubr.f32.mxu0 0.0
  %320 = vmatmul.mubr.f32.gmra.mrb[0].mxu0 %v70
  %v321 = vpop.f32.mrb[0].mxu0
  %v322 = vadd.f32 0.0, %v321
  %v323 = vpop.f32.mrb[0].mxu0
  %v324 = vadd.f32 0.0, %v323
  %325 = vmatprep.mubr.f32.mxu0 0.0
  %326 = vmatmul.mubr.f32.gmra.mrb[0].mxu0 %v71
  %v327 = vpop.f32.mrb[0].mxu0
  %v328 = vadd.f32 0.0, %v327
  %v329 = vpop.f32.mrb[0].mxu0
  %v330 = vadd.f32 0.0, %v329
  %331 = vmatprep.mubr.f32.mxu0 0.0
  %332 = vmatmul.mubr.f32.gmra.mrb[0].mxu0 %v72
  %v333 = vpop.f32.mrb[0].mxu0
  %v334 = vadd.f32 0.0, %v333
  %v335 = vpop.f32.mrb[0].mxu0
  %v336 = vadd.f32 0.0, %v335
  %337 = vmatprep.mubr.f32.mxu0 0.0
  %338 = vmatmul.mubr.f32.gmra.mrb[0].mxu0 %v73
  %v339 = vpop.f32.mrb[0].mxu0
  %v340 = vadd.f32 0.0, %v339
  %v341 = vpop.f32.mrb[0].mxu0
  %v342 = vadd.f32 0.0, %v341
  %343 = vmatprep.mubr.f32.mxu0 0.0
  %344 = vmatmul.mubr.f32.gmra.mrb[0].mxu0 %v74
  %v345 = vpop.f32.mrb[0].mxu0
  %v346 = vadd.f32 0.0, %v345
  %v347 = vpop.f32.mrb[0].mxu0
  %v348 = vadd.f32 0.0, %v347
  %349 = vmatprep.mubr.f32.mxu0 0.0
  %350 = vmatmul.mubr.f32.gmra.mrb[0].mxu0 %v75
  %v351 = vpop.f32.mrb[0].mxu0
  %v352 = vadd.f32 0.0, %v351
  %v353 = vpop.f32.mrb[0].mxu0
  %v354 = vadd.f32 0.0, %v353
  %355 = vmatprep.mubr.f32.mxu0 0.0
  %356 = vmatmul.mubr.f32.gmra.mrb[0].mxu0 %v76
  %v357 = vpop.f32.mrb[0].mxu0
  %v358 = vadd.f32 0.0, %v357
  %v359 = vpop.f32.mrb[0].mxu0
  %v360 = vadd.f32 0.0, %v359
  %361 = vmatprep.mubr.f32.mxu0 0.0
  %362 = vmatmul.mubr.f32.gmra.mrb[0].mxu0 %v77
  %v363 = vpop.f32.mrb[0].mxu0
  %v364 = vadd.f32 0.0, %v363
  %v365 = vpop.f32.mrb[0].mxu0
  %v366 = vadd.f32 0.0, %v365
  %367 = vdwg.mxu0
  %368 = vst [vmem:[#allocation2] sm:$0xff] %v209
  %369 = vst [vmem:[#allocation2 + $0x8] sm:$0xff] %v211
  %370 = vst [vmem:[#allocation2 + $0x10] sm:$0xff] %v322
  %371 = vst [vmem:[#allocation2 + $0x18] sm:$0xff] %v324
  %372 = vst [vmem:[#allocation2 + $0x20] sm:$0xff] %v215
  %373 = vst [vmem:[#allocation2 + $0x28] sm:$0xff] %v217
  %374 = vst [vmem:[#allocation2 + $0x30] sm:$0xff] %v328
  %375 = vst [vmem:[#allocation2 + $0x38] sm:$0xff] %v330
  %376 = vst [vmem:[#allocation2 + $0x40] sm:$0xff] %v221
  %377 = vst [vmem:[#allocation2 + $0x48] sm:$0xff] %v223
  %378 = vst [vmem:[#allocation2 + $0x50] sm:$0xff] %v334
  %379 = vst [vmem:[#allocation2 + $0x58] sm:$0xff] %v336
  %380 = vst [vmem:[#allocation2 + $0x60] sm:$0xff] %v227
  %381 = vst [vmem:[#allocation2 + $0x68] sm:$0xff] %v229
  %382 = vst [vmem:[#allocation2 + $0x70] sm:$0xff] %v340
  %383 = vst [vmem:[#allocation2 + $0x78] sm:$0xff] %v342
  %384 = vst [vmem:[#allocation2 + $0x80] sm:$0xff] %v233
  %385 = vst [vmem:[#allocation2 + $0x88] sm:$0xff] %v235
  %386 = vst [vmem:[#allocation2 + $0x90] sm:$0xff] %v346
  %387 = vst [vmem:[#allocation2 + $0x98] sm:$0xff] %v348
  %388 = vst [vmem:[#allocation2 + $0xa0] sm:$0xff] %v239
  %389 = vst [vmem:[#allocation2 + $0xa8] sm:$0xff] %v241
  %390 = vst [vmem:[#allocation2 + $0xb0] sm:$0xff] %v352
  %391 = vst [vmem:[#allocation2 + $0xb8] sm:$0xff] %v354
  %392 = vst [vmem:[#allocation2 + $0xc0] sm:$0xff] %v245
  %393 = vst [vmem:[#allocation2 + $0xc8] sm:$0xff] %v247
  %394 = vst [vmem:[#allocation2 + $0xd0] sm:$0xff] %v358
  %395 = vst [vmem:[#allocation2 + $0xd8] sm:$0xff] %v360
  %396 = vst [vmem:[#allocation2 + $0xe0] sm:$0xff] %v251
  %397 = vst [vmem:[#allocation2 + $0xe8] sm:$0xff] %v253
  %398 = vst [vmem:[#allocation2 + $0xf0] sm:$0xff] %v364
  %399 = vst [vmem:[#allocation2 + $0xf8] sm:$0xff] %v366
  %v400 = vld [vmem:[%s3] sm:$0xff]
  %v401 = vld [vmem:[%s3 + $0x8] sm:$0xff]
  %v402 = vld [vmem:[%s3 + $0x10] sm:$0xff]
  %v403 = vld [vmem:[%s3 + $0x18] sm:$0xff]
  %v404 = vld [vmem:[%s3 + $0x20] sm:$0xff]
  %v405 = vld [vmem:[%s3 + $0x28] sm:$0xff]
  %v406 = vld [vmem:[%s3 + $0x30] sm:$0xff]
  %v407 = vld [vmem:[%s3 + $0x38] sm:$0xff]
  %v408 = vld [vmem:[%s3 + $0x40] sm:$0xff]
  %v409 = vld [vmem:[%s3 + $0x48] sm:$0xff]
  %v410 = vld [vmem:[%s3 + $0x50] sm:$0xff]
  %v411 = vld [vmem:[%s3 + $0x58] sm:$0xff]
  %v412 = vld [vmem:[%s3 + $0x60] sm:$0xff]
  %v413 = vld [vmem:[%s3 + $0x68] sm:$0xff]
  %v414 = vld [vmem:[%s3 + $0x70] sm:$0xff]
  %v415 = vld [vmem:[%s3 + $0x78] sm:$0xff]
  %v416 = vld [vmem:[#allocation2] sm:$0xff]
  %v417 = vld [vmem:[#allocation2 + $0x8] sm:$0xff]
  %v418 = vld [vmem:[#allocation2 + $0xf0] sm:$0xff]
  %v419 = vld [vmem:[#allocation2 + $0xf8] sm:$0xff]
  %v420 = vadd.f32 %v416, %v418
  %v421 = vadd.f32 %v417, %v419
  %vm422 = vcmask 523264
  %v424 = vsel %vm422, 0.0, 0
  %426 = vmatprep.subr.mxu0 %v401
  %427 = vmatpush1.msra.mxu0 %v400
  %428 = vmatprep.subr.mxu0 %v403
  %429 = vmatpush1.msra.mxu0 %v402
  %430 = vmatprep.subr.mxu0 %v405
  %431 = vmatpush1.msra.mxu0 %v404
  %432 = vmatprep.subr.mxu0 %v407
  %433 = vmatpush1.msra.mxu0 %v406
  %434 = vmatprep.subr.mxu0 %v409
  %435 = vmatpush1.msra.mxu0 %v408
  %436 = vmatprep.subr.mxu0 %v411
  %437 = vmatpush1.msra.mxu0 %v410
  %438 = vmatprep.subr.mxu0 %v413
  %439 = vmatpush1.msra.mxu0 %v412
  %440 = vmatprep.subr.mxu0 %v415
  %441 = vmatpush1.msra.mxu0 %v414
  %442 = vmatprep.subr.mxu0 0.0
  %443 = vmatpush1.msra.mxu0 0.0
  %444 = vmatprep.subr.mxu0 0.0
  %445 = vmatpush1.msra.mxu0 0.0
  %446 = vmatprep.subr.mxu0 0.0
  %447 = vmatpush1.msra.mxu0 0.0
  %448 = vmatprep.subr.mxu0 0.0
  %449 = vmatpush1.msra.mxu0 0.0
  %450 = vmatprep.subr.mxu0 0.0
  %451 = vmatpush1.msra.mxu0 0.0
  %452 = vmatprep.subr.mxu0 0.0
  %453 = vmatpush1.msra.mxu0 0.0
  %454 = vmatprep.subr.mxu0 0.0
  %455 = vmatpush1.msra.mxu0 0.0
  %456 = vmatprep.subr.mxu0 0.0
  %457 = vmatpush1.msra.mxu0 0.0
  %458 = vmatprep.subr.mxu0 0.0
  %459 = vmatpush1.msra.mxu0 0.0
  %460 = vmatprep.subr.mxu0 0.0
  %461 = vmatpush1.msra.mxu0 0.0
  %462 = vmatprep.subr.mxu0 0.0
  %463 = vmatpush1.msra.mxu0 0.0
  %464 = vmatprep.subr.mxu0 0.0
  %465 = vmatpush1.msra.mxu0 0.0
  %466 = vmatprep.subr.mxu0 0.0
  %467 = vmatpush1.msra.mxu0 0.0
  %468 = vmatprep.subr.mxu0 0.0
  %469 = vmatpush1.msra.mxu0 0.0
  %470 = vmatprep.subr.mxu0 0.0
  %471 = vmatpush1.msra.mxu0 0.0
  %472 = vmatprep.subr.mxu0 0.0
  %473 = vmatpush1.msra.mxu0 0.0
  %474 = vmatprep.subr.mxu0 0.0
  %475 = vmatpush1.msra.mxu0 0.0
  %476 = vmatprep.subr.mxu0 0.0
  %477 = vmatpush1.msra.mxu0 0.0
  %478 = vmatprep.subr.mxu0 0.0
  %479 = vmatpush1.msra.mxu0 0.0
  %480 = vmatprep.subr.mxu0 0.0
  %481 = vmatpush1.msra.mxu0 0.0
  %482 = vmatprep.subr.mxu0 0.0
  %483 = vmatpush1.msra.mxu0 0.0
  %484 = vmatprep.subr.mxu0 0.0
  %485 = vmatpush1.msra.mxu0 0.0
  %486 = vmatprep.subr.mxu0 0.0
  %487 = vmatpush1.msra.mxu0 0.0
  %488 = vmatprep.subr.mxu0 0.0
  %489 = vmatpush1.msra.mxu0 0.0
  %490 = vmatprep.mubr.f32.mxu0 0.0
  %491 = vmatmul.mubr.f32.gmra.mrb[0].mxu0 %v424
  %v492 = vpop.f32.mrb[0].mxu0
  %v493 = vadd.f32 0.0, %v492
  %v494 = vpop.f32.mrb[0].mxu0
  %v495 = vadd.f32 0.0, %v494
  %496 = vdwg.mxu0
  %v497 = vadd.f32 %v420, %v493
  %v498 = vadd.f32 %v421, %v495
  %v499 = vxor.u32 %v497, 2147483648
  %v500 = vxor.u32 %v498, 2147483648
  %v501 = vmul.f32 %v499, 1.442695
  %v502 = vpow.pop %v501
  %v503 = vmul.f32 %v500, 1.442695
  %v504 = vpow.pop %v503
  %v505 = vadd.f32 %v502, 1.0
  %v506 = vadd.f32 %v504, 1.0
  %v507 = vrcp.pop %v505
  %v508 = vmul.f32 1.0, %v507
  %v509 = vrcp.pop %v506
  %v510 = vmul.f32 1.0, %v509
  %v511 = vtanh.pop %v498
  %v512 = vmul.f32 %v508, 0.0
  %514 = vrot.lane.b32.xlu0 %v511, 64
  %v515 = vpop.permute.xlu0 %514
  %v517 = vmul.f32 %v508, %v515
  %519 = vrot.lane.b32.xlu0 %v517, 64
  %v520 = vpop.permute.xlu0 %519
  %v522 = vadd.f32 %v512, %v520
  %v523 = vtanh.pop %v522
  %525 = vrot.lane.b32.xlu0 %v523, 64
  %v526 = vpop.permute.xlu0 %525
  %v528 = vmul.f32 %v510, %v526
  %vm529 = vcmask 261120
  %530 = vst.msk [vmem:[#allocation3] sm:$0xff] %vm529, %v528
  %vm531 = vcmask 523520
  %532 = vst.msk [vmem:[#allocation3 + $0x38] sm:$0xff] %vm531, %v528
  %v533 = vld [vmem:[#allocation2 + $0x20] sm:$0xff]
  %v534 = vld [vmem:[#allocation2 + $0x28] sm:$0xff]
  %v535 = vld [vmem:[#allocation2 + $0xd0] sm:$0xff]
  %v536 = vld [vmem:[#allocation2 + $0xd8] sm:$0xff]
  %v537 = vadd.f32 %v533, %v535
  %v538 = vadd.f32 %v534, %v536
  %v540 = vsel %vm422, %v528, 0
  %542 = vmatprep.subr.mxu0 %v401
  %543 = vmatpush1.msra.mxu0 %v400
  %544 = vmatprep.subr.mxu0 %v403
  %545 = vmatpush1.msra.mxu0 %v402
  %546 = vmatprep.subr.mxu0 %v405
  %547 = vmatpush1.msra.mxu0 %v404
  %548 = vmatprep.subr.mxu0 %v407
  %549 = vmatpush1.msra.mxu0 %v406
  %550 = vmatprep.subr.mxu0 %v409
  %551 = vmatpush1.msra.mxu0 %v408
  %552 = vmatprep.subr.mxu0 %v411
  %553 = vmatpush1.msra.mxu0 %v410
  %554 = vmatprep.subr.mxu0 %v413
  %555 = vmatpush1.msra.mxu0 %v412
  %556 = vmatprep.subr.mxu0 %v415
  %557 = vmatpush1.msra.mxu0 %v414
  %558 = vmatprep.subr.mxu0 0.0
  %559 = vmatpush1.msra.mxu0 0.0
  %560 = vmatprep.subr.mxu0 0.0
  %561 = vmatpush1.msra.mxu0 0.0
  %562 = vmatprep.subr.mxu0 0.0
  %563 = vmatpush1.msra.mxu0 0.0
  %564 = vmatprep.subr.mxu0 0.0
  %565 = vmatpush1.msra.mxu0 0.0
  %566 = vmatprep.subr.mxu0 0.0
  %567 = vmatpush1.msra.mxu0 0.0
  %568 = vmatprep.subr.mxu0 0.0
  %569 = vmatpush1.msra.mxu0 0.0
  %570 = vmatprep.subr.mxu0 0.0
  %571 = vmatpush1.msra.mxu0 0.0
  %572 = vmatprep.subr.mxu0 0.0
  %573 = vmatpush1.msra.mxu0 0.0
  %574 = vmatprep.subr.mxu0 0.0
  %575 = vmatpush1.msra.mxu0 0.0
  %576 = vmatprep.subr.mxu0 0.0
  %577 = vmatpush1.msra.mxu0 0.0
  %578 = vmatprep.subr.mxu0 0.0
  %579 = vmatpush1.msra.mxu0 0.0
  %580 = vmatprep.subr.mxu0 0.0
  %581 = vmatpush1.msra.mxu0 0.0
  %582 = vmatprep.subr.mxu0 0.0
  %583 = vmatpush1.msra.mxu0 0.0
  %584 = vmatprep.subr.mxu0 0.0
  %585 = vmatpush1.msra.mxu0 0.0
  %586 = vmatprep.subr.mxu0 0.0
  %587 = vmatpush1.msra.mxu0 0.0
  %588 = vmatprep.subr.mxu0 0.0
  %589 = vmatpush1.msra.mxu0 0.0
  %590 = vmatprep.subr.mxu0 0.0
  %591 = vmatpush1.msra.mxu0 0.0
  %592 = vmatprep.subr.mxu0 0.0
  %593 = vmatpush1.msra.mxu0 0.0
  %594 = vmatprep.subr.mxu0 0.0
  %595 = vmatpush1.msra.mxu0 0.0
  %596 = vmatprep.subr.mxu0 0.0
  %597 = vmatpush1.msra.mxu0 0.0
  %598 = vmatprep.subr.mxu0 0.0
  %599 = vmatpush1.msra.mxu0 0.0
  %600 = vmatprep.subr.mxu0 0.0
  %601 = vmatpush1.msra.mxu0 0.0
  %602 = vmatprep.subr.mxu0 0.0
  %603 = vmatpush1.msra.mxu0 0.0
  %604 = vmatprep.subr.mxu0 0.0
  %605 = vmatpush1.msra.mxu0 0.0
  %606 = vmatprep.mubr.f32.mxu0 0.0
  %607 = vmatmul.mubr.f32.gmra.mrb[0].mxu0 %v540
  %v608 = vpop.f32.mrb[0].mxu0
  %v609 = vadd.f32 0.0, %v608
  %v610 = vpop.f32.mrb[0].mxu0
  %v611 = vadd.f32 0.0, %v610
  %612 = vdwg.mxu0
  %v613 = vadd.f32 %v537, %v609
  %v614 = vadd.f32 %v538, %v611
  %v615 = vxor.u32 %v613, 2147483648
  %v616 = vxor.u32 %v614, 2147483648
  %v617 = vmul.f32 %v615, 1.442695
  %v618 = vpow.pop %v617
  %v619 = vmul.f32 %v616, 1.442695
  %v620 = vpow.pop %v619
  %v621 = vadd.f32 %v618, 1.0
  %v622 = vadd.f32 %v620, 1.0
  %v623 = vrcp.pop %v621
  %v624 = vmul.f32 1.0, %v623
  %v625 = vrcp.pop %v622
  %v626 = vmul.f32 1.0, %v625
  %v627 = vtanh.pop %v614
  %v628 = vmul.f32 %v624, %v522
  %630 = vrot.lane.b32.xlu0 %v627, 64
  %v631 = vpop.permute.xlu0 %630
  %v633 = vmul.f32 %v624, %v631
  %635 = vrot.lane.b32.xlu0 %v633, 64
  %v636 = vpop.permute.xlu0 %635
  %v638 = vadd.f32 %v628, %v636
  %v639 = vtanh.pop %v638
  %641 = vrot.lane.b32.xlu0 %v639, 64
  %v642 = vpop.permute.xlu0 %641
  %v644 = vmul.f32 %v626, %v642
  %645 = vst.msk [vmem:[#allocation3 + $0x8] sm:$0xff] %vm529, %v644
  %646 = vst.msk [vmem:[#allocation3 + $0x30] sm:$0xff] %vm531, %v644
  %v647 = vld [vmem:[#allocation2 + $0x40] sm:$0xff]
  %v648 = vld [vmem:[#allocation2 + $0x48] sm:$0xff]
  %v649 = vld [vmem:[#allocation2 + $0xb0] sm:$0xff]
  %v650 = vld [vmem:[#allocation2 + $0xb8] sm:$0xff]
  %v651 = vadd.f32 %v647, %v649
  %v652 = vadd.f32 %v648, %v650
  %v654 = vsel %vm422, %v644, 0
  %656 = vmatprep.subr.mxu0 %v401
  %657 = vmatpush1.msra.mxu0 %v400
  %658 = vmatprep.subr.mxu0 %v403
  %659 = vmatpush1.msra.mxu0 %v402
  %660 = vmatprep.subr.mxu0 %v405
  %661 = vmatpush1.msra.mxu0 %v404
  %662 = vmatprep.subr.mxu0 %v407
  %663 = vmatpush1.msra.mxu0 %v406
  %664 = vmatprep.subr.mxu0 %v409
  %665 = vmatpush1.msra.mxu0 %v408
  %666 = vmatprep.subr.mxu0 %v411
  %667 = vmatpush1.msra.mxu0 %v410
  %668 = vmatprep.subr.mxu0 %v413
  %669 = vmatpush1.msra.mxu0 %v412
  %670 = vmatprep.subr.mxu0 %v415
  %671 = vmatpush1.msra.mxu0 %v414
  %672 = vmatprep.subr.mxu0 0.0
  %673 = vmatpush1.msra.mxu0 0.0
  %674 = vmatprep.subr.mxu0 0.0
  %675 = vmatpush1.msra.mxu0 0.0
  %676 = vmatprep.subr.mxu0 0.0
  %677 = vmatpush1.msra.mxu0 0.0
  %678 = vmatprep.subr.mxu0 0.0
  %679 = vmatpush1.msra.mxu0 0.0
  %680 = vmatprep.subr.mxu0 0.0
  %681 = vmatpush1.msra.mxu0 0.0
  %682 = vmatprep.subr.mxu0 0.0
  %683 = vmatpush1.msra.mxu0 0.0
  %684 = vmatprep.subr.mxu0 0.0
  %685 = vmatpush1.msra.mxu0 0.0
  %686 = vmatprep.subr.mxu0 0.0
  %687 = vmatpush1.msra.mxu0 0.0
  %688 = vmatprep.subr.mxu0 0.0
  %689 = vmatpush1.msra.mxu0 0.0
  %690 = vmatprep.subr.mxu0 0.0
  %691 = vmatpush1.msra.mxu0 0.0
  %692 = vmatprep.subr.mxu0 0.0
  %693 = vmatpush1.msra.mxu0 0.0
  %694 = vmatprep.subr.mxu0 0.0
  %695 = vmatpush1.msra.mxu0 0.0
  %696 = vmatprep.subr.mxu0 0.0
  %697 = vmatpush1.msra.mxu0 0.0
  %698 = vmatprep.subr.mxu0 0.0
  %699 = vmatpush1.msra.mxu0 0.0
  %700 = vmatprep.subr.mxu0 0.0
  %701 = vmatpush1.msra.mxu0 0.0
  %702 = vmatprep.subr.mxu0 0.0
  %703 = vmatpush1.msra.mxu0 0.0
  %704 = vmatprep.subr.mxu0 0.0
  %705 = vmatpush1.msra.mxu0 0.0
  %706 = vmatprep.subr.mxu0 0.0
  %707 = vmatpush1.msra.mxu0 0.0
  %708 = vmatprep.subr.mxu0 0.0
  %709 = vmatpush1.msra.mxu0 0.0
  %710 = vmatprep.subr.mxu0 0.0
  %711 = vmatpush1.msra.mxu0 0.0
  %712 = vmatprep.subr.mxu0 0.0
  %713 = vmatpush1.msra.mxu0 0.0
  %714 = vmatprep.subr.mxu0 0.0
  %715 = vmatpush1.msra.mxu0 0.0
  %716 = vmatprep.subr.mxu0 0.0
  %717 = vmatpush1.msra.mxu0 0.0
  %718 = vmatprep.subr.mxu0 0.0
  %719 = vmatpush1.msra.mxu0 0.0
  %720 = vmatprep.mubr.f32.mxu0 0.0
  %721 = vmatmul.mubr.f32.gmra.mrb[0].mxu0 %v654
  %v722 = vpop.f32.mrb[0].mxu0
  %v723 = vadd.f32 0.0, %v722
  %v724 = vpop.f32.mrb[0].mxu0
  %v725 = vadd.f32 0.0, %v724
  %726 = vdwg.mxu0
  %v727 = vadd.f32 %v651, %v723
  %v728 = vadd.f32 %v652, %v725
  %v729 = vxor.u32 %v727, 2147483648
  %v730 = vxor.u32 %v728, 2147483648
  %v731 = vmul.f32 %v729, 1.442695
  %v732 = vpow.pop %v731
  %v733 = vmul.f32 %v730, 1.442695
  %v734 = vpow.pop %v733
  %v735 = vadd.f32 %v732, 1.0
  %v736 = vadd.f32 %v734, 1.0
  %v737 = vrcp.pop %v735
  %v738 = vmul.f32 1.0, %v737
  %v739 = vrcp.pop %v736
  %v740 = vmul.f32 1.0, %v739
  %v741 = vtanh.pop %v728
  %v742 = vmul.f32 %v738, %v638
  %744 = vrot.lane.b32.xlu0 %v741, 64
  %v745 = vpop.permute.xlu0 %744
  %v747 = vmul.f32 %v738, %v745
  %749 = vrot.lane.b32.xlu0 %v747, 64
  %v750 = vpop.permute.xlu0 %749
  %v752 = vadd.f32 %v742, %v750
  %v753 = vtanh.pop %v752
  %755 = vrot.lane.b32.xlu0 %v753, 64
  %v756 = vpop.permute.xlu0 %755
  %v758 = vmul.f32 %v740, %v756
  %759 = vst.msk [vmem:[#allocation3 + $0x10] sm:$0xff] %vm529, %v758
  %760 = vst.msk [vmem:[#allocation3 + $0x28] sm:$0xff] %vm531, %v758
  %v761 = vld [vmem:[#allocation2 + $0x60] sm:$0xff]
  %v762 = vld [vmem:[#allocation2 + $0x68] sm:$0xff]
  %v763 = vld [vmem:[#allocation2 + $0x90] sm:$0xff]
  %v764 = vld [vmem:[#allocation2 + $0x98] sm:$0xff]
  %v765 = vadd.f32 %v761, %v763
  %v766 = vadd.f32 %v762, %v764
  %v768 = vsel %vm422, %v758, 0
  %770 = vmatprep.subr.mxu0 %v401
  %771 = vmatpush1.msra.mxu0 %v400
  %772 = vmatprep.subr.mxu0 %v403
  %773 = vmatpush1.msra.mxu0 %v402
  %774 = vmatprep.subr.mxu0 %v405
  %775 = vmatpush1.msra.mxu0 %v404
  %776 = vmatprep.subr.mxu0 %v407
  %777 = vmatpush1.msra.mxu0 %v406
  %778 = vmatprep.subr.mxu0 %v409
  %779 = vmatpush1.msra.mxu0 %v408
  %780 = vmatprep.subr.mxu0 %v411
  %781 = vmatpush1.msra.mxu0 %v410
  %782 = vmatprep.subr.mxu0 %v413
  %783 = vmatpush1.msra.mxu0 %v412
  %784 = vmatprep.subr.mxu0 %v415
  %785 = vmatpush1.msra.mxu0 %v414
  %786 = vmatprep.subr.mxu0 0.0
  %787 = vmatpush1.msra.mxu0 0.0
  %788 = vmatprep.subr.mxu0 0.0
  %789 = vmatpush1.msra.mxu0 0.0
  %790 = vmatprep.subr.mxu0 0.0
  %791 = vmatpush1.msra.mxu0 0.0
  %792 = vmatprep.subr.mxu0 0.0
  %793 = vmatpush1.msra.mxu0 0.0
  %794 = vmatprep.subr.mxu0 0.0
  %795 = vmatpush1.msra.mxu0 0.0
  %796 = vmatprep.subr.mxu0 0.0
  %797 = vmatpush1.msra.mxu0 0.0
  %798 = vmatprep.subr.mxu0 0.0
  %799 = vmatpush1.msra.mxu0 0.0
  %800 = vmatprep.subr.mxu0 0.0
  %801 = vmatpush1.msra.mxu0 0.0
  %802 = vmatprep.subr.mxu0 0.0
  %803 = vmatpush1.msra.mxu0 0.0
  %804 = vmatprep.subr.mxu0 0.0
  %805 = vmatpush1.msra.mxu0 0.0
  %806 = vmatprep.subr.mxu0 0.0
  %807 = vmatpush1.msra.mxu0 0.0
  %808 = vmatprep.subr.mxu0 0.0
  %809 = vmatpush1.msra.mxu0 0.0
  %810 = vmatprep.subr.mxu0 0.0
  %811 = vmatpush1.msra.mxu0 0.0
  %812 = vmatprep.subr.mxu0 0.0
  %813 = vmatpush1.msra.mxu0 0.0
  %814 = vmatprep.subr.mxu0 0.0
  %815 = vmatpush1.msra.mxu0 0.0
  %816 = vmatprep.subr.mxu0 0.0
  %817 = vmatpush1.msra.mxu0 0.0
  %818 = vmatprep.subr.mxu0 0.0
  %819 = vmatpush1.msra.mxu0 0.0
  %820 = vmatprep.subr.mxu0 0.0
  %821 = vmatpush1.msra.mxu0 0.0
  %822 = vmatprep.subr.mxu0 0.0
  %823 = vmatpush1.msra.mxu0 0.0
  %824 = vmatprep.subr.mxu0 0.0
  %825 = vmatpush1.msra.mxu0 0.0
  %826 = vmatprep.subr.mxu0 0.0
  %827 = vmatpush1.msra.mxu0 0.0
  %828 = vmatprep.subr.mxu0 0.0
  %829 = vmatpush1.msra.mxu0 0.0
  %830 = vmatprep.subr.mxu0 0.0
  %831 = vmatpush1.msra.mxu0 0.0
  %832 = vmatprep.subr.mxu0 0.0
  %833 = vmatpush1.msra.mxu0 0.0
  %834 = vmatprep.mubr.f32.mxu0 0.0
  %835 = vmatmul.mubr.f32.gmra.mrb[0].mxu0 %v768
  %v836 = vpop.f32.mrb[0].mxu0
  %v837 = vadd.f32 0.0, %v836
  %v838 = vpop.f32.mrb[0].mxu0
  %v839 = vadd.f32 0.0, %v838
  %840 = vdwg.mxu0
  %v841 = vadd.f32 %v765, %v837
  %v842 = vadd.f32 %v766, %v839
  %v843 = vxor.u32 %v841, 2147483648
  %v844 = vxor.u32 %v842, 2147483648
  %v845 = vmul.f32 %v843, 1.442695
  %v846 = vpow.pop %v845
  %v847 = vmul.f32 %v844, 1.442695
  %v848 = vpow.pop %v847
  %v849 = vadd.f32 %v846, 1.0
  %v850 = vadd.f32 %v848, 1.0
  %v851 = vrcp.pop %v849
  %v852 = vmul.f32 1.0, %v851
  %v853 = vrcp.pop %v850
  %v854 = vmul.f32 1.0, %v853
  %v855 = vtanh.pop %v842
  %v856 = vmul.f32 %v852, %v752
  %858 = vrot.lane.b32.xlu0 %v855, 64
  %v859 = vpop.permute.xlu0 %858
  %v861 = vmul.f32 %v852, %v859
  %863 = vrot.lane.b32.xlu0 %v861, 64
  %v864 = vpop.permute.xlu0 %863
  %v866 = vadd.f32 %v856, %v864
  %v867 = vtanh.pop %v866
  %869 = vrot.lane.b32.xlu0 %v867, 64
  %v870 = vpop.permute.xlu0 %869
  %v872 = vmul.f32 %v854, %v870
  %873 = vst.msk [vmem:[#allocation3 + $0x18] sm:$0xff] %vm529, %v872
  %874 = vst.msk [vmem:[#allocation3 + $0x20] sm:$0xff] %vm531, %v872
  %v875 = vld [vmem:[#allocation2 + $0x80] sm:$0xff]
  %v876 = vld [vmem:[#allocation2 + $0x88] sm:$0xff]
  %v877 = vld [vmem:[#allocation2 + $0x70] sm:$0xff]
  %v878 = vld [vmem:[#allocation2 + $0x78] sm:$0xff]
  %v879 = vadd.f32 %v875, %v877
  %v880 = vadd.f32 %v876, %v878
  %v882 = vsel %vm422, %v872, 0
  %884 = vmatprep.subr.mxu0 %v401
  %885 = vmatpush1.msra.mxu0 %v400
  %886 = vmatprep.subr.mxu0 %v403
  %887 = vmatpush1.msra.mxu0 %v402
  %888 = vmatprep.subr.mxu0 %v405
  %889 = vmatpush1.msra.mxu0 %v404
  %890 = vmatprep.subr.mxu0 %v407
  %891 = vmatpush1.msra.mxu0 %v406
  %892 = vmatprep.subr.mxu0 %v409
  %893 = vmatpush1.msra.mxu0 %v408
  %894 = vmatprep.subr.mxu0 %v411
  %895 = vmatpush1.msra.mxu0 %v410
  %896 = vmatprep.subr.mxu0 %v413
  %897 = vmatpush1.msra.mxu0 %v412
  %898 = vmatprep.subr.mxu0 %v415
  %899 = vmatpush1.msra.mxu0 %v414
  %900 = vmatprep.subr.mxu0 0.0
  %901 = vmatpush1.msra.mxu0 0.0
  %902 = vmatprep.subr.mxu0 0.0
  %903 = vmatpush1.msra.mxu0 0.0
  %904 = vmatprep.subr.mxu0 0.0
  %905 = vmatpush1.msra.mxu0 0.0
  %906 = vmatprep.subr.mxu0 0.0
  %907 = vmatpush1.msra.mxu0 0.0
  %908 = vmatprep.subr.mxu0 0.0
  %909 = vmatpush1.msra.mxu0 0.0
  %910 = vmatprep.subr.mxu0 0.0
  %911 = vmatpush1.msra.mxu0 0.0
  %912 = vmatprep.subr.mxu0 0.0
  %913 = vmatpush1.msra.mxu0 0.0
  %914 = vmatprep.subr.mxu0 0.0
  %915 = vmatpush1.msra.mxu0 0.0
  %916 = vmatprep.subr.mxu0 0.0
  %917 = vmatpush1.msra.mxu0 0.0
  %918 = vmatprep.subr.mxu0 0.0
  %919 = vmatpush1.msra.mxu0 0.0
  %920 = vmatprep.subr.mxu0 0.0
  %921 = vmatpush1.msra.mxu0 0.0
  %922 = vmatprep.subr.mxu0 0.0
  %923 = vmatpush1.msra.mxu0 0.0
  %924 = vmatprep.subr.mxu0 0.0
  %925 = vmatpush1.msra.mxu0 0.0
  %926 = vmatprep.subr.mxu0 0.0
  %927 = vmatpush1.msra.mxu0 0.0
  %928 = vmatprep.subr.mxu0 0.0
  %929 = vmatpush1.msra.mxu0 0.0
  %930 = vmatprep.subr.mxu0 0.0
  %931 = vmatpush1.msra.mxu0 0.0
  %932 = vmatprep.subr.mxu0 0.0
  %933 = vmatpush1.msra.mxu0 0.0
  %934 = vmatprep.subr.mxu0 0.0
  %935 = vmatpush1.msra.mxu0 0.0
  %936 = vmatprep.subr.mxu0 0.0
  %937 = vmatpush1.msra.mxu0 0.0
  %938 = vmatprep.subr.mxu0 0.0
  %939 = vmatpush1.msra.mxu0 0.0
  %940 = vmatprep.subr.mxu0 0.0
  %941 = vmatpush1.msra.mxu0 0.0
  %942 = vmatprep.subr.mxu0 0.0
  %943 = vmatpush1.msra.mxu0 0.0
  %944 = vmatprep.subr.mxu0 0.0
  %945 = vmatpush1.msra.mxu0 0.0
  %946 = vmatprep.subr.mxu0 0.0
  %947 = vmatpush1.msra.mxu0 0.0
  %948 = vmatprep.mubr.f32.mxu0 0.0
  %949 = vmatmul.mubr.f32.gmra.mrb[0].mxu0 %v882
  %v950 = vpop.f32.mrb[0].mxu0
  %v951 = vadd.f32 0.0, %v950
  %v952 = vpop.f32.mrb[0].mxu0
  %v953 = vadd.f32 0.0, %v952
  %954 = vdwg.mxu0
  %v955 = vadd.f32 %v879, %v951
  %v956 = vadd.f32 %v880, %v953
  %v957 = vxor.u32 %v955, 2147483648
  %v958 = vxor.u32 %v956, 2147483648
  %v959 = vmul.f32 %v957, 1.442695
  %v960 = vpow.pop %v959
  %v961 = vmul.f32 %v958, 1.442695
  %v962 = vpow.pop %v961
  %v963 = vadd.f32 %v960, 1.0
  %v964 = vadd.f32 %v962, 1.0
  %v965 = vrcp.pop %v963
  %v966 = vmul.f32 1.0, %v965
  %v967 = vrcp.pop %v964
  %v968 = vmul.f32 1.0, %v967
  %v969 = vtanh.pop %v956
  %v970 = vmul.f32 %v966, %v866
  %972 = vrot.lane.b32.xlu0 %v969, 64
  %v973 = vpop.permute.xlu0 %972
  %v975 = vmul.f32 %v966, %v973
  %977 = vrot.lane.b32.xlu0 %v975, 64
  %v978 = vpop.permute.xlu0 %977
  %v980 = vadd.f32 %v970, %v978
  %v981 = vtanh.pop %v980
  %983 = vrot.lane.b32.xlu0 %v981, 64
  %v984 = vpop.permute.xlu0 %983
  %v986 = vmul.f32 %v968, %v984
  %987 = vst.msk [vmem:[#allocation3 + $0x20] sm:$0xff] %vm529, %v986
  %988 = vst.msk [vmem:[#allocation3 + $0x18] sm:$0xff] %vm531, %v986
  %v989 = vld [vmem:[#allocation2 + $0xa0] sm:$0xff]
  %v990 = vld [vmem:[#allocation2 + $0xa8] sm:$0xff]
  %v991 = vld [vmem:[#allocation2 + $0x50] sm:$0xff]
  %v992 = vld [vmem:[#allocation2 + $0x58] sm:$0xff]
  %v993 = vadd.f32 %v989, %v991
  %v994 = vadd.f32 %v990, %v992
  %v996 = vsel %vm422, %v986, 0
  %998 = vmatprep.subr.mxu0 %v401
  %999 = vmatpush1.msra.mxu0 %v400
  %1000 = vmatprep.subr.mxu0 %v403
  %1001 = vmatpush1.msra.mxu0 %v402
  %1002 = vmatprep.subr.mxu0 %v405
  %1003 = vmatpush1.msra.mxu0 %v404
  %1004 = vmatprep.subr.mxu0 %v407
  %1005 = vmatpush1.msra.mxu0 %v406
  %1006 = vmatprep.subr.mxu0 %v409
  %1007 = vmatpush1.msra.mxu0 %v408
  %1008 = vmatprep.subr.mxu0 %v411
  %1009 = vmatpush1.msra.mxu0 %v410
  %1010 = vmatprep.subr.mxu0 %v413
  %1011 = vmatpush1.msra.mxu0 %v412
  %1012 = vmatprep.subr.mxu0 %v415
  %1013 = vmatpush1.msra.mxu0 %v414
  %1014 = vmatprep.subr.mxu0 0.0
  %1015 = vmatpush1.msra.mxu0 0.0
  %1016 = vmatprep.subr.mxu0 0.0
  %1017 = vmatpush1.msra.mxu0 0.0
  %1018 = vmatprep.subr.mxu0 0.0
  %1019 = vmatpush1.msra.mxu0 0.0
  %1020 = vmatprep.subr.mxu0 0.0
  %1021 = vmatpush1.msra.mxu0 0.0
  %1022 = vmatprep.subr.mxu0 0.0
  %1023 = vmatpush1.msra.mxu0 0.0
  %1024 = vmatprep.subr.mxu0 0.0
  %1025 = vmatpush1.msra.mxu0 0.0
  %1026 = vmatprep.subr.mxu0 0.0
  %1027 = vmatpush1.msra.mxu0 0.0
  %1028 = vmatprep.subr.mxu0 0.0
  %1029 = vmatpush1.msra.mxu0 0.0
  %1030 = vmatprep.subr.mxu0 0.0
  %1031 = vmatpush1.msra.mxu0 0.0
  %1032 = vmatprep.subr.mxu0 0.0
  %1033 = vmatpush1.msra.mxu0 0.0
  %1034 = vmatprep.subr.mxu0 0.0
  %1035 = vmatpush1.msra.mxu0 0.0
  %1036 = vmatprep.subr.mxu0 0.0
  %1037 = vmatpush1.msra.mxu0 0.0
  %1038 = vmatprep.subr.mxu0 0.0
  %1039 = vmatpush1.msra.mxu0 0.0
  %1040 = vmatprep.subr.mxu0 0.0
  %1041 = vmatpush1.msra.mxu0 0.0
  %1042 = vmatprep.subr.mxu0 0.0
  %1043 = vmatpush1.msra.mxu0 0.0
  %1044 = vmatprep.subr.mxu0 0.0
  %1045 = vmatpush1.msra.mxu0 0.0
  %1046 = vmatprep.subr.mxu0 0.0
  %1047 = vmatpush1.msra.mxu0 0.0
  %1048 = vmatprep.subr.mxu0 0.0
  %1049 = vmatpush1.msra.mxu0 0.0
  %1050 = vmatprep.subr.mxu0 0.0
  %1051 = vmatpush1.msra.mxu0 0.0
  %1052 = vmatprep.subr.mxu0 0.0
  %1053 = vmatpush1.msra.mxu0 0.0
  %1054 = vmatprep.subr.mxu0 0.0
  %1055 = vmatpush1.msra.mxu0 0.0
  %1056 = vmatprep.subr.mxu0 0.0
  %1057 = vmatpush1.msra.mxu0 0.0
  %1058 = vmatprep.subr.mxu0 0.0
  %1059 = vmatpush1.msra.mxu0 0.0
  %1060 = vmatprep.subr.mxu0 0.0
  %1061 = vmatpush1.msra.mxu0 0.0
  %1062 = vmatprep.mubr.f32.mxu0 0.0
  %1063 = vmatmul.mubr.f32.gmra.mrb[0].mxu0 %v996
  %v1064 = vpop.f32.mrb[0].mxu0
  %v1065 = vadd.f32 0.0, %v1064
  %v1066 = vpop.f32.mrb[0].mxu0
  %v1067 = vadd.f32 0.0, %v1066
  %1068 = vdwg.mxu0
  %v1069 = vadd.f32 %v993, %v1065
  %v1070 = vadd.f32 %v994, %v1067
  %v1071 = vxor.u32 %v1069, 2147483648
  %v1072 = vxor.u32 %v1070, 2147483648
  %v1073 = vmul.f32 %v1071, 1.442695
  %v1074 = vpow.pop %v1073
  %v1075 = vmul.f32 %v1072, 1.442695
  %v1076 = vpow.pop %v1075
  %v1077 = vadd.f32 %v1074, 1.0
  %v1078 = vadd.f32 %v1076, 1.0
  %v1079 = vrcp.pop %v1077
  %v1080 = vmul.f32 1.0, %v1079
  %v1081 = vrcp.pop %v1078
  %v1082 = vmul.f32 1.0, %v1081
  %v1083 = vtanh.pop %v1070
  %v1084 = vmul.f32 %v1080, %v980
  %1086 = vrot.lane.b32.xlu0 %v1083, 64
  %v1087 = vpop.permute.xlu0 %1086
  %v1089 = vmul.f32 %v1080, %v1087
  %1091 = vrot.lane.b32.xlu0 %v1089, 64
  %v1092 = vpop.permute.xlu0 %1091
  %v1094 = vadd.f32 %v1084, %v1092
  %v1095 = vtanh.pop %v1094
  %1097 = vrot.lane.b32.xlu0 %v1095, 64
  %v1098 = vpop.permute.xlu0 %1097
  %v1100 = vmul.f32 %v1082, %v1098
  %1101 = vst.msk [vmem:[#allocation3 + $0x28] sm:$0xff] %vm529, %v1100
  %1102 = vst.msk [vmem:[#allocation3 + $0x10] sm:$0xff] %vm531, %v1100
  %v1103 = vld [vmem:[#allocation2 + $0xc0] sm:$0xff]
  %v1104 = vld [vmem:[#allocation2 + $0xc8] sm:$0xff]
  %v1105 = vld [vmem:[#allocation2 + $0x30] sm:$0xff]
  %v1106 = vld [vmem:[#allocation2 + $0x38] sm:$0xff]
  %v1107 = vadd.f32 %v1103, %v1105
  %v1108 = vadd.f32 %v1104, %v1106
  %v1110 = vsel %vm422, %v1100, 0
  %1112 = vmatprep.subr.mxu0 %v401
  %1113 = vmatpush1.msra.mxu0 %v400
  %1114 = vmatprep.subr.mxu0 %v403
  %1115 = vmatpush1.msra.mxu0 %v402
  %1116 = vmatprep.subr.mxu0 %v405
  %1117 = vmatpush1.msra.mxu0 %v404
  %1118 = vmatprep.subr.mxu0 %v407
  %1119 = vmatpush1.msra.mxu0 %v406
  %1120 = vmatprep.subr.mxu0 %v409
  %1121 = vmatpush1.msra.mxu0 %v408
  %1122 = vmatprep.subr.mxu0 %v411
  %1123 = vmatpush1.msra.mxu0 %v410
  %1124 = vmatprep.subr.mxu0 %v413
  %1125 = vmatpush1.msra.mxu0 %v412
  %1126 = vmatprep.subr.mxu0 %v415
  %1127 = vmatpush1.msra.mxu0 %v414
  %1128 = vmatprep.subr.mxu0 0.0
  %1129 = vmatpush1.msra.mxu0 0.0
  %1130 = vmatprep.subr.mxu0 0.0
  %1131 = vmatpush1.msra.mxu0 0.0
  %1132 = vmatprep.subr.mxu0 0.0
  %1133 = vmatpush1.msra.mxu0 0.0
  %1134 = vmatprep.subr.mxu0 0.0
  %1135 = vmatpush1.msra.mxu0 0.0
  %1136 = vmatprep.subr.mxu0 0.0
  %1137 = vmatpush1.msra.mxu0 0.0
  %1138 = vmatprep.subr.mxu0 0.0
  %1139 = vmatpush1.msra.mxu0 0.0
  %1140 = vmatprep.subr.mxu0 0.0
  %1141 = vmatpush1.msra.mxu0 0.0
  %1142 = vmatprep.subr.mxu0 0.0
  %1143 = vmatpush1.msra.mxu0 0.0
  %1144 = vmatprep.subr.mxu0 0.0
  %1145 = vmatpush1.msra.mxu0 0.0
  %1146 = vmatprep.subr.mxu0 0.0
  %1147 = vmatpush1.msra.mxu0 0.0
  %1148 = vmatprep.subr.mxu0 0.0
  %1149 = vmatpush1.msra.mxu0 0.0
  %1150 = vmatprep.subr.mxu0 0.0
  %1151 = vmatpush1.msra.mxu0 0.0
  %1152 = vmatprep.subr.mxu0 0.0
  %1153 = vmatpush1.msra.mxu0 0.0
  %1154 = vmatprep.subr.mxu0 0.0
  %1155 = vmatpush1.msra.mxu0 0.0
  %1156 = vmatprep.subr.mxu0 0.0
  %1157 = vmatpush1.msra.mxu0 0.0
  %1158 = vmatprep.subr.mxu0 0.0
  %1159 = vmatpush1.msra.mxu0 0.0
  %1160 = vmatprep.subr.mxu0 0.0
  %1161 = vmatpush1.msra.mxu0 0.0
  %1162 = vmatprep.subr.mxu0 0.0
  %1163 = vmatpush1.msra.mxu0 0.0
  %1164 = vmatprep.subr.mxu0 0.0
  %1165 = vmatpush1.msra.mxu0 0.0
  %1166 = vmatprep.subr.mxu0 0.0
  %1167 = vmatpush1.msra.mxu0 0.0
  %1168 = vmatprep.subr.mxu0 0.0
  %1169 = vmatpush1.msra.mxu0 0.0
  %1170 = vmatprep.subr.mxu0 0.0
  %1171 = vmatpush1.msra.mxu0 0.0
  %1172 = vmatprep.subr.mxu0 0.0
  %1173 = vmatpush1.msra.mxu0 0.0
  %1174 = vmatprep.subr.mxu0 0.0
  %1175 = vmatpush1.msra.mxu0 0.0
  %1176 = vmatprep.mubr.f32.mxu0 0.0
  %1177 = vmatmul.mubr.f32.gmra.mrb[0].mxu0 %v1110
  %v1178 = vpop.f32.mrb[0].mxu0
  %v1179 = vadd.f32 0.0, %v1178
  %v1180 = vpop.f32.mrb[0].mxu0
  %v1181 = vadd.f32 0.0, %v1180
  %1182 = vdwg.mxu0
  %v1183 = vadd.f32 %v1107, %v1179
  %v1184 = vadd.f32 %v1108, %v1181
  %v1185 = vxor.u32 %v1183, 2147483648
  %v1186 = vxor.u32 %v1184, 2147483648
  %v1187 = vmul.f32 %v1185, 1.442695
  %v1188 = vpow.pop %v1187
  %v1189 = vmul.f32 %v1186, 1.442695
  %v1190 = vpow.pop %v1189
  %v1191 = vadd.f32 %v1188, 1.0
  %v1192 = vadd.f32 %v1190, 1.0
  %v1193 = vrcp.pop %v1191
  %v1194 = vmul.f32 1.0, %v1193
  %v1195 = vrcp.pop %v1192
  %v1196 = vmul.f32 1.0, %v1195
  %v1197 = vtanh.pop %v1184
  %v1198 = vmul.f32 %v1194, %v1094
  %1200 = vrot.lane.b32.xlu0 %v1197, 64
  %v1201 = vpop.permute.xlu0 %1200
  %v1203 = vmul.f32 %v1194, %v1201
  %1205 = vrot.lane.b32.xlu0 %v1203, 64
  %v1206 = vpop.permute.xlu0 %1205
  %v1208 = vadd.f32 %v1198, %v1206
  %v1209 = vtanh.pop %v1208
  %1211 = vrot.lane.b32.xlu0 %v1209, 64
  %v1212 = vpop.permute.xlu0 %1211
  %v1214 = vmul.f32 %v1196, %v1212
  %1215 = vst.msk [vmem:[#allocation3 + $0x30] sm:$0xff] %vm529, %v1214
  %1216 = vst.msk [vmem:[#allocation3 + $0x8] sm:$0xff] %vm531, %v1214
  %v1217 = vld [vmem:[#allocation2 + $0xe0] sm:$0xff]
  %v1218 = vld [vmem:[#allocation2 + $0xe8] sm:$0xff]
  %v1219 = vld [vmem:[#allocation2 + $0x10] sm:$0xff]
  %v1220 = vld [vmem:[#allocation2 + $0x18] sm:$0xff]
  %v1221 = vadd.f32 %v1217, %v1219
  %v1222 = vadd.f32 %v1218, %v1220
  %v1224 = vsel %vm422, %v1214, 0
  %1226 = vmatprep.subr.mxu0 %v401
  %1227 = vmatpush1.msra.mxu0 %v400
  %1228 = vmatprep.subr.mxu0 %v403
  %1229 = vmatpush1.msra.mxu0 %v402
  %1230 = vmatprep.subr.mxu0 %v405
  %1231 = vmatpush1.msra.mxu0 %v404
  %1232 = vmatprep.subr.mxu0 %v407
  %1233 = vmatpush1.msra.mxu0 %v406
  %1234 = vmatprep.subr.mxu0 %v409
  %1235 = vmatpush1.msra.mxu0 %v408
  %1236 = vmatprep.subr.mxu0 %v411
  %1237 = vmatpush1.msra.mxu0 %v410
  %1238 = vmatprep.subr.mxu0 %v413
  %1239 = vmatpush1.msra.mxu0 %v412
  %1240 = vmatprep.subr.mxu0 %v415
  %1241 = vmatpush1.msra.mxu0 %v414
  %1242 = vmatprep.subr.mxu0 0.0
  %1243 = vmatpush1.msra.mxu0 0.0
  %1244 = vmatprep.subr.mxu0 0.0
  %1245 = vmatpush1.msra.mxu0 0.0
  %1246 = vmatprep.subr.mxu0 0.0
  %1247 = vmatpush1.msra.mxu0 0.0
  %1248 = vmatprep.subr.mxu0 0.0
  %1249 = vmatpush1.msra.mxu0 0.0
  %1250 = vmatprep.subr.mxu0 0.0
  %1251 = vmatpush1.msra.mxu0 0.0
  %1252 = vmatprep.subr.mxu0 0.0
  %1253 = vmatpush1.msra.mxu0 0.0
  %1254 = vmatprep.subr.mxu0 0.0
  %1255 = vmatpush1.msra.mxu0 0.0
  %1256 = vmatprep.subr.mxu0 0.0
  %1257 = vmatpush1.msra.mxu0 0.0
  %1258 = vmatprep.subr.mxu0 0.0
  %1259 = vmatpush1.msra.mxu0 0.0
  %1260 = vmatprep.subr.mxu0 0.0
  %1261 = vmatpush1.msra.mxu0 0.0
  %1262 = vmatprep.subr.mxu0 0.0
  %1263 = vmatpush1.msra.mxu0 0.0
  %1264 = vmatprep.subr.mxu0 0.0
  %1265 = vmatpush1.msra.mxu0 0.0
  %1266 = vmatprep.subr.mxu0 0.0
  %1267 = vmatpush1.msra.mxu0 0.0
  %1268 = vmatprep.subr.mxu0 0.0
  %1269 = vmatpush1.msra.mxu0 0.0
  %1270 = vmatprep.subr.mxu0 0.0
  %1271 = vmatpush1.msra.mxu0 0.0
  %1272 = vmatprep.subr.mxu0 0.0
  %1273 = vmatpush1.msra.mxu0 0.0
  %1274 = vmatprep.subr.mxu0 0.0
  %1275 = vmatpush1.msra.mxu0 0.0
  %1276 = vmatprep.subr.mxu0 0.0
  %1277 = vmatpush1.msra.mxu0 0.0
  %1278 = vmatprep.subr.mxu0 0.0
  %1279 = vmatpush1.msra.mxu0 0.0
  %1280 = vmatprep.subr.mxu0 0.0
  %1281 = vmatpush1.msra.mxu0 0.0
  %1282 = vmatprep.subr.mxu0 0.0
  %1283 = vmatpush1.msra.mxu0 0.0
  %1284 = vmatprep.subr.mxu0 0.0
  %1285 = vmatpush1.msra.mxu0 0.0
  %1286 = vmatprep.subr.mxu0 0.0
  %1287 = vmatpush1.msra.mxu0 0.0
  %1288 = vmatprep.subr.mxu0 0.0
  %1289 = vmatpush1.msra.mxu0 0.0
  %1290 = vmatprep.mubr.f32.mxu0 0.0
  %1291 = vmatmul.mubr.f32.gmra.mrb[0].mxu0 %v1224
  %v1292 = vpop.f32.mrb[0].mxu0
  %v1293 = vadd.f32 0.0, %v1292
  %v1294 = vpop.f32.mrb[0].mxu0
  %v1295 = vadd.f32 0.0, %v1294
  %1296 = vdwg.mxu0
  %v1297 = vadd.f32 %v1221, %v1293
  %v1298 = vadd.f32 %v1222, %v1295
  %v1299 = vxor.u32 %v1297, 2147483648
  %v1300 = vxor.u32 %v1298, 2147483648
  %v1301 = vmul.f32 %v1299, 1.442695
  %v1302 = vpow.pop %v1301
  %v1303 = vmul.f32 %v1300, 1.442695
  %v1304 = vpow.pop %v1303
  %v1305 = vadd.f32 %v1302, 1.0
  %v1306 = vadd.f32 %v1304, 1.0
  %v1307 = vrcp.pop %v1305
  %v1308 = vmul.f32 1.0, %v1307
  %v1309 = vrcp.pop %v1306
  %v1310 = vmul.f32 1.0, %v1309
  %v1311 = vtanh.pop %v1298
  %v1312 = vmul.f32 %v1308, %v1208
  %1314 = vrot.lane.b32.xlu0 %v1311, 64
  %v1315 = vpop.permute.xlu0 %1314
  %v1317 = vmul.f32 %v1308, %v1315
  %1319 = vrot.lane.b32.xlu0 %v1317, 64
  %v1320 = vpop.permute.xlu0 %1319
  %v1322 = vadd.f32 %v1312, %v1320
  %v1323 = vtanh.pop %v1322
  %1325 = vrot.lane.b32.xlu0 %v1323, 64
  %v1326 = vpop.permute.xlu0 %1325
  %v1328 = vmul.f32 %v1310, %v1326
  %1329 = vst.msk [vmem:[#allocation3 + $0x38] sm:$0xff] %vm529, %v1328
  %1330 = vst.msk [vmem:[#allocation3] sm:$0xff] %vm531, %v1328
  %v1331 = vld [vmem:[%s2] sm:$0xff]
  %v1332 = vld [vmem:[%s2 + $0x8] sm:$0xff]
  %v1333 = vld [vmem:[%s2 + $0x10] sm:$0xff]
  %v1334 = vld [vmem:[%s2 + $0x18] sm:$0xff]
  %v1335 = vld [vmem:[%s2 + $0x20] sm:$0xff]
  %v1336 = vld [vmem:[%s2 + $0x28] sm:$0xff]
  %v1337 = vld [vmem:[%s2 + $0x30] sm:$0xff]
  %v1338 = vld [vmem:[%s2 + $0x38] sm:$0xff]
  %v1339 = vld [vmem:[%s2 + $0x40] sm:$0xff]
  %v1340 = vld [vmem:[%s2 + $0x48] sm:$0xff]
  %v1341 = vld [vmem:[%s2 + $0x50] sm:$0xff]
  %v1342 = vld [vmem:[%s2 + $0x58] sm:$0xff]
  %v1343 = vld [vmem:[%s2 + $0x60] sm:$0xff]
  %v1344 = vld [vmem:[%s2 + $0x68] sm:$0xff]
  %v1345 = vld [vmem:[%s2 + $0x70] sm:$0xff]
  %v1346 = vld [vmem:[%s2 + $0x78] sm:$0xff]
  %v1347 = vld [vmem:[%s2 + $0x80] sm:$0xff]
  %v1348 = vld [vmem:[%s2 + $0x88] sm:$0xff]
  %v1349 = vld [vmem:[%s2 + $0x90] sm:$0xff]
  %v1350 = vld [vmem:[%s2 + $0x98] sm:$0xff]
  %v1351 = vld [vmem:[%s2 + $0xa0] sm:$0xff]
  %v1352 = vld [vmem:[%s2 + $0xa8] sm:$0xff]
  %v1353 = vld [vmem:[%s2 + $0xb0] sm:$0xff]
  %v1354 = vld [vmem:[%s2 + $0xb8] sm:$0xff]
  %v1355 = vld [vmem:[%s2 + $0xc0] sm:$0xff]
  %v1356 = vld [vmem:[%s2 + $0xc8] sm:$0xff]
  %v1357 = vld [vmem:[%s2 + $0xd0] sm:$0xff]
  %v1358 = vld [vmem:[%s2 + $0xd8] sm:$0xff]
  %v1359 = vld [vmem:[%s2 + $0xe0] sm:$0xff]
  %v1360 = vld [vmem:[%s2 + $0xe8] sm:$0xff]
  %v1361 = vld [vmem:[%s2 + $0xf0] sm:$0xff]
  %v1362 = vld [vmem:[%s2 + $0xf8] sm:$0xff]
  %s1363 = scalar_lea.vmem %s2, 256
  %v1364 = vld [vmem:[%s1363] ss:$8 sm:$0xf]
  %v1365 = vld [vmem:[#allocation3] sm:$0xff]
  %v1366 = vld [vmem:[#allocation3 + $0x8] sm:$0xff]
  %v1367 = vld [vmem:[#allocation3 + $0x10] sm:$0xff]
  %v1368 = vld [vmem:[#allocation3 + $0x18] sm:$0xff]
  %v1369 = vld [vmem:[#allocation3 + $0x20] sm:$0xff]
  %v1370 = vld [vmem:[#allocation3 + $0x28] sm:$0xff]
  %v1371 = vld [vmem:[#allocation3 + $0x30] sm:$0xff]
  %v1372 = vld [vmem:[#allocation3 + $0x38] sm:$0xff]
  %v1374 = vlaneseq
  %v1375 = vshrl.u32 %v1374, 7
  %v1376 = vsub.s32 0, %v1375
  %v1377 = vrot.slane %v1364, %v1376
  %v1378 = vlaneseq
  %v1379 = vshrl.u32 %v1378, 7
  %v1380 = vsub.s32 1, %v1379
  %v1381 = vrot.slane %v1364, %v1380
  %v1382 = vlaneseq
  %v1383 = vshrl.u32 %v1382, 7
  %v1384 = vsub.s32 2, %v1383
  %v1385 = vrot.slane %v1364, %v1384
  %v1386 = vlaneseq
  %v1387 = vshrl.u32 %v1386, 7
  %v1388 = vsub.s32 3, %v1387
  %v1389 = vrot.slane %v1364, %v1388
  %v1395 = vsel %vm422, %v1365, 0
  %v1398 = vsel %vm422, %v1366, 0
  %v1401 = vsel %vm422, %v1367, 0
  %v1404 = vsel %vm422, %v1368, 0
  %v1407 = vsel %vm422, %v1369, 0
  %v1410 = vsel %vm422, %v1370, 0
  %v1413 = vsel %vm422, %v1371, 0
  %v1416 = vsel %vm422, %v1372, 0
  %1418 = vmatprep.subr.mxu0 %v1332
  %1419 = vmatpush1.msra.mxu0 %v1331
  %1420 = vmatprep.subr.mxu0 %v1336
  %1421 = vmatpush1.msra.mxu0 %v1335
  %1422 = vmatprep.subr.mxu0 %v1340
  %1423 = vmatpush1.msra.mxu0 %v1339
  %1424 = vmatprep.subr.mxu0 %v1344
  %1425 = vmatpush1.msra.mxu0 %v1343
  %1426 = vmatprep.subr.mxu0 %v1348
  %1427 = vmatpush1.msra.mxu0 %v1347
  %1428 = vmatprep.subr.mxu0 %v1352
  %1429 = vmatpush1.msra.mxu0 %v1351
  %1430 = vmatprep.subr.mxu0 %v1356
  %1431 = vmatpush1.msra.mxu0 %v1355
  %1432 = vmatprep.subr.mxu0 %v1360
  %1433 = vmatpush1.msra.mxu0 %v1359
  %1434 = vmatprep.subr.mxu0 0.0
  %1435 = vmatpush1.msra.mxu0 0.0
  %1436 = vmatprep.subr.mxu0 0.0
  %1437 = vmatpush1.msra.mxu0 0.0
  %1438 = vmatprep.subr.mxu0 0.0
  %1439 = vmatpush1.msra.mxu0 0.0
  %1440 = vmatprep.subr.mxu0 0.0
  %1441 = vmatpush1.msra.mxu0 0.0
  %1442 = vmatprep.subr.mxu0 0.0
  %1443 = vmatpush1.msra.mxu0 0.0
  %1444 = vmatprep.subr.mxu0 0.0
  %1445 = vmatpush1.msra.mxu0 0.0
  %1446 = vmatprep.subr.mxu0 0.0
  %1447 = vmatpush1.msra.mxu0 0.0
  %1448 = vmatprep.subr.mxu0 0.0
  %1449 = vmatpush1.msra.mxu0 0.0
  %1450 = vmatprep.subr.mxu0 0.0
  %1451 = vmatpush1.msra.mxu0 0.0
  %1452 = vmatprep.subr.mxu0 0.0
  %1453 = vmatpush1.msra.mxu0 0.0
  %1454 = vmatprep.subr.mxu0 0.0
  %1455 = vmatpush1.msra.mxu0 0.0
  %1456 = vmatprep.subr.mxu0 0.0
  %1457 = vmatpush1.msra.mxu0 0.0
  %1458 = vmatprep.subr.mxu0 0.0
  %1459 = vmatpush1.msra.mxu0 0.0
  %1460 = vmatprep.subr.mxu0 0.0
  %1461 = vmatpush1.msra.mxu0 0.0
  %1462 = vmatprep.subr.mxu0 0.0
  %1463 = vmatpush1.msra.mxu0 0.0
  %1464 = vmatprep.subr.mxu0 0.0
  %1465 = vmatpush1.msra.mxu0 0.0
  %1466 = vmatprep.subr.mxu0 0.0
  %1467 = vmatpush1.msra.mxu0 0.0
  %1468 = vmatprep.subr.mxu0 0.0
  %1469 = vmatpush1.msra.mxu0 0.0
  %1470 = vmatprep.subr.mxu0 0.0
  %1471 = vmatpush1.msra.mxu0 0.0
  %1472 = vmatprep.subr.mxu0 0.0
  %1473 = vmatpush1.msra.mxu0 0.0
  %1474 = vmatprep.subr.mxu0 0.0
  %1475 = vmatpush1.msra.mxu0 0.0
  %1476 = vmatprep.subr.mxu0 0.0
  %1477 = vmatpush1.msra.mxu0 0.0
  %1478 = vmatprep.subr.mxu0 0.0
  %1479 = vmatpush1.msra.mxu0 0.0
  %1480 = vmatprep.subr.mxu0 0.0
  %1481 = vmatpush1.msra.mxu0 0.0
  %1482 = vmatprep.mubr.f32.mxu0 0.0
  %1483 = vmatmul.mubr.f32.gmra.mrb[0].mxu0 %v1395
  %v1484 = vpop.f32.mrb[0].mxu0
  %v1485 = vadd.f32 %v1377, %v1484
  %v1486 = vpop.f32.mrb[0].mxu0
  %v1487 = vadd.f32 %v1381, %v1486
  %1488 = vmatprep.mubr.f32.mxu0 0.0
  %1489 = vmatmul.mubr.f32.gmra.mrb[0].mxu0 %v1398
  %v1490 = vpop.f32.mrb[0].mxu0
  %v1491 = vadd.f32 %v1377, %v1490
  %v1492 = vpop.f32.mrb[0].mxu0
  %v1493 = vadd.f32 %v1381, %v1492
  %1494 = vmatprep.mubr.f32.mxu0 0.0
  %1495 = vmatmul.mubr.f32.gmra.mrb[0].mxu0 %v1401
  %v1496 = vpop.f32.mrb[0].mxu0
  %v1497 = vadd.f32 %v1377, %v1496
  %v1498 = vpop.f32.mrb[0].mxu0
  %v1499 = vadd.f32 %v1381, %v1498
  %1500 = vmatprep.mubr.f32.mxu0 0.0
  %1501 = vmatmul.mubr.f32.gmra.mrb[0].mxu0 %v1404
  %v1502 = vpop.f32.mrb[0].mxu0
  %v1503 = vadd.f32 %v1377, %v1502
  %v1504 = vpop.f32.mrb[0].mxu0
  %v1505 = vadd.f32 %v1381, %v1504
  %1506 = vmatprep.mubr.f32.mxu0 0.0
  %1507 = vmatmul.mubr.f32.gmra.mrb[0].mxu0 %v1407
  %v1508 = vpop.f32.mrb[0].mxu0
  %v1509 = vadd.f32 %v1377, %v1508
  %v1510 = vpop.f32.mrb[0].mxu0
  %v1511 = vadd.f32 %v1381, %v1510
  %1512 = vmatprep.mubr.f32.mxu0 0.0
  %1513 = vmatmul.mubr.f32.gmra.mrb[0].mxu0 %v1410
  %v1514 = vpop.f32.mrb[0].mxu0
  %v1515 = vadd.f32 %v1377, %v1514
  %v1516 = vpop.f32.mrb[0].mxu0
  %v1517 = vadd.f32 %v1381, %v1516
  %1518 = vmatprep.mubr.f32.mxu0 0.0
  %1519 = vmatmul.mubr.f32.gmra.mrb[0].mxu0 %v1413
  %v1520 = vpop.f32.mrb[0].mxu0
  %v1521 = vadd.f32 %v1377, %v1520
  %v1522 = vpop.f32.mrb[0].mxu0
  %v1523 = vadd.f32 %v1381, %v1522
  %1524 = vmatprep.mubr.f32.mxu0 0.0
  %1525 = vmatmul.mubr.f32.gmra.mrb[0].mxu0 %v1416
  %v1526 = vpop.f32.mrb[0].mxu0
  %v1527 = vadd.f32 %v1377, %v1526
  %v1528 = vpop.f32.mrb[0].mxu0
  %v1529 = vadd.f32 %v1381, %v1528
  %1530 = vdwg.mxu0
  %1531 = vmatprep.subr.mxu0 %v1334
  %1532 = vmatpush1.msra.mxu0 %v1333
  %1533 = vmatprep.subr.mxu0 %v1338
  %1534 = vmatpush1.msra.mxu0 %v1337
  %1535 = vmatprep.subr.mxu0 %v1342
  %1536 = vmatpush1.msra.mxu0 %v1341
  %1537 = vmatprep.subr.mxu0 %v1346
  %1538 = vmatpush1.msra.mxu0 %v1345
  %1539 = vmatprep.subr.mxu0 %v1350
  %1540 = vmatpush1.msra.mxu0 %v1349
  %1541 = vmatprep.subr.mxu0 %v1354
  %1542 = vmatpush1.msra.mxu0 %v1353
  %1543 = vmatprep.subr.mxu0 %v1358
  %1544 = vmatpush1.msra.mxu0 %v1357
  %1545 = vmatprep.subr.mxu0 %v1362
  %1546 = vmatpush1.msra.mxu0 %v1361
  %1547 = vmatprep.subr.mxu0 0.0
  %1548 = vmatpush1.msra.mxu0 0.0
  %1549 = vmatprep.subr.mxu0 0.0
  %1550 = vmatpush1.msra.mxu0 0.0
  %1551 = vmatprep.subr.mxu0 0.0
  %1552 = vmatpush1.msra.mxu0 0.0
  %1553 = vmatprep.subr.mxu0 0.0
  %1554 = vmatpush1.msra.mxu0 0.0
  %1555 = vmatprep.subr.mxu0 0.0
  %1556 = vmatpush1.msra.mxu0 0.0
  %1557 = vmatprep.subr.mxu0 0.0
  %1558 = vmatpush1.msra.mxu0 0.0
  %1559 = vmatprep.subr.mxu0 0.0
  %1560 = vmatpush1.msra.mxu0 0.0
  %1561 = vmatprep.subr.mxu0 0.0
  %1562 = vmatpush1.msra.mxu0 0.0
  %1563 = vmatprep.subr.mxu0 0.0
  %1564 = vmatpush1.msra.mxu0 0.0
  %1565 = vmatprep.subr.mxu0 0.0
  %1566 = vmatpush1.msra.mxu0 0.0
  %1567 = vmatprep.subr.mxu0 0.0
  %1568 = vmatpush1.msra.mxu0 0.0
  %1569 = vmatprep.subr.mxu0 0.0
  %1570 = vmatpush1.msra.mxu0 0.0
  %1571 = vmatprep.subr.mxu0 0.0
  %1572 = vmatpush1.msra.mxu0 0.0
  %1573 = vmatprep.subr.mxu0 0.0
  %1574 = vmatpush1.msra.mxu0 0.0
  %1575 = vmatprep.subr.mxu0 0.0
  %1576 = vmatpush1.msra.mxu0 0.0
  %1577 = vmatprep.subr.mxu0 0.0
  %1578 = vmatpush1.msra.mxu0 0.0
  %1579 = vmatprep.subr.mxu0 0.0
  %1580 = vmatpush1.msra.mxu0 0.0
  %1581 = vmatprep.subr.mxu0 0.0
  %1582 = vmatpush1.msra.mxu0 0.0
  %1583 = vmatprep.subr.mxu0 0.0
  %1584 = vmatpush1.msra.mxu0 0.0
  %1585 = vmatprep.subr.mxu0 0.0
  %1586 = vmatpush1.msra.mxu0 0.0
  %1587 = vmatprep.subr.mxu0 0.0
  %1588 = vmatpush1.msra.mxu0 0.0
  %1589 = vmatprep.subr.mxu0 0.0
  %1590 = vmatpush1.msra.mxu0 0.0
  %1591 = vmatprep.subr.mxu0 0.0
  %1592 = vmatpush1.msra.mxu0 0.0
  %1593 = vmatprep.subr.mxu0 0.0
  %1594 = vmatpush1.msra.mxu0 0.0
  %1595 = vmatprep.mubr.f32.mxu0 0.0
  %1596 = vmatmul.mubr.f32.gmra.mrb[0].mxu0 %v1395
  %v1597 = vpop.f32.mrb[0].mxu0
  %v1598 = vadd.f32 %v1385, %v1597
  %v1599 = vpop.f32.mrb[0].mxu0
  %v1600 = vadd.f32 %v1389, %v1599
  %1601 = vmatprep.mubr.f32.mxu0 0.0
  %1602 = vmatmul.mubr.f32.gmra.mrb[0].mxu0 %v1398
  %v1603 = vpop.f32.mrb[0].mxu0
  %v1604 = vadd.f32 %v1385, %v1603
  %v1605 = vpop.f32.mrb[0].mxu0
  %v1606 = vadd.f32 %v1389, %v1605
  %1607 = vmatprep.mubr.f32.mxu0 0.0
  %1608 = vmatmul.mubr.f32.gmra.mrb[0].mxu0 %v1401
  %v1609 = vpop.f32.mrb[0].mxu0
  %v1610 = vadd.f32 %v1385, %v1609
  %v1611 = vpop.f32.mrb[0].mxu0
  %v1612 = vadd.f32 %v1389, %v1611
  %1613 = vmatprep.mubr.f32.mxu0 0.0
  %1614 = vmatmul.mubr.f32.gmra.mrb[0].mxu0 %v1404
  %v1615 = vpop.f32.mrb[0].mxu0
  %v1616 = vadd.f32 %v1385, %v1615
  %v1617 = vpop.f32.mrb[0].mxu0
  %v1618 = vadd.f32 %v1389, %v1617
  %1619 = vmatprep.mubr.f32.mxu0 0.0
  %1620 = vmatmul.mubr.f32.gmra.mrb[0].mxu0 %v1407
  %v1621 = vpop.f32.mrb[0].mxu0
  %v1622 = vadd.f32 %v1385, %v1621
  %v1623 = vpop.f32.mrb[0].mxu0
  %v1624 = vadd.f32 %v1389, %v1623
  %1625 = vmatprep.mubr.f32.mxu0 0.0
  %1626 = vmatmul.mubr.f32.gmra.mrb[0].mxu0 %v1410
  %v1627 = vpop.f32.mrb[0].mxu0
  %v1628 = vadd.f32 %v1385, %v1627
  %v1629 = vpop.f32.mrb[0].mxu0
  %v1630 = vadd.f32 %v1389, %v1629
  %1631 = vmatprep.mubr.f32.mxu0 0.0
  %1632 = vmatmul.mubr.f32.gmra.mrb[0].mxu0 %v1413
  %v1633 = vpop.f32.mrb[0].mxu0
  %v1634 = vadd.f32 %v1385, %v1633
  %v1635 = vpop.f32.mrb[0].mxu0
  %v1636 = vadd.f32 %v1389, %v1635
  %1637 = vmatprep.mubr.f32.mxu0 0.0
  %1638 = vmatmul.mubr.f32.gmra.mrb[0].mxu0 %v1416
  %v1639 = vpop.f32.mrb[0].mxu0
  %v1640 = vadd.f32 %v1385, %v1639
  %v1641 = vpop.f32.mrb[0].mxu0
  %v1642 = vadd.f32 %v1389, %v1641
  %1643 = vdwg.mxu0
  %1644 = vst [vmem:[#allocation2] sm:$0xff] %v1485
  %1645 = vst [vmem:[#allocation2 + $0x8] sm:$0xff] %v1487
  %1646 = vst [vmem:[#allocation2 + $0x10] sm:$0xff] %v1598
  %1647 = vst [vmem:[#allocation2 + $0x18] sm:$0xff] %v1600
  %1648 = vst [vmem:[#allocation2 + $0x20] sm:$0xff] %v1491
  %1649 = vst [vmem:[#allocation2 + $0x28] sm:$0xff] %v1493
  %1650 = vst [vmem:[#allocation2 + $0x30] sm:$0xff] %v1604
  %1651 = vst [vmem:[#allocation2 + $0x38] sm:$0xff] %v1606
  %1652 = vst [vmem:[#allocation2 + $0x40] sm:$0xff] %v1497
  %1653 = vst [vmem:[#allocation2 + $0x48] sm:$0xff] %v1499
  %1654 = vst [vmem:[#allocation2 + $0x50] sm:$0xff] %v1610
  %1655 = vst [vmem:[#allocation2 + $0x58] sm:$0xff] %v1612
  %1656 = vst [vmem:[#allocation2 + $0x60] sm:$0xff] %v1503
  %1657 = vst [vmem:[#allocation2 + $0x68] sm:$0xff] %v1505
  %1658 = vst [vmem:[#allocation2 + $0x70] sm:$0xff] %v1616
  %1659 = vst [vmem:[#allocation2 + $0x78] sm:$0xff] %v1618
  %1660 = vst [vmem:[#allocation2 + $0x80] sm:$0xff] %v1509
  %1661 = vst [vmem:[#allocation2 + $0x88] sm:$0xff] %v1511
  %1662 = vst [vmem:[#allocation2 + $0x90] sm:$0xff] %v1622
  %1663 = vst [vmem:[#allocation2 + $0x98] sm:$0xff] %v1624
  %1664 = vst [vmem:[#allocation2 + $0xa0] sm:$0xff] %v1515
  %1665 = vst [vmem:[#allocation2 + $0xa8] sm:$0xff] %v1517
  %1666 = vst [vmem:[#allocation2 + $0xb0] sm:$0xff] %v1628
  %1667 = vst [vmem:[#allocation2 + $0xb8] sm:$0xff] %v1630
  %1668 = vst [vmem:[#allocation2 + $0xc0] sm:$0xff] %v1521
  %1669 = vst [vmem:[#allocation2 + $0xc8] sm:$0xff] %v1523
  %1670 = vst [vmem:[#allocation2 + $0xd0] sm:$0xff] %v1634
  %1671 = vst [vmem:[#allocation2 + $0xd8] sm:$0xff] %v1636
  %1672 = vst [vmem:[#allocation2 + $0xe0] sm:$0xff] %v1527
  %1673 = vst [vmem:[#allocation2 + $0xe8] sm:$0xff] %v1529
  %1674 = vst [vmem:[#allocation2 + $0xf0] sm:$0xff] %v1640
  %1675 = vst [vmem:[#allocation2 + $0xf8] sm:$0xff] %v1642
  %v1676 = vld [vmem:[%s3 + $0x80] sm:$0xff]
  %v1677 = vld [vmem:[%s3 + $0x88] sm:$0xff]
  %v1678 = vld [vmem:[%s3 + $0x90] sm:$0xff]
  %v1679 = vld [vmem:[%s3 + $0x98] sm:$0xff]
  %v1680 = vld [vmem:[%s3 + $0xa0] sm:$0xff]
  %v1681 = vld [vmem:[%s3 + $0xa8] sm:$0xff]
  %v1682 = vld [vmem:[%s3 + $0xb0] sm:$0xff]
  %v1683 = vld [vmem:[%s3 + $0xb8] sm:$0xff]
  %v1684 = vld [vmem:[%s3 + $0xc0] sm:$0xff]
  %v1685 = vld [vmem:[%s3 + $0xc8] sm:$0xff]
  %v1686 = vld [vmem:[%s3 + $0xd0] sm:$0xff]
  %v1687 = vld [vmem:[%s3 + $0xd8] sm:$0xff]
  %v1688 = vld [vmem:[%s3 + $0xe0] sm:$0xff]
  %v1689 = vld [vmem:[%s3 + $0xe8] sm:$0xff]
  %v1690 = vld [vmem:[%s3 + $0xf0] sm:$0xff]
  %v1691 = vld [vmem:[%s3 + $0xf8] sm:$0xff]
  %v1692 = vld [vmem:[#allocation2] sm:$0xff]
  %v1693 = vld [vmem:[#allocation2 + $0x8] sm:$0xff]
  %v1694 = vld [vmem:[#allocation2 + $0xf0] sm:$0xff]
  %v1695 = vld [vmem:[#allocation2 + $0xf8] sm:$0xff]
  %v1696 = vadd.f32 %v1692, %v1694
  %v1697 = vadd.f32 %v1693, %v1695
  %1698 = vmatprep.subr.mxu0 %v1677
  %1699 = vmatpush1.msra.mxu0 %v1676
  %1700 = vmatprep.subr.mxu0 %v1679
  %1701 = vmatpush1.msra.mxu0 %v1678
  %1702 = vmatprep.subr.mxu0 %v1681
  %1703 = vmatpush1.msra.mxu0 %v1680
  %1704 = vmatprep.subr.mxu0 %v1683
  %1705 = vmatpush1.msra.mxu0 %v1682
  %1706 = vmatprep.subr.mxu0 %v1685
  %1707 = vmatpush1.msra.mxu0 %v1684
  %1708 = vmatprep.subr.mxu0 %v1687
  %1709 = vmatpush1.msra.mxu0 %v1686
  %1710 = vmatprep.subr.mxu0 %v1689
  %1711 = vmatpush1.msra.mxu0 %v1688
  %1712 = vmatprep.subr.mxu0 %v1691
  %1713 = vmatpush1.msra.mxu0 %v1690
  %1714 = vmatprep.subr.mxu0 0.0
  %1715 = vmatpush1.msra.mxu0 0.0
  %1716 = vmatprep.subr.mxu0 0.0
  %1717 = vmatpush1.msra.mxu0 0.0
  %1718 = vmatprep.subr.mxu0 0.0
  %1719 = vmatpush1.msra.mxu0 0.0
  %1720 = vmatprep.subr.mxu0 0.0
  %1721 = vmatpush1.msra.mxu0 0.0
  %1722 = vmatprep.subr.mxu0 0.0
  %1723 = vmatpush1.msra.mxu0 0.0
  %1724 = vmatprep.subr.mxu0 0.0
  %1725 = vmatpush1.msra.mxu0 0.0
  %1726 = vmatprep.subr.mxu0 0.0
  %1727 = vmatpush1.msra.mxu0 0.0
  %1728 = vmatprep.subr.mxu0 0.0
  %1729 = vmatpush1.msra.mxu0 0.0
  %1730 = vmatprep.subr.mxu0 0.0
  %1731 = vmatpush1.msra.mxu0 0.0
  %1732 = vmatprep.subr.mxu0 0.0
  %1733 = vmatpush1.msra.mxu0 0.0
  %1734 = vmatprep.subr.mxu0 0.0
  %1735 = vmatpush1.msra.mxu0 0.0
  %1736 = vmatprep.subr.mxu0 0.0
  %1737 = vmatpush1.msra.mxu0 0.0
  %1738 = vmatprep.subr.mxu0 0.0
  %1739 = vmatpush1.msra.mxu0 0.0
  %1740 = vmatprep.subr.mxu0 0.0
  %1741 = vmatpush1.msra.mxu0 0.0
  %1742 = vmatprep.subr.mxu0 0.0
  %1743 = vmatpush1.msra.mxu0 0.0
  %1744 = vmatprep.subr.mxu0 0.0
  %1745 = vmatpush1.msra.mxu0 0.0
  %1746 = vmatprep.subr.mxu0 0.0
  %1747 = vmatpush1.msra.mxu0 0.0
  %1748 = vmatprep.subr.mxu0 0.0
  %1749 = vmatpush1.msra.mxu0 0.0
  %1750 = vmatprep.subr.mxu0 0.0
  %1751 = vmatpush1.msra.mxu0 0.0
  %1752 = vmatprep.subr.mxu0 0.0
  %1753 = vmatpush1.msra.mxu0 0.0
  %1754 = vmatprep.subr.mxu0 0.0
  %1755 = vmatpush1.msra.mxu0 0.0
  %1756 = vmatprep.subr.mxu0 0.0
  %1757 = vmatpush1.msra.mxu0 0.0
  %1758 = vmatprep.subr.mxu0 0.0
  %1759 = vmatpush1.msra.mxu0 0.0
  %1760 = vmatprep.subr.mxu0 0.0
  %1761 = vmatpush1.msra.mxu0 0.0
  %1762 = vmatprep.mubr.f32.mxu0 0.0
  %1763 = vmatmul.mubr.f32.gmra.mrb[0].mxu0 %v424
  %v1764 = vpop.f32.mrb[0].mxu0
  %v1765 = vadd.f32 0.0, %v1764
  %v1766 = vpop.f32.mrb[0].mxu0
  %v1767 = vadd.f32 0.0, %v1766
  %1768 = vdwg.mxu0
  %v1769 = vadd.f32 %v1696, %v1765
  %v1770 = vadd.f32 %v1697, %v1767
  %v1771 = vxor.u32 %v1769, 2147483648
  %v1772 = vxor.u32 %v1770, 2147483648
  %v1773 = vmul.f32 %v1771, 1.442695
  %v1774 = vpow.pop %v1773
  %v1775 = vmul.f32 %v1772, 1.442695
  %v1776 = vpow.pop %v1775
  %v1777 = vadd.f32 %v1774, 1.0
  %v1778 = vadd.f32 %v1776, 1.0
  %v1779 = vrcp.pop %v1777
  %v1780 = vmul.f32 1.0, %v1779
  %v1781 = vrcp.pop %v1778
  %v1782 = vmul.f32 1.0, %v1781
  %v1783 = vtanh.pop %v1770
  %v1784 = vmul.f32 %v1780, 0.0
  %1786 = vrot.lane.b32.xlu0 %v1783, 64
  %v1787 = vpop.permute.xlu0 %1786
  %v1789 = vmul.f32 %v1780, %v1787
  %1791 = vrot.lane.b32.xlu0 %v1789, 64
  %v1792 = vpop.permute.xlu0 %1791
  %v1794 = vadd.f32 %v1784, %v1792
  %v1795 = vtanh.pop %v1794
  %1797 = vrot.lane.b32.xlu0 %v1795, 64
  %v1798 = vpop.permute.xlu0 %1797
  %v1800 = vmul.f32 %v1782, %v1798
  %v1801 = vld [vmem:[#allocation2 + $0x20] sm:$0xff]
  %v1802 = vld [vmem:[#allocation2 + $0x28] sm:$0xff]
  %v1803 = vld [vmem:[#allocation2 + $0xd0] sm:$0xff]
  %v1804 = vld [vmem:[#allocation2 + $0xd8] sm:$0xff]
  %v1805 = vadd.f32 %v1801, %v1803
  %v1806 = vadd.f32 %v1802, %v1804
  %v1808 = vsel %vm422, %v1800, 0
  %1810 = vmatprep.subr.mxu0 %v1677
  %1811 = vmatpush1.msra.mxu0 %v1676
  %1812 = vmatprep.subr.mxu0 %v1679
  %1813 = vmatpush1.msra.mxu0 %v1678
  %1814 = vmatprep.subr.mxu0 %v1681
  %1815 = vmatpush1.msra.mxu0 %v1680
  %1816 = vmatprep.subr.mxu0 %v1683
  %1817 = vmatpush1.msra.mxu0 %v1682
  %1818 = vmatprep.subr.mxu0 %v1685
  %1819 = vmatpush1.msra.mxu0 %v1684
  %1820 = vmatprep.subr.mxu0 %v1687
  %1821 = vmatpush1.msra.mxu0 %v1686
  %1822 = vmatprep.subr.mxu0 %v1689
  %1823 = vmatpush1.msra.mxu0 %v1688
  %1824 = vmatprep.subr.mxu0 %v1691
  %1825 = vmatpush1.msra.mxu0 %v1690
  %1826 = vmatprep.subr.mxu0 0.0
  %1827 = vmatpush1.msra.mxu0 0.0
  %1828 = vmatprep.subr.mxu0 0.0
  %1829 = vmatpush1.msra.mxu0 0.0
  %1830 = vmatprep.subr.mxu0 0.0
  %1831 = vmatpush1.msra.mxu0 0.0
  %1832 = vmatprep.subr.mxu0 0.0
  %1833 = vmatpush1.msra.mxu0 0.0
  %1834 = vmatprep.subr.mxu0 0.0
  %1835 = vmatpush1.msra.mxu0 0.0
  %1836 = vmatprep.subr.mxu0 0.0
  %1837 = vmatpush1.msra.mxu0 0.0
  %1838 = vmatprep.subr.mxu0 0.0
  %1839 = vmatpush1.msra.mxu0 0.0
  %1840 = vmatprep.subr.mxu0 0.0
  %1841 = vmatpush1.msra.mxu0 0.0
  %1842 = vmatprep.subr.mxu0 0.0
  %1843 = vmatpush1.msra.mxu0 0.0
  %1844 = vmatprep.subr.mxu0 0.0
  %1845 = vmatpush1.msra.mxu0 0.0
  %1846 = vmatprep.subr.mxu0 0.0
  %1847 = vmatpush1.msra.mxu0 0.0
  %1848 = vmatprep.subr.mxu0 0.0
  %1849 = vmatpush1.msra.mxu0 0.0
  %1850 = vmatprep.subr.mxu0 0.0
  %1851 = vmatpush1.msra.mxu0 0.0
  %1852 = vmatprep.subr.mxu0 0.0
  %1853 = vmatpush1.msra.mxu0 0.0
  %1854 = vmatprep.subr.mxu0 0.0
  %1855 = vmatpush1.msra.mxu0 0.0
  %1856 = vmatprep.subr.mxu0 0.0
  %1857 = vmatpush1.msra.mxu0 0.0
  %1858 = vmatprep.subr.mxu0 0.0
  %1859 = vmatpush1.msra.mxu0 0.0
  %1860 = vmatprep.subr.mxu0 0.0
  %1861 = vmatpush1.msra.mxu0 0.0
  %1862 = vmatprep.subr.mxu0 0.0
  %1863 = vmatpush1.msra.mxu0 0.0
  %1864 = vmatprep.subr.mxu0 0.0
  %1865 = vmatpush1.msra.mxu0 0.0
  %1866 = vmatprep.subr.mxu0 0.0
  %1867 = vmatpush1.msra.mxu0 0.0
  %1868 = vmatprep.subr.mxu0 0.0
  %1869 = vmatpush1.msra.mxu0 0.0
  %1870 = vmatprep.subr.mxu0 0.0
  %1871 = vmatpush1.msra.mxu0 0.0
  %1872 = vmatprep.subr.mxu0 0.0
  %1873 = vmatpush1.msra.mxu0 0.0
  %1874 = vmatprep.mubr.f32.mxu0 0.0
  %1875 = vmatmul.mubr.f32.gmra.mrb[0].mxu0 %v1808
  %v1876 = vpop.f32.mrb[0].mxu0
  %v1877 = vadd.f32 0.0, %v1876
  %v1878 = vpop.f32.mrb[0].mxu0
  %v1879 = vadd.f32 0.0, %v1878
  %1880 = vdwg.mxu0
  %v1881 = vadd.f32 %v1805, %v1877
  %v1882 = vadd.f32 %v1806, %v1879
  %v1883 = vxor.u32 %v1881, 2147483648
  %v1884 = vxor.u32 %v1882, 2147483648
  %v1885 = vmul.f32 %v1883, 1.442695
  %v1886 = vpow.pop %v1885
  %v1887 = vmul.f32 %v1884, 1.442695
  %v1888 = vpow.pop %v1887
  %v1889 = vadd.f32 %v1886, 1.0
  %v1890 = vadd.f32 %v1888, 1.0
  %v1891 = vrcp.pop %v1889
  %v1892 = vmul.f32 1.0, %v1891
  %v1893 = vrcp.pop %v1890
  %v1894 = vmul.f32 1.0, %v1893
  %v1895 = vtanh.pop %v1882
  %v1896 = vmul.f32 %v1892, %v1794
  %1898 = vrot.lane.b32.xlu0 %v1895, 64
  %v1899 = vpop.permute.xlu0 %1898
  %v1901 = vmul.f32 %v1892, %v1899
  %1903 = vrot.lane.b32.xlu0 %v1901, 64
  %v1904 = vpop.permute.xlu0 %1903
  %v1906 = vadd.f32 %v1896, %v1904
  %v1907 = vtanh.pop %v1906
  %1909 = vrot.lane.b32.xlu0 %v1907, 64
  %v1910 = vpop.permute.xlu0 %1909
  %v1912 = vmul.f32 %v1894, %v1910
  %v1913 = vld [vmem:[#allocation2 + $0x40] sm:$0xff]
  %v1914 = vld [vmem:[#allocation2 + $0x48] sm:$0xff]
  %v1915 = vld [vmem:[#allocation2 + $0xb0] sm:$0xff]
  %v1916 = vld [vmem:[#allocation2 + $0xb8] sm:$0xff]
  %v1917 = vadd.f32 %v1913, %v1915
  %v1918 = vadd.f32 %v1914, %v1916
  %v1920 = vsel %vm422, %v1912, 0
  %1922 = vmatprep.subr.mxu0 %v1677
  %1923 = vmatpush1.msra.mxu0 %v1676
  %1924 = vmatprep.subr.mxu0 %v1679
  %1925 = vmatpush1.msra.mxu0 %v1678
  %1926 = vmatprep.subr.mxu0 %v1681
  %1927 = vmatpush1.msra.mxu0 %v1680
  %1928 = vmatprep.subr.mxu0 %v1683
  %1929 = vmatpush1.msra.mxu0 %v1682
  %1930 = vmatprep.subr.mxu0 %v1685
  %1931 = vmatpush1.msra.mxu0 %v1684
  %1932 = vmatprep.subr.mxu0 %v1687
  %1933 = vmatpush1.msra.mxu0 %v1686
  %1934 = vmatprep.subr.mxu0 %v1689
  %1935 = vmatpush1.msra.mxu0 %v1688
  %1936 = vmatprep.subr.mxu0 %v1691
  %1937 = vmatpush1.msra.mxu0 %v1690
  %1938 = vmatprep.subr.mxu0 0.0
  %1939 = vmatpush1.msra.mxu0 0.0
  %1940 = vmatprep.subr.mxu0 0.0
  %1941 = vmatpush1.msra.mxu0 0.0
  %1942 = vmatprep.subr.mxu0 0.0
  %1943 = vmatpush1.msra.mxu0 0.0
  %1944 = vmatprep.subr.mxu0 0.0
  %1945 = vmatpush1.msra.mxu0 0.0
  %1946 = vmatprep.subr.mxu0 0.0
  %1947 = vmatpush1.msra.mxu0 0.0
  %1948 = vmatprep.subr.mxu0 0.0
  %1949 = vmatpush1.msra.mxu0 0.0
  %1950 = vmatprep.subr.mxu0 0.0
  %1951 = vmatpush1.msra.mxu0 0.0
  %1952 = vmatprep.subr.mxu0 0.0
  %1953 = vmatpush1.msra.mxu0 0.0
  %1954 = vmatprep.subr.mxu0 0.0
  %1955 = vmatpush1.msra.mxu0 0.0
  %1956 = vmatprep.subr.mxu0 0.0
  %1957 = vmatpush1.msra.mxu0 0.0
  %1958 = vmatprep.subr.mxu0 0.0
  %1959 = vmatpush1.msra.mxu0 0.0
  %1960 = vmatprep.subr.mxu0 0.0
  %1961 = vmatpush1.msra.mxu0 0.0
  %1962 = vmatprep.subr.mxu0 0.0
  %1963 = vmatpush1.msra.mxu0 0.0
  %1964 = vmatprep.subr.mxu0 0.0
  %1965 = vmatpush1.msra.mxu0 0.0
  %1966 = vmatprep.subr.mxu0 0.0
  %1967 = vmatpush1.msra.mxu0 0.0
  %1968 = vmatprep.subr.mxu0 0.0
  %1969 = vmatpush1.msra.mxu0 0.0
  %1970 = vmatprep.subr.mxu0 0.0
  %1971 = vmatpush1.msra.mxu0 0.0
  %1972 = vmatprep.subr.mxu0 0.0
  %1973 = vmatpush1.msra.mxu0 0.0
  %1974 = vmatprep.subr.mxu0 0.0
  %1975 = vmatpush1.msra.mxu0 0.0
  %1976 = vmatprep.subr.mxu0 0.0
  %1977 = vmatpush1.msra.mxu0 0.0
  %1978 = vmatprep.subr.mxu0 0.0
  %1979 = vmatpush1.msra.mxu0 0.0
  %1980 = vmatprep.subr.mxu0 0.0
  %1981 = vmatpush1.msra.mxu0 0.0
  %1982 = vmatprep.subr.mxu0 0.0
  %1983 = vmatpush1.msra.mxu0 0.0
  %1984 = vmatprep.subr.mxu0 0.0
  %1985 = vmatpush1.msra.mxu0 0.0
  %1986 = vmatprep.mubr.f32.mxu0 0.0
  %1987 = vmatmul.mubr.f32.gmra.mrb[0].mxu0 %v1920
  %v1988 = vpop.f32.mrb[0].mxu0
  %v1989 = vadd.f32 0.0, %v1988
  %v1990 = vpop.f32.mrb[0].mxu0
  %v1991 = vadd.f32 0.0, %v1990
  %1992 = vdwg.mxu0
  %v1993 = vadd.f32 %v1917, %v1989
  %v1994 = vadd.f32 %v1918, %v1991
  %v1995 = vxor.u32 %v1993, 2147483648
  %v1996 = vxor.u32 %v1994, 2147483648
  %v1997 = vmul.f32 %v1995, 1.442695
  %v1998 = vpow.pop %v1997
  %v1999 = vmul.f32 %v1996, 1.442695
  %v2000 = vpow.pop %v1999
  %v2001 = vadd.f32 %v1998, 1.0
  %v2002 = vadd.f32 %v2000, 1.0
  %v2003 = vrcp.pop %v2001
  %v2004 = vmul.f32 1.0, %v2003
  %v2005 = vrcp.pop %v2002
  %v2006 = vmul.f32 1.0, %v2005
  %v2007 = vtanh.pop %v1994
  %v2008 = vmul.f32 %v2004, %v1906
  %2010 = vrot.lane.b32.xlu0 %v2007, 64
  %v2011 = vpop.permute.xlu0 %2010
  %v2013 = vmul.f32 %v2004, %v2011
  %2015 = vrot.lane.b32.xlu0 %v2013, 64
  %v2016 = vpop.permute.xlu0 %2015
  %v2018 = vadd.f32 %v2008, %v2016
  %v2019 = vtanh.pop %v2018
  %2021 = vrot.lane.b32.xlu0 %v2019, 64
  %v2022 = vpop.permute.xlu0 %2021
  %v2024 = vmul.f32 %v2006, %v2022
  %v2025 = vld [vmem:[#allocation2 + $0x60] sm:$0xff]
  %v2026 = vld [vmem:[#allocation2 + $0x68] sm:$0xff]
  %v2027 = vld [vmem:[#allocation2 + $0x90] sm:$0xff]
  %v2028 = vld [vmem:[#allocation2 + $0x98] sm:$0xff]
  %v2029 = vadd.f32 %v2025, %v2027
  %v2030 = vadd.f32 %v2026, %v2028
  %v2032 = vsel %vm422, %v2024, 0
  %2034 = vmatprep.subr.mxu0 %v1677
  %2035 = vmatpush1.msra.mxu0 %v1676
  %2036 = vmatprep.subr.mxu0 %v1679
  %2037 = vmatpush1.msra.mxu0 %v1678
  %2038 = vmatprep.subr.mxu0 %v1681
  %2039 = vmatpush1.msra.mxu0 %v1680
  %2040 = vmatprep.subr.mxu0 %v1683
  %2041 = vmatpush1.msra.mxu0 %v1682
  %2042 = vmatprep.subr.mxu0 %v1685
  %2043 = vmatpush1.msra.mxu0 %v1684
  %2044 = vmatprep.subr.mxu0 %v1687
  %2045 = vmatpush1.msra.mxu0 %v1686
  %2046 = vmatprep.subr.mxu0 %v1689
  %2047 = vmatpush1.msra.mxu0 %v1688
  %2048 = vmatprep.subr.mxu0 %v1691
  %2049 = vmatpush1.msra.mxu0 %v1690
  %2050 = vmatprep.subr.mxu0 0.0
  %2051 = vmatpush1.msra.mxu0 0.0
  %2052 = vmatprep.subr.mxu0 0.0
  %2053 = vmatpush1.msra.mxu0 0.0
  %2054 = vmatprep.subr.mxu0 0.0
  %2055 = vmatpush1.msra.mxu0 0.0
  %2056 = vmatprep.subr.mxu0 0.0
  %2057 = vmatpush1.msra.mxu0 0.0
  %2058 = vmatprep.subr.mxu0 0.0
  %2059 = vmatpush1.msra.mxu0 0.0
  %2060 = vmatprep.subr.mxu0 0.0
  %2061 = vmatpush1.msra.mxu0 0.0
  %2062 = vmatprep.subr.mxu0 0.0
  %2063 = vmatpush1.msra.mxu0 0.0
  %2064 = vmatprep.subr.mxu0 0.0
  %2065 = vmatpush1.msra.mxu0 0.0
  %2066 = vmatprep.subr.mxu0 0.0
  %2067 = vmatpush1.msra.mxu0 0.0
  %2068 = vmatprep.subr.mxu0 0.0
  %2069 = vmatpush1.msra.mxu0 0.0
  %2070 = vmatprep.subr.mxu0 0.0
  %2071 = vmatpush1.msra.mxu0 0.0
  %2072 = vmatprep.subr.mxu0 0.0
  %2073 = vmatpush1.msra.mxu0 0.0
  %2074 = vmatprep.subr.mxu0 0.0
  %2075 = vmatpush1.msra.mxu0 0.0
  %2076 = vmatprep.subr.mxu0 0.0
  %2077 = vmatpush1.msra.mxu0 0.0
  %2078 = vmatprep.subr.mxu0 0.0
  %2079 = vmatpush1.msra.mxu0 0.0
  %2080 = vmatprep.subr.mxu0 0.0
  %2081 = vmatpush1.msra.mxu0 0.0
  %2082 = vmatprep.subr.mxu0 0.0
  %2083 = vmatpush1.msra.mxu0 0.0
  %2084 = vmatprep.subr.mxu0 0.0
  %2085 = vmatpush1.msra.mxu0 0.0
  %2086 = vmatprep.subr.mxu0 0.0
  %2087 = vmatpush1.msra.mxu0 0.0
  %2088 = vmatprep.subr.mxu0 0.0
  %2089 = vmatpush1.msra.mxu0 0.0
  %2090 = vmatprep.subr.mxu0 0.0
  %2091 = vmatpush1.msra.mxu0 0.0
  %2092 = vmatprep.subr.mxu0 0.0
  %2093 = vmatpush1.msra.mxu0 0.0
  %2094 = vmatprep.subr.mxu0 0.0
  %2095 = vmatpush1.msra.mxu0 0.0
  %2096 = vmatprep.subr.mxu0 0.0
  %2097 = vmatpush1.msra.mxu0 0.0
  %2098 = vmatprep.mubr.f32.mxu0 0.0
  %2099 = vmatmul.mubr.f32.gmra.mrb[0].mxu0 %v2032
  %v2100 = vpop.f32.mrb[0].mxu0
  %v2101 = vadd.f32 0.0, %v2100
  %v2102 = vpop.f32.mrb[0].mxu0
  %v2103 = vadd.f32 0.0, %v2102
  %2104 = vdwg.mxu0
  %v2105 = vadd.f32 %v2029, %v2101
  %v2106 = vadd.f32 %v2030, %v2103
  %v2107 = vxor.u32 %v2105, 2147483648
  %v2108 = vxor.u32 %v2106, 2147483648
  %v2109 = vmul.f32 %v2107, 1.442695
  %v2110 = vpow.pop %v2109
  %v2111 = vmul.f32 %v2108, 1.442695
  %v2112 = vpow.pop %v2111
  %v2113 = vadd.f32 %v2110, 1.0
  %v2114 = vadd.f32 %v2112, 1.0
  %v2115 = vrcp.pop %v2113
  %v2116 = vmul.f32 1.0, %v2115
  %v2117 = vrcp.pop %v2114
  %v2118 = vmul.f32 1.0, %v2117
  %v2119 = vtanh.pop %v2106
  %v2120 = vmul.f32 %v2116, %v2018
  %2122 = vrot.lane.b32.xlu0 %v2119, 64
  %v2123 = vpop.permute.xlu0 %2122
  %v2125 = vmul.f32 %v2116, %v2123
  %2127 = vrot.lane.b32.xlu0 %v2125, 64
  %v2128 = vpop.permute.xlu0 %2127
  %v2130 = vadd.f32 %v2120, %v2128
  %v2131 = vtanh.pop %v2130
  %2133 = vrot.lane.b32.xlu0 %v2131, 64
  %v2134 = vpop.permute.xlu0 %2133
  %v2136 = vmul.f32 %v2118, %v2134
  %v2137 = vld [vmem:[#allocation2 + $0x80] sm:$0xff]
  %v2138 = vld [vmem:[#allocation2 + $0x88] sm:$0xff]
  %v2139 = vld [vmem:[#allocation2 + $0x70] sm:$0xff]
  %v2140 = vld [vmem:[#allocation2 + $0x78] sm:$0xff]
  %v2141 = vadd.f32 %v2137, %v2139
  %v2142 = vadd.f32 %v2138, %v2140
  %v2144 = vsel %vm422, %v2136, 0
  %2146 = vmatprep.subr.mxu0 %v1677
  %2147 = vmatpush1.msra.mxu0 %v1676
  %2148 = vmatprep.subr.mxu0 %v1679
  %2149 = vmatpush1.msra.mxu0 %v1678
  %2150 = vmatprep.subr.mxu0 %v1681
  %2151 = vmatpush1.msra.mxu0 %v1680
  %2152 = vmatprep.subr.mxu0 %v1683
  %2153 = vmatpush1.msra.mxu0 %v1682
  %2154 = vmatprep.subr.mxu0 %v1685
  %2155 = vmatpush1.msra.mxu0 %v1684
  %2156 = vmatprep.subr.mxu0 %v1687
  %2157 = vmatpush1.msra.mxu0 %v1686
  %2158 = vmatprep.subr.mxu0 %v1689
  %2159 = vmatpush1.msra.mxu0 %v1688
  %2160 = vmatprep.subr.mxu0 %v1691
  %2161 = vmatpush1.msra.mxu0 %v1690
  %2162 = vmatprep.subr.mxu0 0.0
  %2163 = vmatpush1.msra.mxu0 0.0
  %2164 = vmatprep.subr.mxu0 0.0
  %2165 = vmatpush1.msra.mxu0 0.0
  %2166 = vmatprep.subr.mxu0 0.0
  %2167 = vmatpush1.msra.mxu0 0.0
  %2168 = vmatprep.subr.mxu0 0.0
  %2169 = vmatpush1.msra.mxu0 0.0
  %2170 = vmatprep.subr.mxu0 0.0
  %2171 = vmatpush1.msra.mxu0 0.0
  %2172 = vmatprep.subr.mxu0 0.0
  %2173 = vmatpush1.msra.mxu0 0.0
  %2174 = vmatprep.subr.mxu0 0.0
  %2175 = vmatpush1.msra.mxu0 0.0
  %2176 = vmatprep.subr.mxu0 0.0
  %2177 = vmatpush1.msra.mxu0 0.0
  %2178 = vmatprep.subr.mxu0 0.0
  %2179 = vmatpush1.msra.mxu0 0.0
  %2180 = vmatprep.subr.mxu0 0.0
  %2181 = vmatpush1.msra.mxu0 0.0
  %2182 = vmatprep.subr.mxu0 0.0
  %2183 = vmatpush1.msra.mxu0 0.0
  %2184 = vmatprep.subr.mxu0 0.0
  %2185 = vmatpush1.msra.mxu0 0.0
  %2186 = vmatprep.subr.mxu0 0.0
  %2187 = vmatpush1.msra.mxu0 0.0
  %2188 = vmatprep.subr.mxu0 0.0
  %2189 = vmatpush1.msra.mxu0 0.0
  %2190 = vmatprep.subr.mxu0 0.0
  %2191 = vmatpush1.msra.mxu0 0.0
  %2192 = vmatprep.subr.mxu0 0.0
  %2193 = vmatpush1.msra.mxu0 0.0
  %2194 = vmatprep.subr.mxu0 0.0
  %2195 = vmatpush1.msra.mxu0 0.0
  %2196 = vmatprep.subr.mxu0 0.0
  %2197 = vmatpush1.msra.mxu0 0.0
  %2198 = vmatprep.subr.mxu0 0.0
  %2199 = vmatpush1.msra.mxu0 0.0
  %2200 = vmatprep.subr.mxu0 0.0
  %2201 = vmatpush1.msra.mxu0 0.0
  %2202 = vmatprep.subr.mxu0 0.0
  %2203 = vmatpush1.msra.mxu0 0.0
  %2204 = vmatprep.subr.mxu0 0.0
  %2205 = vmatpush1.msra.mxu0 0.0
  %2206 = vmatprep.subr.mxu0 0.0
  %2207 = vmatpush1.msra.mxu0 0.0
  %2208 = vmatprep.subr.mxu0 0.0
  %2209 = vmatpush1.msra.mxu0 0.0
  %2210 = vmatprep.mubr.f32.mxu0 0.0
  %2211 = vmatmul.mubr.f32.gmra.mrb[0].mxu0 %v2144
  %v2212 = vpop.f32.mrb[0].mxu0
  %v2213 = vadd.f32 0.0, %v2212
  %v2214 = vpop.f32.mrb[0].mxu0
  %v2215 = vadd.f32 0.0, %v2214
  %2216 = vdwg.mxu0
  %v2217 = vadd.f32 %v2141, %v2213
  %v2218 = vadd.f32 %v2142, %v2215
  %v2219 = vxor.u32 %v2217, 2147483648
  %v2220 = vxor.u32 %v2218, 2147483648
  %v2221 = vmul.f32 %v2219, 1.442695
  %v2222 = vpow.pop %v2221
  %v2223 = vmul.f32 %v2220, 1.442695
  %v2224 = vpow.pop %v2223
  %v2225 = vadd.f32 %v2222, 1.0
  %v2226 = vadd.f32 %v2224, 1.0
  %v2227 = vrcp.pop %v2225
  %v2228 = vmul.f32 1.0, %v2227
  %v2229 = vrcp.pop %v2226
  %v2230 = vmul.f32 1.0, %v2229
  %v2231 = vtanh.pop %v2218
  %v2232 = vmul.f32 %v2228, %v2130
  %2234 = vrot.lane.b32.xlu0 %v2231, 64
  %v2235 = vpop.permute.xlu0 %2234
  %v2237 = vmul.f32 %v2228, %v2235
  %2239 = vrot.lane.b32.xlu0 %v2237, 64
  %v2240 = vpop.permute.xlu0 %2239
  %v2242 = vadd.f32 %v2232, %v2240
  %v2243 = vtanh.pop %v2242
  %2245 = vrot.lane.b32.xlu0 %v2243, 64
  %v2246 = vpop.permute.xlu0 %2245
  %v2248 = vmul.f32 %v2230, %v2246
  %v2249 = vld [vmem:[#allocation2 + $0xa0] sm:$0xff]
  %v2250 = vld [vmem:[#allocation2 + $0xa8] sm:$0xff]
  %v2251 = vld [vmem:[#allocation2 + $0x50] sm:$0xff]
  %v2252 = vld [vmem:[#allocation2 + $0x58] sm:$0xff]
  %v2253 = vadd.f32 %v2249, %v2251
  %v2254 = vadd.f32 %v2250, %v2252
  %v2256 = vsel %vm422, %v2248, 0
  %2258 = vmatprep.subr.mxu0 %v1677
  %2259 = vmatpush1.msra.mxu0 %v1676
  %2260 = vmatprep.subr.mxu0 %v1679
  %2261 = vmatpush1.msra.mxu0 %v1678
  %2262 = vmatprep.subr.mxu0 %v1681
  %2263 = vmatpush1.msra.mxu0 %v1680
  %2264 = vmatprep.subr.mxu0 %v1683
  %2265 = vmatpush1.msra.mxu0 %v1682
  %2266 = vmatprep.subr.mxu0 %v1685
  %2267 = vmatpush1.msra.mxu0 %v1684
  %2268 = vmatprep.subr.mxu0 %v1687
  %2269 = vmatpush1.msra.mxu0 %v1686
  %2270 = vmatprep.subr.mxu0 %v1689
  %2271 = vmatpush1.msra.mxu0 %v1688
  %2272 = vmatprep.subr.mxu0 %v1691
  %2273 = vmatpush1.msra.mxu0 %v1690
  %2274 = vmatprep.subr.mxu0 0.0
  %2275 = vmatpush1.msra.mxu0 0.0
  %2276 = vmatprep.subr.mxu0 0.0
  %2277 = vmatpush1.msra.mxu0 0.0
  %2278 = vmatprep.subr.mxu0 0.0
  %2279 = vmatpush1.msra.mxu0 0.0
  %2280 = vmatprep.subr.mxu0 0.0
  %2281 = vmatpush1.msra.mxu0 0.0
  %2282 = vmatprep.subr.mxu0 0.0
  %2283 = vmatpush1.msra.mxu0 0.0
  %2284 = vmatprep.subr.mxu0 0.0
  %2285 = vmatpush1.msra.mxu0 0.0
  %2286 = vmatprep.subr.mxu0 0.0
  %2287 = vmatpush1.msra.mxu0 0.0
  %2288 = vmatprep.subr.mxu0 0.0
  %2289 = vmatpush1.msra.mxu0 0.0
  %2290 = vmatprep.subr.mxu0 0.0
  %2291 = vmatpush1.msra.mxu0 0.0
  %2292 = vmatprep.subr.mxu0 0.0
  %2293 = vmatpush1.msra.mxu0 0.0
  %2294 = vmatprep.subr.mxu0 0.0
  %2295 = vmatpush1.msra.mxu0 0.0
  %2296 = vmatprep.subr.mxu0 0.0
  %2297 = vmatpush1.msra.mxu0 0.0
  %2298 = vmatprep.subr.mxu0 0.0
  %2299 = vmatpush1.msra.mxu0 0.0
  %2300 = vmatprep.subr.mxu0 0.0
  %2301 = vmatpush1.msra.mxu0 0.0
  %2302 = vmatprep.subr.mxu0 0.0
  %2303 = vmatpush1.msra.mxu0 0.0
  %2304 = vmatprep.subr.mxu0 0.0
  %2305 = vmatpush1.msra.mxu0 0.0
  %2306 = vmatprep.subr.mxu0 0.0
  %2307 = vmatpush1.msra.mxu0 0.0
  %2308 = vmatprep.subr.mxu0 0.0
  %2309 = vmatpush1.msra.mxu0 0.0
  %2310 = vmatprep.subr.mxu0 0.0
  %2311 = vmatpush1.msra.mxu0 0.0
  %2312 = vmatprep.subr.mxu0 0.0
  %2313 = vmatpush1.msra.mxu0 0.0
  %2314 = vmatprep.subr.mxu0 0.0
  %2315 = vmatpush1.msra.mxu0 0.0
  %2316 = vmatprep.subr.mxu0 0.0
  %2317 = vmatpush1.msra.mxu0 0.0
  %2318 = vmatprep.subr.mxu0 0.0
  %2319 = vmatpush1.msra.mxu0 0.0
  %2320 = vmatprep.subr.mxu0 0.0
  %2321 = vmatpush1.msra.mxu0 0.0
  %2322 = vmatprep.mubr.f32.mxu0 0.0
  %2323 = vmatmul.mubr.f32.gmra.mrb[0].mxu0 %v2256
  %v2324 = vpop.f32.mrb[0].mxu0
  %v2325 = vadd.f32 0.0, %v2324
  %v2326 = vpop.f32.mrb[0].mxu0
  %v2327 = vadd.f32 0.0, %v2326
  %2328 = vdwg.mxu0
  %v2329 = vadd.f32 %v2253, %v2325
  %v2330 = vadd.f32 %v2254, %v2327
  %v2331 = vxor.u32 %v2329, 2147483648
  %v2332 = vxor.u32 %v2330, 2147483648
  %v2333 = vmul.f32 %v2331, 1.442695
  %v2334 = vpow.pop %v2333
  %v2335 = vmul.f32 %v2332, 1.442695
  %v2336 = vpow.pop %v2335
  %v2337 = vadd.f32 %v2334, 1.0
  %v2338 = vadd.f32 %v2336, 1.0
  %v2339 = vrcp.pop %v2337
  %v2340 = vmul.f32 1.0, %v2339
  %v2341 = vrcp.pop %v2338
  %v2342 = vmul.f32 1.0, %v2341
  %v2343 = vtanh.pop %v2330
  %v2344 = vmul.f32 %v2340, %v2242
  %2346 = vrot.lane.b32.xlu0 %v2343, 64
  %v2347 = vpop.permute.xlu0 %2346
  %v2349 = vmul.f32 %v2340, %v2347
  %2351 = vrot.lane.b32.xlu0 %v2349, 64
  %v2352 = vpop.permute.xlu0 %2351
  %v2354 = vadd.f32 %v2344, %v2352
  %v2355 = vtanh.pop %v2354
  %2357 = vrot.lane.b32.xlu0 %v2355, 64
  %v2358 = vpop.permute.xlu0 %2357
  %v2360 = vmul.f32 %v2342, %v2358
  %v2361 = vld [vmem:[#allocation2 + $0xc0] sm:$0xff]
  %v2362 = vld [vmem:[#allocation2 + $0xc8] sm:$0xff]
  %v2363 = vld [vmem:[#allocation2 + $0x30] sm:$0xff]
  %v2364 = vld [vmem:[#allocation2 + $0x38] sm:$0xff]
  %v2365 = vadd.f32 %v2361, %v2363
  %v2366 = vadd.f32 %v2362, %v2364
  %v2368 = vsel %vm422, %v2360, 0
  %2370 = vmatprep.subr.mxu0 %v1677
  %2371 = vmatpush1.msra.mxu0 %v1676
  %2372 = vmatprep.subr.mxu0 %v1679
  %2373 = vmatpush1.msra.mxu0 %v1678
  %2374 = vmatprep.subr.mxu0 %v1681
  %2375 = vmatpush1.msra.mxu0 %v1680
  %2376 = vmatprep.subr.mxu0 %v1683
  %2377 = vmatpush1.msra.mxu0 %v1682
  %2378 = vmatprep.subr.mxu0 %v1685
  %2379 = vmatpush1.msra.mxu0 %v1684
  %2380 = vmatprep.subr.mxu0 %v1687
  %2381 = vmatpush1.msra.mxu0 %v1686
  %2382 = vmatprep.subr.mxu0 %v1689
  %2383 = vmatpush1.msra.mxu0 %v1688
  %2384 = vmatprep.subr.mxu0 %v1691
  %2385 = vmatpush1.msra.mxu0 %v1690
  %2386 = vmatprep.subr.mxu0 0.0
  %2387 = vmatpush1.msra.mxu0 0.0
  %2388 = vmatprep.subr.mxu0 0.0
  %2389 = vmatpush1.msra.mxu0 0.0
  %2390 = vmatprep.subr.mxu0 0.0
  %2391 = vmatpush1.msra.mxu0 0.0
  %2392 = vmatprep.subr.mxu0 0.0
  %2393 = vmatpush1.msra.mxu0 0.0
  %2394 = vmatprep.subr.mxu0 0.0
  %2395 = vmatpush1.msra.mxu0 0.0
  %2396 = vmatprep.subr.mxu0 0.0
  %2397 = vmatpush1.msra.mxu0 0.0
  %2398 = vmatprep.subr.mxu0 0.0
  %2399 = vmatpush1.msra.mxu0 0.0
  %2400 = vmatprep.subr.mxu0 0.0
  %2401 = vmatpush1.msra.mxu0 0.0
  %2402 = vmatprep.subr.mxu0 0.0
  %2403 = vmatpush1.msra.mxu0 0.0
  %2404 = vmatprep.subr.mxu0 0.0
  %2405 = vmatpush1.msra.mxu0 0.0
  %2406 = vmatprep.subr.mxu0 0.0
  %2407 = vmatpush1.msra.mxu0 0.0
  %2408 = vmatprep.subr.mxu0 0.0
  %2409 = vmatpush1.msra.mxu0 0.0
  %2410 = vmatprep.subr.mxu0 0.0
  %2411 = vmatpush1.msra.mxu0 0.0
  %2412 = vmatprep.subr.mxu0 0.0
  %2413 = vmatpush1.msra.mxu0 0.0
  %2414 = vmatprep.subr.mxu0 0.0
  %2415 = vmatpush1.msra.mxu0 0.0
  %2416 = vmatprep.subr.mxu0 0.0
  %2417 = vmatpush1.msra.mxu0 0.0
  %2418 = vmatprep.subr.mxu0 0.0
  %2419 = vmatpush1.msra.mxu0 0.0
  %2420 = vmatprep.subr.mxu0 0.0
  %2421 = vmatpush1.msra.mxu0 0.0
  %2422 = vmatprep.subr.mxu0 0.0
  %2423 = vmatpush1.msra.mxu0 0.0
  %2424 = vmatprep.subr.mxu0 0.0
  %2425 = vmatpush1.msra.mxu0 0.0
  %2426 = vmatprep.subr.mxu0 0.0
  %2427 = vmatpush1.msra.mxu0 0.0
  %2428 = vmatprep.subr.mxu0 0.0
  %2429 = vmatpush1.msra.mxu0 0.0
  %2430 = vmatprep.subr.mxu0 0.0
  %2431 = vmatpush1.msra.mxu0 0.0
  %2432 = vmatprep.subr.mxu0 0.0
  %2433 = vmatpush1.msra.mxu0 0.0
  %2434 = vmatprep.mubr.f32.mxu0 0.0
  %2435 = vmatmul.mubr.f32.gmra.mrb[0].mxu0 %v2368
  %v2436 = vpop.f32.mrb[0].mxu0
  %v2437 = vadd.f32 0.0, %v2436
  %v2438 = vpop.f32.mrb[0].mxu0
  %v2439 = vadd.f32 0.0, %v2438
  %2440 = vdwg.mxu0
  %v2441 = vadd.f32 %v2365, %v2437
  %v2442 = vadd.f32 %v2366, %v2439
  %v2443 = vxor.u32 %v2441, 2147483648
  %v2444 = vxor.u32 %v2442, 2147483648
  %v2445 = vmul.f32 %v2443, 1.442695
  %v2446 = vpow.pop %v2445
  %v2447 = vmul.f32 %v2444, 1.442695
  %v2448 = vpow.pop %v2447
  %v2449 = vadd.f32 %v2446, 1.0
  %v2450 = vadd.f32 %v2448, 1.0
  %v2451 = vrcp.pop %v2449
  %v2452 = vmul.f32 1.0, %v2451
  %v2453 = vrcp.pop %v2450
  %v2454 = vmul.f32 1.0, %v2453
  %v2455 = vtanh.pop %v2442
  %v2456 = vmul.f32 %v2452, %v2354
  %2458 = vrot.lane.b32.xlu0 %v2455, 64
  %v2459 = vpop.permute.xlu0 %2458
  %v2461 = vmul.f32 %v2452, %v2459
  %2463 = vrot.lane.b32.xlu0 %v2461, 64
  %v2464 = vpop.permute.xlu0 %2463
  %v2466 = vadd.f32 %v2456, %v2464
  %v2467 = vtanh.pop %v2466
  %2469 = vrot.lane.b32.xlu0 %v2467, 64
  %v2470 = vpop.permute.xlu0 %2469
  %v2472 = vmul.f32 %v2454, %v2470
  %v2473 = vld [vmem:[#allocation2 + $0xe0] sm:$0xff]
  %v2474 = vld [vmem:[#allocation2 + $0xe8] sm:$0xff]
  %v2475 = vld [vmem:[#allocation2 + $0x10] sm:$0xff]
  %v2476 = vld [vmem:[#allocation2 + $0x18] sm:$0xff]
  %v2477 = vadd.f32 %v2473, %v2475
  %v2478 = vadd.f32 %v2474, %v2476
  %v2480 = vsel %vm422, %v2472, 0
  %2482 = vmatprep.subr.mxu0 %v1677
  %2483 = vmatpush1.msra.mxu0 %v1676
  %2484 = vmatprep.subr.mxu0 %v1679
  %2485 = vmatpush1.msra.mxu0 %v1678
  %2486 = vmatprep.subr.mxu0 %v1681
  %2487 = vmatpush1.msra.mxu0 %v1680
  %2488 = vmatprep.subr.mxu0 %v1683
  %2489 = vmatpush1.msra.mxu0 %v1682
  %2490 = vmatprep.subr.mxu0 %v1685
  %2491 = vmatpush1.msra.mxu0 %v1684
  %2492 = vmatprep.subr.mxu0 %v1687
  %2493 = vmatpush1.msra.mxu0 %v1686
  %2494 = vmatprep.subr.mxu0 %v1689
  %2495 = vmatpush1.msra.mxu0 %v1688
  %2496 = vmatprep.subr.mxu0 %v1691
  %2497 = vmatpush1.msra.mxu0 %v1690
  %2498 = vmatprep.subr.mxu0 0.0
  %2499 = vmatpush1.msra.mxu0 0.0
  %2500 = vmatprep.subr.mxu0 0.0
  %2501 = vmatpush1.msra.mxu0 0.0
  %2502 = vmatprep.subr.mxu0 0.0
  %2503 = vmatpush1.msra.mxu0 0.0
  %2504 = vmatprep.subr.mxu0 0.0
  %2505 = vmatpush1.msra.mxu0 0.0
  %2506 = vmatprep.subr.mxu0 0.0
  %2507 = vmatpush1.msra.mxu0 0.0
  %2508 = vmatprep.subr.mxu0 0.0
  %2509 = vmatpush1.msra.mxu0 0.0
  %2510 = vmatprep.subr.mxu0 0.0
  %2511 = vmatpush1.msra.mxu0 0.0
  %2512 = vmatprep.subr.mxu0 0.0
  %2513 = vmatpush1.msra.mxu0 0.0
  %2514 = vmatprep.subr.mxu0 0.0
  %2515 = vmatpush1.msra.mxu0 0.0
  %2516 = vmatprep.subr.mxu0 0.0
  %2517 = vmatpush1.msra.mxu0 0.0
  %2518 = vmatprep.subr.mxu0 0.0
  %2519 = vmatpush1.msra.mxu0 0.0
  %2520 = vmatprep.subr.mxu0 0.0
  %2521 = vmatpush1.msra.mxu0 0.0
  %2522 = vmatprep.subr.mxu0 0.0
  %2523 = vmatpush1.msra.mxu0 0.0
  %2524 = vmatprep.subr.mxu0 0.0
  %2525 = vmatpush1.msra.mxu0 0.0
  %2526 = vmatprep.subr.mxu0 0.0
  %2527 = vmatpush1.msra.mxu0 0.0
  %2528 = vmatprep.subr.mxu0 0.0
  %2529 = vmatpush1.msra.mxu0 0.0
  %2530 = vmatprep.subr.mxu0 0.0
  %2531 = vmatpush1.msra.mxu0 0.0
  %2532 = vmatprep.subr.mxu0 0.0
  %2533 = vmatpush1.msra.mxu0 0.0
  %2534 = vmatprep.subr.mxu0 0.0
  %2535 = vmatpush1.msra.mxu0 0.0
  %2536 = vmatprep.subr.mxu0 0.0
  %2537 = vmatpush1.msra.mxu0 0.0
  %2538 = vmatprep.subr.mxu0 0.0
  %2539 = vmatpush1.msra.mxu0 0.0
  %2540 = vmatprep.subr.mxu0 0.0
  %2541 = vmatpush1.msra.mxu0 0.0
  %2542 = vmatprep.subr.mxu0 0.0
  %2543 = vmatpush1.msra.mxu0 0.0
  %2544 = vmatprep.subr.mxu0 0.0
  %2545 = vmatpush1.msra.mxu0 0.0
  %2546 = vmatprep.mubr.f32.mxu0 0.0
  %2547 = vmatmul.mubr.f32.gmra.mrb[0].mxu0 %v2480
  %v2548 = vpop.f32.mrb[0].mxu0
  %v2549 = vadd.f32 0.0, %v2548
  %v2550 = vpop.f32.mrb[0].mxu0
  %v2551 = vadd.f32 0.0, %v2550
  %2552 = vdwg.mxu0
  %v2553 = vadd.f32 %v2477, %v2549
  %v2554 = vadd.f32 %v2478, %v2551
  %v2555 = vxor.u32 %v2553, 2147483648
  %v2556 = vxor.u32 %v2554, 2147483648
  %v2557 = vmul.f32 %v2555, 1.442695
  %v2558 = vpow.pop %v2557
  %v2559 = vmul.f32 %v2556, 1.442695
  %v2560 = vpow.pop %v2559
  %v2561 = vadd.f32 %v2558, 1.0
  %v2562 = vadd.f32 %v2560, 1.0
  %v2563 = vrcp.pop %v2561
  %v2564 = vmul.f32 1.0, %v2563
  %v2565 = vrcp.pop %v2562
  %v2566 = vmul.f32 1.0, %v2565
  %v2567 = vtanh.pop %v2554
  %v2568 = vmul.f32 %v2564, %v2466
  %2570 = vrot.lane.b32.xlu0 %v2567, 64
  %v2571 = vpop.permute.xlu0 %2570
  %v2573 = vmul.f32 %v2564, %v2571
  %2575 = vrot.lane.b32.xlu0 %v2573, 64
  %v2576 = vpop.permute.xlu0 %2575
  %v2578 = vadd.f32 %v2568, %v2576
  %v2579 = vtanh.pop %v2578
  %2581 = vrot.lane.b32.xlu0 %v2579, 64
  %v2582 = vpop.permute.xlu0 %2581
  %v2584 = vmul.f32 %v2566, %v2582
  %v2585 = vld [vmem:[%s4] sm:$0xff]
  %v2586 = vld [vmem:[%s4 + $0x8] sm:$0xff]
  %v2587 = vld [vmem:[%s4 + $0x10] sm:$0xff]
  %v2588 = vld [vmem:[%s4 + $0x18] sm:$0xff]
  %v2589 = vld [vmem:[%s4 + $0x20] sm:$0xff]
  %v2590 = vld [vmem:[%s4 + $0x28] sm:$0xff]
  %v2591 = vld [vmem:[%s4 + $0x30] sm:$0xff]
  %v2592 = vld [vmem:[%s4 + $0x38] sm:$0xff]
  %2593 = vrot.lane.b32.xlu0 %v1800, 96
  %v2594 = vpop.permute.xlu0 %2593
  %v2595 = vsel %vm529, %v2594, 0
  %2597 = vmatprep.subr.mxu0 0.0
  %2598 = vmatpush1.msra.mxu0 %v2589
  %2599 = vmatprep.subr.mxu0 0.0
  %2600 = vmatpush1.msra.mxu0 %v2590
  %2601 = vmatprep.subr.mxu0 0.0
  %2602 = vmatpush1.msra.mxu0 %v2591
  %2603 = vmatprep.subr.mxu0 0.0
  %2604 = vmatpush1.msra.mxu0 %v2592
  %2605 = vmatprep.subr.mxu0 0.0
  %2606 = vmatpush1.msra.mxu0 0.0
  %2607 = vmatprep.subr.mxu0 0.0
  %2608 = vmatpush1.msra.mxu0 0.0
  %2609 = vmatprep.subr.mxu0 0.0
  %2610 = vmatpush1.msra.mxu0 0.0
  %2611 = vmatprep.subr.mxu0 0.0
  %2612 = vmatpush1.msra.mxu0 0.0
  %2613 = vmatprep.subr.mxu0 0.0
  %2614 = vmatpush1.msra.mxu0 0.0
  %2615 = vmatprep.subr.mxu0 0.0
  %2616 = vmatpush1.msra.mxu0 0.0
  %2617 = vmatprep.subr.mxu0 0.0
  %2618 = vmatpush1.msra.mxu0 0.0
  %2619 = vmatprep.subr.mxu0 0.0
  %2620 = vmatpush1.msra.mxu0 0.0
  %2621 = vmatprep.subr.mxu0 0.0
  %2622 = vmatpush1.msra.mxu0 0.0
  %2623 = vmatprep.subr.mxu0 0.0
  %2624 = vmatpush1.msra.mxu0 0.0
  %2625 = vmatprep.subr.mxu0 0.0
  %2626 = vmatpush1.msra.mxu0 0.0
  %2627 = vmatprep.subr.mxu0 0.0
  %2628 = vmatpush1.msra.mxu0 0.0
  %2629 = vmatprep.subr.mxu0 0.0
  %2630 = vmatpush1.msra.mxu0 0.0
  %2631 = vmatprep.subr.mxu0 0.0
  %2632 = vmatpush1.msra.mxu0 0.0
  %2633 = vmatprep.subr.mxu0 0.0
  %2634 = vmatpush1.msra.mxu0 0.0
  %2635 = vmatprep.subr.mxu0 0.0
  %2636 = vmatpush1.msra.mxu0 0.0
  %2637 = vmatprep.subr.mxu0 0.0
  %2638 = vmatpush1.msra.mxu0 0.0
  %2639 = vmatprep.subr.mxu0 0.0
  %2640 = vmatpush1.msra.mxu0 0.0
  %2641 = vmatprep.subr.mxu0 0.0
  %2642 = vmatpush1.msra.mxu0 0.0
  %2643 = vmatprep.subr.mxu0 0.0
  %2644 = vmatpush1.msra.mxu0 0.0
  %2645 = vmatprep.subr.mxu0 0.0
  %2646 = vmatpush1.msra.mxu0 0.0
  %2647 = vmatprep.subr.mxu0 0.0
  %2648 = vmatpush1.msra.mxu0 0.0
  %2649 = vmatprep.subr.mxu0 0.0
  %2650 = vmatpush1.msra.mxu0 0.0
  %2651 = vmatprep.subr.mxu0 0.0
  %2652 = vmatpush1.msra.mxu0 0.0
  %2653 = vmatprep.subr.mxu0 0.0
  %2654 = vmatpush1.msra.mxu0 0.0
  %2655 = vmatprep.subr.mxu0 0.0
  %2656 = vmatpush1.msra.mxu0 0.0
  %2657 = vmatprep.subr.mxu0 0.0
  %2658 = vmatpush1.msra.mxu0 0.0
  %2659 = vmatprep.subr.mxu0 0.0
  %2660 = vmatpush1.msra.mxu0 0.0
  %2661 = vmatprep.mubr.f32.mxu0 0.0
  %2662 = vmatmul.mubr.f32.gmra.mrb[0].mxu0 %v2595
  %v2663 = vpop.f32.mrb[0].mxu0
  %v2664 = vadd.f32 0.0, %v2663
  %v2665 = vpop.f32.mrb[0].mxu0
  %2666 = vdwg.mxu0
  %v2668 = vsel %vm529, %v2584, 0
  %2670 = vmatprep.subr.mxu0 0.0
  %2671 = vmatpush1.msra.mxu0 %v2585
  %2672 = vmatprep.subr.mxu0 0.0
  %2673 = vmatpush1.msra.mxu0 %v2586
  %2674 = vmatprep.subr.mxu0 0.0
  %2675 = vmatpush1.msra.mxu0 %v2587
  %2676 = vmatprep.subr.mxu0 0.0
  %2677 = vmatpush1.msra.mxu0 %v2588
  %2678 = vmatprep.subr.mxu0 0.0
  %2679 = vmatpush1.msra.mxu0 0.0
  %2680 = vmatprep.subr.mxu0 0.0
  %2681 = vmatpush1.msra.mxu0 0.0
  %2682 = vmatprep.subr.mxu0 0.0
  %2683 = vmatpush1.msra.mxu0 0.0
  %2684 = vmatprep.subr.mxu0 0.0
  %2685 = vmatpush1.msra.mxu0 0.0
  %2686 = vmatprep.subr.mxu0 0.0
  %2687 = vmatpush1.msra.mxu0 0.0
  %2688 = vmatprep.subr.mxu0 0.0
  %2689 = vmatpush1.msra.mxu0 0.0
  %2690 = vmatprep.subr.mxu0 0.0
  %2691 = vmatpush1.msra.mxu0 0.0
  %2692 = vmatprep.subr.mxu0 0.0
  %2693 = vmatpush1.msra.mxu0 0.0
  %2694 = vmatprep.subr.mxu0 0.0
  %2695 = vmatpush1.msra.mxu0 0.0
  %2696 = vmatprep.subr.mxu0 0.0
  %2697 = vmatpush1.msra.mxu0 0.0
  %2698 = vmatprep.subr.mxu0 0.0
  %2699 = vmatpush1.msra.mxu0 0.0
  %2700 = vmatprep.subr.mxu0 0.0
  %2701 = vmatpush1.msra.mxu0 0.0
  %2702 = vmatprep.subr.mxu0 0.0
  %2703 = vmatpush1.msra.mxu0 0.0
  %2704 = vmatprep.subr.mxu0 0.0
  %2705 = vmatpush1.msra.mxu0 0.0
  %2706 = vmatprep.subr.mxu0 0.0
  %2707 = vmatpush1.msra.mxu0 0.0
  %2708 = vmatprep.subr.mxu0 0.0
  %2709 = vmatpush1.msra.mxu0 0.0
  %2710 = vmatprep.subr.mxu0 0.0
  %2711 = vmatpush1.msra.mxu0 0.0
  %2712 = vmatprep.subr.mxu0 0.0
  %2713 = vmatpush1.msra.mxu0 0.0
  %2714 = vmatprep.subr.mxu0 0.0
  %2715 = vmatpush1.msra.mxu0 0.0
  %2716 = vmatprep.subr.mxu0 0.0
  %2717 = vmatpush1.msra.mxu0 0.0
  %2718 = vmatprep.subr.mxu0 0.0
  %2719 = vmatpush1.msra.mxu0 0.0
  %2720 = vmatprep.subr.mxu0 0.0
  %2721 = vmatpush1.msra.mxu0 0.0
  %2722 = vmatprep.subr.mxu0 0.0
  %2723 = vmatpush1.msra.mxu0 0.0
  %2724 = vmatprep.subr.mxu0 0.0
  %2725 = vmatpush1.msra.mxu0 0.0
  %2726 = vmatprep.subr.mxu0 0.0
  %2727 = vmatpush1.msra.mxu0 0.0
  %2728 = vmatprep.subr.mxu0 0.0
  %2729 = vmatpush1.msra.mxu0 0.0
  %2730 = vmatprep.subr.mxu0 0.0
  %2731 = vmatpush1.msra.mxu0 0.0
  %2732 = vmatprep.subr.mxu0 0.0
  %2733 = vmatpush1.msra.mxu0 0.0
  %2734 = vmatprep.mubr.f32.mxu0 0.0
  %2735 = vmatmul.mubr.f32.gmra.mrb[0].mxu0 %v2668
  %v2736 = vpop.f32.mrb[0].mxu0
  %v2737 = vadd.f32 %v2664, %v2736
  %v2738 = vpop.f32.mrb[0].mxu0
  %2739 = vdwg.mxu0
  %v2740 = vld [vmem:[%s4 + $0x40] sm:$0x1]
  %v2741 = vlaneseq
  %v2742 = vshrl.u32 %v2741, 7
  %v2743 = vsub.s32 0, %v2742
  %v2744 = vrot.slane %v2740, %v2743
  %v2745 = vadd.f32 %v2737, %v2744
  %vm2746 = vcmask 31744
  %v2747 = vsel %vm2746, %v2745, -inf
  %2748 = vmax.xlane.f32.xlu0 %v2747
  %v2749 = vpop.xlane.xlu0 %2748
  %v2750 = vsub.f32 %v2745, %v2749
  %v2751 = vmul.f32 %v2750, 1.442695
  %v2752 = vpow.pop %v2751
  %v2753 = vsel %vm2746, %v2752, 0.0
  %2754 = vadd.xlane.f32.xlu0 %v2753
  %v2755 = vpop.xlane.xlu0 %2754
  %v2756 = vrcp.pop %v2755
  %v2757 = vmul.f32 %v2752, %v2756
  %2758 = vst.msk [vmem:[%s5] sm:$0xff] %vm2746, %v2757
  // Predicated region
  $region22: #{forward.1} parent=0 // pred_check
    _
  $region23: #{forward.1} parent=0 // pred_check_branch
    %2760 = sbr.rel (0) target = $region25
  $region24: #{forward.1} parent=0 // pred_region
    _
  $region25: #{forward.1} parent=0 // pred_fallthru
    _
  // Predicated region
  $region26: #{forward.1} parent=0 // pred_check
    _
  $region27: #{forward.1} parent=0 // pred_check_branch
    %2762 = sbr.rel (0) target = $region29
  $region28: #{forward.1} parent=0 // pred_region
    _
  $region29: #{forward.1} parent=0 // pred_fallthru
    _

</llo_original>
